<compile_context>
chip_gen: v6e
topology: v6e:2x2x1
jax: 0.10.0
libtpu: 0.0.40
codegen_flags: <defaults>
</compile_context>

<pallas_src>
import functools
import math

import jax
import jax.numpy as jnp
from jax.experimental import pallas as pl
from jax.experimental.pallas import tpu as pltpu


# ----------------------------------------------------------------------------
# small helpers
# ----------------------------------------------------------------------------
def _round_up(x, m):
    return (x + m - 1) // m * m


def _tpu_vmem_limit_bytes():
    """Per-generation scoped-VMEM cap: ~3/4 of physical, never above 100 MiB.
    v7x (64 MiB physical) -> 48 MiB; v5e/v6e (128 MiB) -> 96 MiB."""
    try:
        cap = int(pltpu.get_tpu_info().vmem_capacity_bytes)
    except Exception:
        cap = 128 * 1024 * 1024
    return int(min(cap * 3 // 4, 100 * 1024 * 1024))


def _default_block_q():
    """tq = 256 on v6e (2x256^2 MXU, 128 MiB VMEM); 128 on v5e / v7x."""
    try:
        kind = jax.devices()[0].device_kind.lower()
    except Exception:
        kind = ""
    return 256 if "v6" in kind else 128


# ----------------------------------------------------------------------------
# Pallas kernel 1: generic linear  y = x @ W + b, tiled over rows and columns
# ----------------------------------------------------------------------------
def _linear_kernel(x_ref, w_ref, b_ref, o_ref):
    o_ref[...] = (jnp.dot(x_ref[...], w_ref[...],
                          preferred_element_type=jnp.float32)
                  + b_ref[...]).astype(o_ref.dtype)


def pallas_linear(x, w, b, *, block_m=512, block_n=512):
    """x: [M, K], w: [K, N], b: [1, N] -> [M, N] (f32)."""
    M, K = x.shape
    N = w.shape[1]
    bm = M if M <= block_m else block_m
    bn = N if N <= block_n else block_n
    grid = (pl.cdiv(M, bm), pl.cdiv(N, bn))
    return pl.pallas_call(
        _linear_kernel,
        out_shape=jax.ShapeDtypeStruct((M, N), jnp.float32),
        grid=grid,
        in_specs=[
            pl.BlockSpec((bm, K), lambda i, j: (i, 0)),
            pl.BlockSpec((K, bn), lambda i, j: (0, j)),
            pl.BlockSpec((1, bn), lambda i, j: (0, j)),
        ],
        out_specs=pl.BlockSpec((bm, bn), lambda i, j: (i, j)),
        compiler_params=pltpu.CompilerParams(
            dimension_semantics=("parallel", "parallel"),
            vmem_limit_bytes=_tpu_vmem_limit_bytes()),
    )(x, w, b)


# ----------------------------------------------------------------------------
# Pallas kernel 2: fused RelPositionFusion + FLAT rel-pos MHA + BertSelfOutput
#                  (flash-style online softmax over key tiles)
# ----------------------------------------------------------------------------
def _flat_attn_kernel(
    x_ref, a_ref, t_ref, bb_ref, k_ref, v_ref, mask_ref,
    sq_ref, eq_ref, sk_ref, ek_ref,
    tbl_ref, fb_ref, wo_ref, bo_ref, g_ref, beta_ref,
    o_ref,
    m_sc, l_sc, acc_sc, pe_sc,
    *, num_heads, scaled, eps, vocab, rq,
):
    kj = pl.program_id(2)
    nk = pl.num_programs(2)
    nh = num_heads
    TQ = x_ref.shape[1]
    H = x_ref.shape[2]
    TK = k_ref.shape[1]
    d = H // nh
    four_v = 4 * vocab
    max_off = (vocab - 1) // 2

    # ---- (re)initialise online-softmax accumulators at the first key tile ----
    @pl.when(kj == 0)
    def _():
        m_sc[...] = jnp.full(m_sc.shape, -jnp.inf, m_sc.dtype)
        l_sc[...] = jnp.zeros(l_sc.shape, l_sc.dtype)
        acc_sc[...] = jnp.zeros(acc_sc.shape, acc_sc.dtype)

    # ---- RelPositionFusion generated in-kernel (no pe4 HBM stream) ----------
    # relu_pe[i,j,:] = relu( multi_hot(rel_*(i,j)) @ (pos_table @ Wf) + bf )
    # multi-hot built on the VPU, contracted on the MXU; chunked over query rows
    # (rq) so its VMEM footprint stays bounded for large position vocabularies.
    sq = sq_ref[0]                      # (TQ, 1, 1) int32
    eq = eq_ref[0]
    sk = sk_ref[0]                      # (1, TK, 1) int32
    ek = ek_ref[0]
    fb = fb_ref[...]                    # (1, H) f32

    for c0 in range(0, TQ, rq):
        sqc = sq[c0:c0 + rq]
        eqc = eq[c0:c0 + rq]
        iota = jax.lax.broadcasted_iota(jnp.int32, (rq, TK, four_v), 2)

        def one_hot(qi, ki, c):
            idx = jnp.clip(qi - ki + max_off, 0, vocab - 1) + c * vocab
            return (iota == idx).astype(jnp.float32)

        mh = (one_hot(sqc, sk, 0) + one_hot(sqc, ek, 1)
              + one_hot(eqc, sk, 2) + one_hot(eqc, ek, 3)).astype(jnp.bfloat16)
        pe = jnp.dot(mh.reshape(rq * TK, four_v), tbl_ref[...],
                     preferred_element_type=jnp.float32)
        pe = jnp.maximum(pe + fb, 0.0).astype(jnp.bfloat16)
        pe_sc[c0:c0 + rq] = pe.reshape(rq, TK, H)

    pe_all = pe_sc[...]                                     # (TQ, TK, H) bf16

    # ---- scores: A+C and B+D, both batched over heads -----------------------
    a_blk = a_ref[0]                                        # (TQ, nh, H) bf16  block-diag (q+u)
    t_blk = t_ref[0]                                        # (TQ, nh, H) bf16  (q+v_bias)@W_r
    k_blk = k_ref[0]                                        # (TK, H)     bf16
    k3 = jnp.broadcast_to(k_blk[None, :, :], (TQ, TK, H))
    ac = jnp.einsum('ihk,ijk->ihj', a_blk, k3,
                    preferred_element_type=jnp.float32)     # (TQ, nh, TK)
    bd = jnp.einsum('ihk,ijk->ihj', t_blk, pe_all,
                    preferred_element_type=jnp.float32)     # (TQ, nh, TK)
    score = ac + bd + bb_ref[0]                             # + (q+v_bias).b_r
    if scaled:
        score = score * jnp.float32(1.0 / math.sqrt(d))
    key_mask = mask_ref[...] > 0.0                          # (1, 1, TK)
    score = jnp.where(key_mask, score, jnp.float32(-1e15))

    # ---- online softmax over this key tile -----------------------------------
    m_prev = m_sc[...]                                      # (TQ, nh, 1)
    m_new = jnp.maximum(m_prev, jnp.max(score, axis=-1, keepdims=True))
    alpha = jnp.exp(m_prev - m_new)
    p = jnp.exp(score - m_new)                              # (TQ, nh, TK) f32
    l_sc[...] = alpha * l_sc[...] + jnp.sum(p, axis=-1, keepdims=True)
    m_sc[...] = m_new

    # p @ v per head: M = TQ 2-D MXU dots (keeps layouts transpose-free).
    for h in range(nh):
        p_h = p[:, h].astype(jnp.bfloat16)                  # (TQ, TK)
        acc_sc[h] = alpha[:, h] * acc_sc[h] + jnp.dot(
            p_h, v_ref[0, h], preferred_element_type=jnp.float32)

    # ---- finalize: output projection + BertSelfOutput (residual + LayerNorm) -
    @pl.when(kj == nk - 1)
    def _():
        x = x_ref[0]                                        # (TQ, H) residual / query input
        inv_l = pl.reciprocal(l_sc[...], approx=True)       # (TQ, nh, 1)  EUP slot
        y = bo_ref[...] + x
        for h in range(nh):
            ctx = acc_sc[h] * inv_l[:, h]                   # (TQ, d)
            y = y + jnp.dot(ctx, wo_ref[h], preferred_element_type=jnp.float32)
        mu = jnp.mean(y, axis=-1, keepdims=True)
        var = jnp.mean((y - mu) * (y - mu), axis=-1, keepdims=True)
        y = (y - mu) * jax.lax.rsqrt(var + jnp.float32(eps))
        y = y * g_ref[...] + beta_ref[...]
        o_ref[0] = y.astype(o_ref.dtype)


def flat_attention(hidden, a_bd, t_proj, bias_bd, k_in, v_hm, mask3,
                   sq4, eq4, sk4, ek4, fused_tbl, fusion_b, wo_h, bo, ln_g, ln_b,
                   *, num_heads, scaled, eps, vocab, tq, tk):
    B, S_pad, H = hidden.shape
    nh = num_heads
    d = H // nh
    four_v = 4 * vocab
    nq = S_pad // tq
    nk = S_pad // tk

    # chunk the multi-hot build over query rows so it stays under ~4 MiB of VMEM
    rq = tq
    while rq % 2 == 0 and rq > 8 and rq * tk * four_v * 2 > (4 << 20):
        rq //= 2

    kernel = functools.partial(_flat_attn_kernel, num_heads=nh, scaled=scaled,
                               eps=eps, vocab=vocab, rq=rq)

    def wspec(shape):
        return pl.BlockSpec(shape, lambda b, qi, kj: (0,) * len(shape))

    flops = int(2 * B * S_pad * S_pad * (four_v + 2 * nh) * H + 4 * B * S_pad * H * H)
    transcendentals = int(B * nh * S_pad * S_pad)
    bytes_accessed = int(8 * B * S_pad * H * 4 + 4 * B * S_pad * nh * H * 2
                         + nq * B * S_pad * (H + nh * d) * 2)

    # TODO(synk): pl.Buffered(3) multi-buffering of the per-key-tile streams was not
    # needed once pe4 moved in-kernel (remaining per-step DMAs are small); re-add if
    # profiling shows exposed DMA at large tk.
    return pl.pallas_call(
        kernel,
        out_shape=jax.ShapeDtypeStruct((B, S_pad, H), jnp.float32),
        grid=(B, nq, nk),
        in_specs=[
            pl.BlockSpec((1, tq, H), lambda b, qi, kj: (b, qi, 0)),         # residual
            pl.BlockSpec((1, tq, nh, H), lambda b, qi, kj: (b, qi, 0, 0)),  # A  (q+u, block-diag)
            pl.BlockSpec((1, tq, nh, H), lambda b, qi, kj: (b, qi, 0, 0)),  # T  (q+v_bias)@W_r
            pl.BlockSpec((1, tq, nh, 1), lambda b, qi, kj: (b, qi, 0, 0)),  # (q+v_bias).b_r
            pl.BlockSpec((1, tk, H), lambda b, qi, kj: (b, kj, 0)),         # k (flat, bf16)
            pl.BlockSpec((1, nh, tk, d), lambda b, qi, kj: (b, 0, kj, 0)),  # v (head-major, bf16)
            pl.BlockSpec((1, 1, tk), lambda b, qi, kj: (b, 0, kj)),         # key mask
            pl.BlockSpec((1, tq, 1, 1), lambda b, qi, kj: (b, qi, 0, 0)),   # s (query rows)
            pl.BlockSpec((1, tq, 1, 1), lambda b, qi, kj: (b, qi, 0, 0)),   # e (query rows)
            pl.BlockSpec((1, 1, tk, 1), lambda b, qi, kj: (b, 0, kj, 0)),   # s (key cols)
            pl.BlockSpec((1, 1, tk, 1), lambda b, qi, kj: (b, 0, kj, 0)),   # e (key cols)
            wspec((four_v, H)),                                             # fused pos table (bf16)
            wspec((1, H)),                                                  # fusion bias
            wspec((nh, d, H)),                                              # attn-out W per head
            wspec((1, H)),                                                  # attn-out bias
            wspec((1, H)),                                                  # LayerNorm gamma
            wspec((1, H)),                                                  # LayerNorm beta
        ],
        out_specs=pl.BlockSpec((1, tq, H), lambda b, qi, kj: (b, qi, 0)),
        scratch_shapes=[
            pltpu.VMEM((tq, nh, 1), jnp.float32),    # running max
            pltpu.VMEM((tq, nh, 1), jnp.float32),    # running denom
            pltpu.VMEM((nh, tq, d), jnp.float32),    # per-head context accumulator
            pltpu.VMEM((tq, tk, H), jnp.bfloat16),   # fused rel-pos features (per block)
        ],
        compiler_params=pltpu.CompilerParams(
            dimension_semantics=("parallel", "parallel", "arbitrary"),
            vmem_limit_bytes=_tpu_vmem_limit_bytes()),
        cost_estimate=pl.CostEstimate(flops=flops,
                                      transcendentals=transcendentals,
                                      bytes_accessed=bytes_accessed),
    )(hidden, a_bd, t_proj, bias_bd, k_in, v_hm, mask3, sq4, eq4, sk4, ek4,
      fused_tbl, fusion_b, wo_h, bo, ln_g, ln_b)


# ----------------------------------------------------------------------------
# FLAT forward (glue + Pallas calls); intended to be wrapped in jax.jit
# ----------------------------------------------------------------------------
def flat_forward(params, char_word_vec, char_word_mask, char_word_s, char_word_e,
                 pos_emb_table, *, cfg, part_size, block_q=None, block_k=128):
    B, S, in_feat = char_word_vec.shape
    H = cfg["hidden_size"]
    nh = cfg["num_heads"]
    d = H // nh
    dp = cfg["dim_pos"]
    assert cfg["num_pos"] == 4 and H % nh == 0
    V = pos_emb_table.shape[0]

    if block_q is None:
        block_q = _default_block_q()

    # tile sizes + sequence padding (keeps BlockSpec lane/sublane rules satisfied and
    # guarantees padded key columns carry mask == 0)
    S8 = _round_up(S, 8)
    if S8 <= min(block_q, block_k):
        tq = tk = S8
    else:
        tq, tk = block_q, block_k
    S_pad = _round_up(S, math.lcm(tq, tk))

    def pad_seq(x):
        if S_pad == S:
            return x
        widths = [(0, 0)] * x.ndim
        widths[1] = (0, S_pad - S)
        return jnp.pad(x, widths)

    x = pad_seq(char_word_vec)
    mask = pad_seq(char_word_mask.astype(jnp.float32))
    s_idx = pad_seq(char_word_s.astype(jnp.int32))
    e_idx = pad_seq(char_word_e.astype(jnp.int32))

    # adapter (only if in_feat_size != out_feat_size)
    if cfg["in_feat_size"] != cfg["out_feat_size"]:
        hidden = pallas_linear(x.reshape(B * S_pad, in_feat),
                               params["adapter_w"],
                               params["adapter_b"]).reshape(B, S_pad, H)
    else:
        hidden = x

    mask3 = mask.reshape(B, 1, S_pad)
    sq4 = s_idx.reshape(B, S_pad, 1, 1)
    eq4 = e_idx.reshape(B, S_pad, 1, 1)
    sk4 = s_idx.reshape(B, 1, S_pad, 1)
    ek4 = e_idx.reshape(B, 1, S_pad, 1)
    eye = jnp.eye(nh, dtype=jnp.float32)

    for lp in params["layers"]:
        # Fold the position-embedding table through the fusion weight once per layer:
        # multi_hot(rel) @ (table @ Wf_c)  ==  RelPositionFusion pre-ReLU contribution.
        fw = lp["fusion_w"].reshape(4, dp, H)      # channels ss, se, es, ee
        fused_tbl = jnp.einsum('vd,cdh->cvh', pos_emb_table, fw)
        fused_tbl = fused_tbl.reshape(4 * V, H).astype(jnp.bfloat16)

        # fused q/k/v projection (tiled Pallas linear); head math done wrapper-side
        qkv = pallas_linear(hidden.reshape(B * S_pad, H), lp["wqkv"],
                            lp["bqkv"]).reshape(B, S_pad, 3 * H)
        q, k, v = qkv[..., :H], qkv[..., H:2 * H], qkv[..., 2 * H:]
        q_heads = q.reshape(B, S_pad, nh, d)
        v_hm = v.reshape(B, S_pad, nh, d).transpose(0, 2, 1, 3).astype(jnp.bfloat16)
        k_in = k.astype(jnp.bfloat16)

        q_u = q_heads + lp["u"][None, None]
        q_v = q_heads + lp["v"][None, None]
        # block-diagonal embedding of (q+u): A[b,s,h, h'*d+d'] = (q+u)[b,s,h,d'] iff h'==h
        a_bd = (q_u[:, :, :, None, :] * eye[None, None, :, :, None])
        a_bd = a_bd.reshape(B, S_pad, nh, H).astype(jnp.bfloat16)
        # Transformer-XL early projection: (q+v_bias)@W_r per head, O(B*S*H^2), XLA-side
        t_proj = jnp.einsum('bshd,hkd->bshk', q_v, lp["wr_h"]).astype(jnp.bfloat16)
        bias_bd = jnp.einsum('bshd,hd->bsh', q_v, lp["br_h"])[..., None]

        hidden = flat_attention(
            hidden, a_bd, t_proj, bias_bd, k_in, v_hm, mask3,
            sq4, eq4, sk4, ek4, fused_tbl, lp["fusion_b"], lp["wo_h"],
            lp["bo"], lp["ln_g"], lp["ln_b"],
            num_heads=nh, scaled=cfg["scaled"], eps=cfg["layer_norm_eps"],
            vocab=V, tq=tq, tk=tk)
        # TODO(synk): config.en_ffd=False here, so TransfFFD is not applied (its
        # definition was not provided in the reference module).

    char_vec = hidden[:, : part_size[0] + part_size[1], :]
    return {"text_vec": char_vec}


# ----------------------------------------------------------------------------
# Parameter init (synthetic, nn.Linear stored as [in,out]) + one-time prep
# ----------------------------------------------------------------------------
def init_params(key, cfg):
    H = cfg["hidden_size"]
    nh = cfg["num_heads"]
    d = H // nh
    Kp = cfg["dim_pos"] * cfg["num_pos"]
    assert H % nh == 0

    def lin(k, fan_in, fan_out):
        kw, kb = jax.random.split(k)
        w = jax.random.normal(kw, (fan_in, fan_out), jnp.float32) * 0.05
        b = jax.random.normal(kb, (1, fan_out), jnp.float32) * 0.01
        return w, b

    keys = jax.random.split(key, 2 + cfg["num_flat_layers"])
    params = {}
    if cfg["in_feat_size"] != cfg["out_feat_size"]:
        params["adapter_w"], params["adapter_b"] = lin(
            keys[0], cfg["in_feat_size"], cfg["out_feat_size"])

    layers = []
    for li in range(cfg["num_flat_layers"]):
        lk = jax.random.split(keys[2 + li], 10)
        lp = {}
        lp["fusion_w"], lp["fusion_b"] = lin(lk[0], Kp, H)
        lp["wq"], lp["bq"] = lin(lk[1], H, H)
        lp["wk"], lp["bk"] = lin(lk[2], H, H)
        lp["wv"], lp["bv"] = lin(lk[3], H, H)
        lp["wr"], lp["br"] = lin(lk[4], H, H)
        lp["u"] = jax.random.normal(lk[5], (nh, d), jnp.float32) * 0.05
        lp["v"] = jax.random.normal(lk[6], (nh, d), jnp.float32) * 0.05
        lp["wo"], lp["bo"] = lin(lk[7], H, H)
        lp["ln_g"] = jnp.ones((1, H), jnp.float32)
        lp["ln_b"] = jnp.zeros((1, H), jnp.float32)
        layers.append(lp)
    params["layers"] = layers
    return params


def prepare_params(params, cfg):
    """One-time derivation of kernel-ready weights (hoisted out of the forward pass)."""
    H = cfg["hidden_size"]
    nh = cfg["num_heads"]
    d = H // nh
    out = {k: v for k, v in params.items() if k != "layers"}
    layers = []
    for lp in params["layers"]:
        layers.append({
            "fusion_w": lp["fusion_w"],
            "fusion_b": lp["fusion_b"],
            "wqkv": jnp.concatenate([lp["wq"], lp["wk"], lp["wv"]], axis=1),
            "bqkv": jnp.concatenate([lp["bq"], lp["bk"], lp["bv"]], axis=1),
            "wr_h": lp["wr"].reshape(H, nh, d).transpose(1, 0, 2),   # [nh, H, d]
            "br_h": lp["br"].reshape(nh, d),
            "u": lp["u"],
            "v": lp["v"],
            "wo_h": lp["wo"].reshape(nh, d, H),
            "bo": lp["bo"],
            "ln_g": lp["ln_g"],
            "ln_b": lp["ln_b"],
        })
    out["layers"] = layers
    return out


# ----------------------------------------------------------------------------
if __name__ == "__main__":
    key = jax.random.PRNGKey(0)
    B, S = 2, 8
    part_size = (5, 1, 2)          # char + special + word  => text_vec keeps first 6
    cfg = dict(
        in_feat_size=24, out_feat_size=32, hidden_size=32, num_heads=2,
        dim_pos=8, num_pos=4, num_flat_layers=2, scaled=True,
        layer_norm_eps=1e-12, attn_dropout=0.0, hidden_dropout=0.0, en_ffd=False,
    )

    k_x, k_tbl, k_p = jax.random.split(key, 3)
    char_word_vec = jax.random.normal(k_x, (B, S, cfg["in_feat_size"]), jnp.float32)
    char_word_mask = jnp.array(
        [[1, 1, 1, 1, 1, 1, 1, 1],
         [1, 1, 1, 1, 1, 1, 0, 0]], jnp.float32)
    char_word_s = jnp.array(
        [[0, 1, 2, 3, 4, 5, 0, 3],
         [0, 1, 2, 3, 4, 5, 1, 4]], jnp.int32)
    char_word_e = jnp.array(
        [[0, 1, 2, 3, 4, 5, 2, 5],
         [0, 1, 2, 3, 4, 5, 3, 6]], jnp.int32)

    max_pos = 16  # relative positions in [-max_pos, max_pos]
    pos_emb_table = jax.random.normal(
        k_tbl, (2 * max_pos + 1, cfg["dim_pos"]), jnp.float32) * 0.1

    params = prepare_params(init_params(k_p, cfg), cfg)

    fwd = jax.jit(functools.partial(flat_forward, cfg=cfg, part_size=part_size))
    out = fwd(params, char_word_vec, char_word_mask, char_word_s, char_word_e,
              pos_emb_table)
    text_vec = jax.block_until_ready(out["text_vec"])

    assert text_vec.shape == (B, part_size[0] + part_size[1], cfg["hidden_size"])
    assert bool(jnp.all(jnp.isfinite(text_vec)))
    print("KERNEL_OK")
</pallas_src>

<mosaic_0001>
module attributes {stable_mosaic.version = 11 : i64} {
  func.func @_linear_kernel(%arg0: i32, %arg1: i32, %arg2: memref<16x32xf32, #tpu.memory_space<vmem>>, %arg3: memref<32x96xf32, #tpu.memory_space<vmem>>, %arg4: memref<1x96xf32, #tpu.memory_space<vmem>>, %arg5: memref<16x96xf32, #tpu.memory_space<vmem>>) attributes {dimension_semantics = [#tpu.dimension_semantics<parallel>, #tpu.dimension_semantics<parallel>], iteration_bounds = array<i64: 1, 1>, scalar_prefetch = 0 : i64, scratch_operands = 0 : i64, tpu.core_type = #tpu.core_type<tc>, window_params = [{transform_indices = @transform_0, window_bounds = array<i64: 16, 32>}, {transform_indices = @transform_1, window_bounds = array<i64: 32, 96>}, {transform_indices = @transform_2, window_bounds = array<i64: 1, 96>}, {transform_indices = @transform_3, window_bounds = array<i64: 16, 96>}]} {
    %c0 = arith.constant 0 : index
    %c0_0 = arith.constant 0 : index
    %0 = vector.load %arg2[%c0, %c0_0] : memref<16x32xf32, #tpu.memory_space<vmem>>, vector<16x32xf32>
    %c0_1 = arith.constant 0 : index
    %c0_2 = arith.constant 0 : index
    %1 = vector.load %arg3[%c0_1, %c0_2] : memref<32x96xf32, #tpu.memory_space<vmem>>, vector<32x96xf32>
    %cst = arith.constant dense<0.000000e+00> : vector<16x96xf32>
    %2 = tpu.matmul %0, %1, %cst {dimension_numbers = #tpu.dot_dimension_numbers<[1], [0], [0], [1], [0, 0, 1, 1], [], []>} : vector<16x32xf32>, vector<32x96xf32>, vector<16x96xf32> -> vector<16x96xf32>
    %c0_3 = arith.constant 0 : index
    %c0_4 = arith.constant 0 : index
    %3 = vector.load %arg4[%c0_3, %c0_4] : memref<1x96xf32, #tpu.memory_space<vmem>>, vector<1x96xf32>
    %4 = vector.broadcast %3 : vector<1x96xf32> to vector<16x96xf32>
    %5 = arith.addf %2, %4 : vector<16x96xf32>
    %c0_5 = arith.constant 0 : index
    %c0_6 = arith.constant 0 : index
    %6 = vector.load %arg5[%c0_5, %c0_6] : memref<16x96xf32, #tpu.memory_space<vmem>>, vector<16x96xf32>
    tpu.vector_store %arg5[%c0_5, %c0_6], %5 {strides = array<i32>} : memref<16x96xf32, #tpu.memory_space<vmem>>, vector<16x96xf32>,
    return
  }
  func.func @transform_0(%arg0: i32, %arg1: i32) -> (i32, i32) {
    %c0_i32 = arith.constant 0 : i32
    %c0_i32_0 = arith.constant 0 : i32
    return %arg0, %c0_i32 : i32, i32
  }
  func.func @transform_1(%arg0: i32, %arg1: i32) -> (i32, i32) {
    %c0_i32 = arith.constant 0 : i32
    %c0_i32_0 = arith.constant 0 : i32
    return %c0_i32, %arg1 : i32, i32
  }
  func.func @transform_2(%arg0: i32, %arg1: i32) -> (i32, i32) {
    %c0_i32 = arith.constant 0 : i32
    %c0_i32_0 = arith.constant 0 : i32
    return %c0_i32, %arg1 : i32, i32
  }
  func.func @transform_3(%arg0: i32, %arg1: i32) -> (i32, i32) {
    %c0_i32 = arith.constant 0 : i32
    return %arg0, %arg1 : i32, i32
  }
}

module attributes {stable_mosaic.version = 11 : i64} {
  func.func @_linear_kernel(%arg0: i32, %arg1: i32, %arg2: memref<16x24xf32, #tpu.memory_space<vmem>>, %arg3: memref<24x32xf32, #tpu.memory_space<vmem>>, %arg4: memref<1x32xf32, #tpu.memory_space<vmem>>, %arg5: memref<16x32xf32, #tpu.memory_space<vmem>>) attributes {dimension_semantics = [#tpu.dimension_semantics<parallel>, #tpu.dimension_semantics<parallel>], iteration_bounds = array<i64: 1, 1>, scalar_prefetch = 0 : i64, scratch_operands = 0 : i64, tpu.core_type = #tpu.core_type<tc>, window_params = [{transform_indices = @transform_0, window_bounds = array<i64: 16, 24>}, {transform_indices = @transform_1, window_bounds = array<i64: 24, 32>}, {transform_indices = @transform_2, window_bounds = array<i64: 1, 32>}, {transform_indices = @transform_3, window_bounds = array<i64: 16, 32>}]} {
    %c0 = arith.constant 0 : index
    %c0_0 = arith.constant 0 : index
    %0 = vector.load %arg2[%c0, %c0_0] : memref<16x24xf32, #tpu.memory_space<vmem>>, vector<16x24xf32>
    %c0_1 = arith.constant 0 : index
    %c0_2 = arith.constant 0 : index
    %1 = vector.load %arg3[%c0_1, %c0_2] : memref<24x32xf32, #tpu.memory_space<vmem>>, vector<24x32xf32>
    %cst = arith.constant dense<0.000000e+00> : vector<16x32xf32>
    %2 = tpu.matmul %0, %1, %cst {dimension_numbers = #tpu.dot_dimension_numbers<[1], [0], [0], [1], [0, 0, 1, 1], [], []>} : vector<16x24xf32>, vector<24x32xf32>, vector<16x32xf32> -> vector<16x32xf32>
    %c0_3 = arith.constant 0 : index
    %c0_4 = arith.constant 0 : index
    %3 = vector.load %arg4[%c0_3, %c0_4] : memref<1x32xf32, #tpu.memory_space<vmem>>, vector<1x32xf32>
    %4 = vector.broadcast %3 : vector<1x32xf32> to vector<16x32xf32>
    %5 = arith.addf %2, %4 : vector<16x32xf32>
    %c0_5 = arith.constant 0 : index
    %c0_6 = arith.constant 0 : index
    %6 = vector.load %arg5[%c0_5, %c0_6] : memref<16x32xf32, #tpu.memory_space<vmem>>, vector<16x32xf32>
    tpu.vector_store %arg5[%c0_5, %c0_6], %5 {strides = array<i32>} : memref<16x32xf32, #tpu.memory_space<vmem>>, vector<16x32xf32>,
    return
  }
  func.func @transform_0(%arg0: i32, %arg1: i32) -> (i32, i32) {
    %c0_i32 = arith.constant 0 : i32
    %c0_i32_0 = arith.constant 0 : i32
    return %arg0, %c0_i32 : i32, i32
  }
  func.func @transform_1(%arg0: i32, %arg1: i32) -> (i32, i32) {
    %c0_i32 = arith.constant 0 : i32
    %c0_i32_0 = arith.constant 0 : i32
    return %c0_i32, %arg1 : i32, i32
  }
  func.func @transform_2(%arg0: i32, %arg1: i32) -> (i32, i32) {
    %c0_i32 = arith.constant 0 : i32
    %c0_i32_0 = arith.constant 0 : i32
    return %c0_i32, %arg1 : i32, i32
  }
  func.func @transform_3(%arg0: i32, %arg1: i32) -> (i32, i32) {
    %c0_i32 = arith.constant 0 : i32
    return %arg0, %arg1 : i32, i32
  }
}

module attributes {stable_mosaic.version = 11 : i64} {
  func.func @_flat_attn_kernel(%arg0: i32, %arg1: i32, %arg2: i32, %arg3: memref<1x8x32xf32, #tpu.memory_space<vmem>>, %arg4: memref<1x8x2x32xbf16, #tpu.memory_space<vmem>>, %arg5: memref<1x8x2x32xbf16, #tpu.memory_space<vmem>>, %arg6: memref<1x8x2x1xf32, #tpu.memory_space<vmem>>, %arg7: memref<1x8x32xbf16, #tpu.memory_space<vmem>>, %arg8: memref<1x2x8x16xbf16, #tpu.memory_space<vmem>>, %arg9: memref<1x1x8xf32, #tpu.memory_space<vmem>>, %arg10: memref<1x8x1x1xi32, #tpu.memory_space<vmem>>, %arg11: memref<1x8x1x1xi32, #tpu.memory_space<vmem>>, %arg12: memref<1x1x8x1xi32, #tpu.memory_space<vmem>>, %arg13: memref<1x1x8x1xi32, #tpu.memory_space<vmem>>, %arg14: memref<132x32xbf16, #tpu.memory_space<vmem>>, %arg15: memref<1x32xf32, #tpu.memory_space<vmem>>, %arg16: memref<2x16x32xf32, #tpu.memory_space<vmem>>, %arg17: memref<1x32xf32, #tpu.memory_space<vmem>>, %arg18: memref<1x32xf32, #tpu.memory_space<vmem>>, %arg19: memref<1x32xf32, #tpu.memory_space<vmem>>, %arg20: memref<1x8x32xf32, #tpu.memory_space<vmem>>, %arg21: memref<8x2x1xf32, #tpu.memory_space<vmem>>, %arg22: memref<8x2x1xf32, #tpu.memory_space<vmem>>, %arg23: memref<2x8x16xf32, #tpu.memory_space<vmem>>, %arg24: memref<8x8x32xbf16, #tpu.memory_space<vmem>>) attributes {dimension_semantics = [#tpu.dimension_semantics<parallel>, #tpu.dimension_semantics<parallel>, #tpu.dimension_semantics<arbitrary>], iteration_bounds = array<i64: 2, 1, 1>, scalar_prefetch = 0 : i64, scratch_operands = 4 : i64, tpu.core_type = #tpu.core_type<tc>, window_params = [{transform_indices = @transform_0, window_bounds = array<i64: 1, 8, 32>}, {transform_indices = @transform_1, window_bounds = array<i64: 1, 8, 2, 32>}, {transform_indices = @transform_2, window_bounds = array<i64: 1, 8, 2, 32>}, {transform_indices = @transform_3, window_bounds = array<i64: 1, 8, 2, 1>}, {transform_indices = @transform_4, window_bounds = array<i64: 1, 8, 32>}, {transform_indices = @transform_5, window_bounds = array<i64: 1, 2, 8, 16>}, {transform_indices = @transform_6, window_bounds = array<i64: 1, 1, 8>}, {transform_indices = @transform_7, window_bounds = array<i64: 1, 8, 1, 1>}, {transform_indices = @transform_8, window_bounds = array<i64: 1, 8, 1, 1>}, {transform_indices = @transform_9, window_bounds = array<i64: 1, 1, 8, 1>}, {transform_indices = @transform_10, window_bounds = array<i64: 1, 1, 8, 1>}, {pipeline_mode = #tpu.pipeline_mode<synchronous>, transform_indices = @transform_11, window_bounds = array<i64: 132, 32>}, {pipeline_mode = #tpu.pipeline_mode<synchronous>, transform_indices = @transform_12, window_bounds = array<i64: 1, 32>}, {pipeline_mode = #tpu.pipeline_mode<synchronous>, transform_indices = @transform_13, window_bounds = array<i64: 2, 16, 32>}, {pipeline_mode = #tpu.pipeline_mode<synchronous>, transform_indices = @transform_14, window_bounds = array<i64: 1, 32>}, {pipeline_mode = #tpu.pipeline_mode<synchronous>, transform_indices = @transform_15, window_bounds = array<i64: 1, 32>}, {pipeline_mode = #tpu.pipeline_mode<synchronous>, transform_indices = @transform_16, window_bounds = array<i64: 1, 32>}, {transform_indices = @transform_17, window_bounds = array<i64: 1, 8, 32>}]} {
    %c0_i32 = arith.constant 0 : i32
    %0 = arith.cmpi eq, %arg2, %c0_i32 : i32
    %1 = arith.extui %0 : i1 to i32
    %c0_i32_0 = arith.constant 0 : i32
    %2 = arith.cmpi ne, %1, %c0_i32_0 : i32
    scf.if %2 {
      %cst_98 = arith.constant 0xFF800000 : f32
      %164 = vector.broadcast %cst_98 : f32 to vector<8x2x1xf32>
      %c0_99 = arith.constant 0 : index
      %c0_100 = arith.constant 0 : index
      %c0_101 = arith.constant 0 : index
      %165 = vector.load %arg21[%c0_99, %c0_100, %c0_101] : memref<8x2x1xf32, #tpu.memory_space<vmem>>, vector<8x2x1xf32>
      tpu.vector_store %arg21[%c0_99, %c0_100, %c0_101], %164 {strides = array<i32>} : memref<8x2x1xf32, #tpu.memory_space<vmem>>, vector<8x2x1xf32>,
      %cst_102 = arith.constant 0.000000e+00 : f32
      %166 = vector.broadcast %cst_102 : f32 to vector<8x2x1xf32>
      %c0_103 = arith.constant 0 : index
      %c0_104 = arith.constant 0 : index
      %c0_105 = arith.constant 0 : index
      %167 = vector.load %arg22[%c0_103, %c0_104, %c0_105] : memref<8x2x1xf32, #tpu.memory_space<vmem>>, vector<8x2x1xf32>
      tpu.vector_store %arg22[%c0_103, %c0_104, %c0_105], %166 {strides = array<i32>} : memref<8x2x1xf32, #tpu.memory_space<vmem>>, vector<8x2x1xf32>,
      %cst_106 = arith.constant 0.000000e+00 : f32
      %168 = vector.broadcast %cst_106 : f32 to vector<2x8x16xf32>
      %c0_107 = arith.constant 0 : index
      %c0_108 = arith.constant 0 : index
      %c0_109 = arith.constant 0 : index
      %169 = vector.load %arg23[%c0_107, %c0_108, %c0_109] : memref<2x8x16xf32, #tpu.memory_space<vmem>>, vector<2x8x16xf32>
      tpu.vector_store %arg23[%c0_107, %c0_108, %c0_109], %168 {strides = array<i32>} : memref<2x8x16xf32, #tpu.memory_space<vmem>>, vector<2x8x16xf32>,
    } else {
    }
    %c0 = arith.constant 0 : index
    %c0_1 = arith.constant 0 : index
    %c0_2 = arith.constant 0 : index
    %c0_3 = arith.constant 0 : index
    %3 = vector.load %arg10[%c0, %c0_1, %c0_2, %c0_3] : memref<1x8x1x1xi32, #tpu.memory_space<vmem>>, vector<1x8x1x1xi32>
    %4 = vector.shape_cast %3 : vector<1x8x1x1xi32> to vector<8x1x1xi32>
    %c0_4 = arith.constant 0 : index
    %c0_5 = arith.constant 0 : index
    %c0_6 = arith.constant 0 : index
    %c0_7 = arith.constant 0 : index
    %5 = vector.load %arg11[%c0_4, %c0_5, %c0_6, %c0_7] : memref<1x8x1x1xi32, #tpu.memory_space<vmem>>, vector<1x8x1x1xi32>
    %6 = vector.shape_cast %5 : vector<1x8x1x1xi32> to vector<8x1x1xi32>
    %c0_8 = arith.constant 0 : index
    %c0_9 = arith.constant 0 : index
    %c0_10 = arith.constant 0 : index
    %c0_11 = arith.constant 0 : index
    %7 = vector.load %arg12[%c0_8, %c0_9, %c0_10, %c0_11] : memref<1x1x8x1xi32, #tpu.memory_space<vmem>>, vector<1x1x8x1xi32>
    %8 = vector.shape_cast %7 : vector<1x1x8x1xi32> to vector<1x8x1xi32>
    %c0_12 = arith.constant 0 : index
    %c0_13 = arith.constant 0 : index
    %c0_14 = arith.constant 0 : index
    %c0_15 = arith.constant 0 : index
    %9 = vector.load %arg13[%c0_12, %c0_13, %c0_14, %c0_15] : memref<1x1x8x1xi32, #tpu.memory_space<vmem>>, vector<1x1x8x1xi32>
    %10 = vector.shape_cast %9 : vector<1x1x8x1xi32> to vector<1x8x1xi32>
    %c0_16 = arith.constant 0 : index
    %c0_17 = arith.constant 0 : index
    %11 = vector.load %arg15[%c0_16, %c0_17] : memref<1x32xf32, #tpu.memory_space<vmem>>, vector<1x32xf32>
    %12 = tpu.iota {dimensions = array<i32: 2>} : vector<8x8x132xi32>
    %13 = vector.broadcast %4 : vector<8x1x1xi32> to vector<8x8x1xi32>
    %14 = vector.broadcast %8 : vector<1x8x1xi32> to vector<8x8x1xi32>
    %15 = arith.subi %13, %14 : vector<8x8x1xi32>
    %c16_i32 = arith.constant 16 : i32
    %16 = vector.broadcast %c16_i32 : i32 to vector<8x8x1xi32>
    %17 = arith.addi %15, %16 : vector<8x8x1xi32>
    %c0_i32_18 = arith.constant 0 : i32
    %c32_i32 = arith.constant 32 : i32
    %18 = vector.broadcast %c0_i32_18 : i32 to vector<8x8x1xi32>
    %19 = arith.maxsi %18, %17 : vector<8x8x1xi32>
    %20 = vector.broadcast %c32_i32 : i32 to vector<8x8x1xi32>
    %21 = arith.minsi %20, %19 : vector<8x8x1xi32>
    %c0_i32_19 = arith.constant 0 : i32
    %22 = vector.broadcast %c0_i32_19 : i32 to vector<8x8x1xi32>
    %23 = arith.addi %21, %22 : vector<8x8x1xi32>
    %24 = vector.broadcast %23 : vector<8x8x1xi32> to vector<8x8x132xi32>
    %25 = arith.cmpi eq, %12, %24 : vector<8x8x132xi32>
    %26 = arith.extui %25 : vector<8x8x132xi1> to vector<8x8x132xi32>
    %27 = arith.sitofp %26 : vector<8x8x132xi32> to vector<8x8x132xf32>
    %28 = vector.broadcast %4 : vector<8x1x1xi32> to vector<8x8x1xi32>
    %29 = vector.broadcast %10 : vector<1x8x1xi32> to vector<8x8x1xi32>
    %30 = arith.subi %28, %29 : vector<8x8x1xi32>
    %c16_i32_20 = arith.constant 16 : i32
    %31 = vector.broadcast %c16_i32_20 : i32 to vector<8x8x1xi32>
    %32 = arith.addi %30, %31 : vector<8x8x1xi32>
    %c0_i32_21 = arith.constant 0 : i32
    %c32_i32_22 = arith.constant 32 : i32
    %33 = vector.broadcast %c0_i32_21 : i32 to vector<8x8x1xi32>
    %34 = arith.maxsi %33, %32 : vector<8x8x1xi32>
    %35 = vector.broadcast %c32_i32_22 : i32 to vector<8x8x1xi32>
    %36 = arith.minsi %35, %34 : vector<8x8x1xi32>
    %c33_i32 = arith.constant 33 : i32
    %37 = vector.broadcast %c33_i32 : i32 to vector<8x8x1xi32>
    %38 = arith.addi %36, %37 : vector<8x8x1xi32>
    %39 = vector.broadcast %38 : vector<8x8x1xi32> to vector<8x8x132xi32>
    %40 = arith.cmpi eq, %12, %39 : vector<8x8x132xi32>
    %41 = arith.extui %40 : vector<8x8x132xi1> to vector<8x8x132xi32>
    %42 = arith.sitofp %41 : vector<8x8x132xi32> to vector<8x8x132xf32>
    %43 = arith.addf %27, %42 : vector<8x8x132xf32>
    %44 = vector.broadcast %6 : vector<8x1x1xi32> to vector<8x8x1xi32>
    %45 = vector.broadcast %8 : vector<1x8x1xi32> to vector<8x8x1xi32>
    %46 = arith.subi %44, %45 : vector<8x8x1xi32>
    %c16_i32_23 = arith.constant 16 : i32
    %47 = vector.broadcast %c16_i32_23 : i32 to vector<8x8x1xi32>
    %48 = arith.addi %46, %47 : vector<8x8x1xi32>
    %c0_i32_24 = arith.constant 0 : i32
    %c32_i32_25 = arith.constant 32 : i32
    %49 = vector.broadcast %c0_i32_24 : i32 to vector<8x8x1xi32>
    %50 = arith.maxsi %49, %48 : vector<8x8x1xi32>
    %51 = vector.broadcast %c32_i32_25 : i32 to vector<8x8x1xi32>
    %52 = arith.minsi %51, %50 : vector<8x8x1xi32>
    %c66_i32 = arith.constant 66 : i32
    %53 = vector.broadcast %c66_i32 : i32 to vector<8x8x1xi32>
    %54 = arith.addi %52, %53 : vector<8x8x1xi32>
    %55 = vector.broadcast %54 : vector<8x8x1xi32> to vector<8x8x132xi32>
    %56 = arith.cmpi eq, %12, %55 : vector<8x8x132xi32>
    %57 = arith.extui %56 : vector<8x8x132xi1> to vector<8x8x132xi32>
    %58 = arith.sitofp %57 : vector<8x8x132xi32> to vector<8x8x132xf32>
    %59 = arith.addf %43, %58 : vector<8x8x132xf32>
    %60 = vector.broadcast %6 : vector<8x1x1xi32> to vector<8x8x1xi32>
    %61 = vector.broadcast %10 : vector<1x8x1xi32> to vector<8x8x1xi32>
    %62 = arith.subi %60, %61 : vector<8x8x1xi32>
    %c16_i32_26 = arith.constant 16 : i32
    %63 = vector.broadcast %c16_i32_26 : i32 to vector<8x8x1xi32>
    %64 = arith.addi %62, %63 : vector<8x8x1xi32>
    %c0_i32_27 = arith.constant 0 : i32
    %c32_i32_28 = arith.constant 32 : i32
    %65 = vector.broadcast %c0_i32_27 : i32 to vector<8x8x1xi32>
    %66 = arith.maxsi %65, %64 : vector<8x8x1xi32>
    %67 = vector.broadcast %c32_i32_28 : i32 to vector<8x8x1xi32>
    %68 = arith.minsi %67, %66 : vector<8x8x1xi32>
    %c99_i32 = arith.constant 99 : i32
    %69 = vector.broadcast %c99_i32 : i32 to vector<8x8x1xi32>
    %70 = arith.addi %68, %69 : vector<8x8x1xi32>
    %71 = vector.broadcast %70 : vector<8x8x1xi32> to vector<8x8x132xi32>
    %72 = arith.cmpi eq, %12, %71 : vector<8x8x132xi32>
    %73 = arith.extui %72 : vector<8x8x132xi1> to vector<8x8x132xi32>
    %74 = arith.sitofp %73 : vector<8x8x132xi32> to vector<8x8x132xf32>
    %75 = arith.addf %59, %74 : vector<8x8x132xf32>
    %76 = arith.truncf %75 : vector<8x8x132xf32> to vector<8x8x132xbf16>
    %77 = vector.shape_cast %76 : vector<8x8x132xbf16> to vector<64x132xbf16>
    %c0_29 = arith.constant 0 : index
    %c0_30 = arith.constant 0 : index
    %78 = vector.load %arg14[%c0_29, %c0_30] : memref<132x32xbf16, #tpu.memory_space<vmem>>, vector<132x32xbf16>
    %cst = arith.constant dense<0.000000e+00> : vector<64x32xf32>
    %79 = tpu.matmul %77, %78, %cst {dimension_numbers = #tpu.dot_dimension_numbers<[1], [0], [0], [1], [0, 0, 1, 1], [], []>} : vector<64x132xbf16>, vector<132x32xbf16>, vector<64x32xf32> -> vector<64x32xf32>
    %80 = vector.broadcast %11 : vector<1x32xf32> to vector<64x32xf32>
    %81 = arith.addf %79, %80 : vector<64x32xf32>
    %cst_31 = arith.constant 0.000000e+00 : f32
    %82 = vector.broadcast %cst_31 : f32 to vector<64x32xf32>
    %83 = arith.maximumf %81, %82 : vector<64x32xf32>
    %84 = arith.truncf %83 : vector<64x32xf32> to vector<64x32xbf16>
    %85 = vector.shape_cast %84 : vector<64x32xbf16> to vector<8x8x32xbf16>
    %c0_32 = arith.constant 0 : index
    %c0_33 = arith.constant 0 : index
    %c0_34 = arith.constant 0 : index
    %86 = vector.load %arg24[%c0_32, %c0_33, %c0_34] : memref<8x8x32xbf16, #tpu.memory_space<vmem>>, vector<8x8x32xbf16>
    tpu.vector_store %arg24[%c0_32, %c0_33, %c0_34], %85 {strides = array<i32>} : memref<8x8x32xbf16, #tpu.memory_space<vmem>>, vector<8x8x32xbf16>,
    %c0_35 = arith.constant 0 : index
    %c0_36 = arith.constant 0 : index
    %c0_37 = arith.constant 0 : index
    %87 = vector.load %arg24[%c0_35, %c0_36, %c0_37] : memref<8x8x32xbf16, #tpu.memory_space<vmem>>, vector<8x8x32xbf16>
    %c0_38 = arith.constant 0 : index
    %c0_39 = arith.constant 0 : index
    %c0_40 = arith.constant 0 : index
    %c0_41 = arith.constant 0 : index
    %88 = vector.load %arg4[%c0_38, %c0_39, %c0_40, %c0_41] : memref<1x8x2x32xbf16, #tpu.memory_space<vmem>>, vector<1x8x2x32xbf16>
    %89 = vector.shape_cast %88 : vector<1x8x2x32xbf16> to vector<8x2x32xbf16>
    %c0_42 = arith.constant 0 : index
    %c0_43 = arith.constant 0 : index
    %c0_44 = arith.constant 0 : index
    %c0_45 = arith.constant 0 : index
    %90 = vector.load %arg5[%c0_42, %c0_43, %c0_44, %c0_45] : memref<1x8x2x32xbf16, #tpu.memory_space<vmem>>, vector<1x8x2x32xbf16>
    %91 = vector.shape_cast %90 : vector<1x8x2x32xbf16> to vector<8x2x32xbf16>
    %c0_46 = arith.constant 0 : index
    %c0_47 = arith.constant 0 : index
    %c0_48 = arith.constant 0 : index
    %92 = vector.load %arg7[%c0_46, %c0_47, %c0_48] : memref<1x8x32xbf16, #tpu.memory_space<vmem>>, vector<1x8x32xbf16>
    %93 = vector.shape_cast %92 : vector<1x8x32xbf16> to vector<8x32xbf16>
    %94 = vector.shape_cast %93 : vector<8x32xbf16> to vector<1x8x32xbf16>
    %95 = vector.shape_cast %94 : vector<1x8x32xbf16> to vector<1x8x32xbf16>
    %96 = vector.broadcast %95 : vector<1x8x32xbf16> to vector<8x8x32xbf16>
    "tpu.trace_start"() <{level = 10 : i32, message = "ihk,ijk->ihj"}> : () -> ()
    %cst_49 = arith.constant dense<0.000000e+00> : vector<8x2x8xf32>
    %97 = tpu.matmul %89, %96, %cst_49 {dimension_numbers = #tpu.dot_dimension_numbers<[2], [2], [1], [1], [0, 0, 0, 1, 1, 1], [0], [0]>} : vector<8x2x32xbf16>, vector<8x8x32xbf16>, vector<8x2x8xf32> -> vector<8x2x8xf32>
    %cst_50 = arith.constant dense<0.000000e+00> : vector<8x2x8xf32>
    %98 = tpu.matmul %91, %87, %cst_50 {dimension_numbers = #tpu.dot_dimension_numbers<[2], [2], [1], [1], [0, 0, 0, 1, 1, 1], [0], [0]>} : vector<8x2x32xbf16>, vector<8x8x32xbf16>, vector<8x2x8xf32> -> vector<8x2x8xf32>
    "tpu.trace_stop"() : () -> ()
    %99 = arith.addf %97, %98 : vector<8x2x8xf32>
    %c0_51 = arith.constant 0 : index
    %c0_52 = arith.constant 0 : index
    %c0_53 = arith.constant 0 : index
    %c0_54 = arith.constant 0 : index
    %100 = vector.load %arg6[%c0_51, %c0_52, %c0_53, %c0_54] : memref<1x8x2x1xf32, #tpu.memory_space<vmem>>, vector<1x8x2x1xf32>
    %101 = vector.shape_cast %100 : vector<1x8x2x1xf32> to vector<8x2x1xf32>
    %102 = vector.broadcast %101 : vector<8x2x1xf32> to vector<8x2x8xf32>
    %103 = arith.addf %99, %102 : vector<8x2x8xf32>
    %cst_55 = arith.constant 2.500000e-01 : f32
    %104 = vector.broadcast %cst_55 : f32 to vector<8x2x8xf32>
    %105 = arith.mulf %103, %104 : vector<8x2x8xf32>
    %c0_56 = arith.constant 0 : index
    %c0_57 = arith.constant 0 : index
    %c0_58 = arith.constant 0 : index
    %106 = vector.load %arg9[%c0_56, %c0_57, %c0_58] : memref<1x1x8xf32, #tpu.memory_space<vmem>>, vector<1x1x8xf32>
    %cst_59 = arith.constant 0.000000e+00 : f32
    %107 = vector.broadcast %cst_59 : f32 to vector<1x1x8xf32>
    %108 = arith.cmpf ogt, %106, %107 : vector<1x1x8xf32>
    %cst_60 = arith.constant -9.99999986E+14 : f32
    %109 = vector.shape_cast %108 : vector<1x1x8xi1> to vector<1x1x8xi1>
    %110 = vector.broadcast %109 : vector<1x1x8xi1> to vector<8x2x8xi1>
    %111 = vector.broadcast %cst_60 : f32 to vector<8x2x8xf32>
    %112 = arith.select %110, %105, %111 : vector<8x2x8xi1>, vector<8x2x8xf32>
    %c0_61 = arith.constant 0 : index
    %c0_62 = arith.constant 0 : index
    %c0_63 = arith.constant 0 : index
    %113 = vector.load %arg21[%c0_61, %c0_62, %c0_63] : memref<8x2x1xf32, #tpu.memory_space<vmem>>, vector<8x2x1xf32>
    %cst_64 = arith.constant dense<0xFF800000> : vector<8x2xf32>
    %114 = vector.multi_reduction <maximumf>, %112, %cst_64 [2] : vector<8x2x8xf32> to vector<8x2xf32>
    %115 = vector.shape_cast %114 : vector<8x2xf32> to vector<8x2x1xf32>
    %116 = arith.maximumf %113, %115 : vector<8x2x1xf32>
    %117 = arith.subf %113, %116 : vector<8x2x1xf32>
    %118 = math.exp %117 : vector<8x2x1xf32>
    %119 = vector.broadcast %116 : vector<8x2x1xf32> to vector<8x2x8xf32>
    %120 = arith.subf %112, %119 : vector<8x2x8xf32>
    %121 = math.exp %120 : vector<8x2x8xf32>
    %c0_65 = arith.constant 0 : index
    %c0_66 = arith.constant 0 : index
    %c0_67 = arith.constant 0 : index
    %122 = vector.load %arg22[%c0_65, %c0_66, %c0_67] : memref<8x2x1xf32, #tpu.memory_space<vmem>>, vector<8x2x1xf32>
    %123 = arith.mulf %118, %122 : vector<8x2x1xf32>
    %cst_68 = arith.constant dense<0.000000e+00> : vector<8x2xf32>
    %124 = vector.multi_reduction <add>, %121, %cst_68 [2] : vector<8x2x8xf32> to vector<8x2xf32>
    %125 = vector.shape_cast %124 : vector<8x2xf32> to vector<8x2x1xf32>
    %126 = arith.addf %123, %125 : vector<8x2x1xf32>
    %c0_69 = arith.constant 0 : index
    %c0_70 = arith.constant 0 : index
    %c0_71 = arith.constant 0 : index
    %127 = vector.load %arg22[%c0_69, %c0_70, %c0_71] : memref<8x2x1xf32, #tpu.memory_space<vmem>>, vector<8x2x1xf32>
    tpu.vector_store %arg22[%c0_69, %c0_70, %c0_71], %126 {strides = array<i32>} : memref<8x2x1xf32, #tpu.memory_space<vmem>>, vector<8x2x1xf32>,
    %c0_72 = arith.constant 0 : index
    %c0_73 = arith.constant 0 : index
    %c0_74 = arith.constant 0 : index
    %128 = vector.load %arg21[%c0_72, %c0_73, %c0_74] : memref<8x2x1xf32, #tpu.memory_space<vmem>>, vector<8x2x1xf32>
    tpu.vector_store %arg21[%c0_72, %c0_73, %c0_74], %116 {strides = array<i32>} : memref<8x2x1xf32, #tpu.memory_space<vmem>>, vector<8x2x1xf32>,
    %129 = vector.extract_strided_slice %121 {offsets = [0, 0, 0], sizes = [8, 1, 8], strides = [1, 1, 1]} : vector<8x2x8xf32> to vector<8x1x8xf32>
    %130 = vector.shape_cast %129 : vector<8x1x8xf32> to vector<8x8xf32>
    %131 = arith.truncf %130 : vector<8x8xf32> to vector<8x8xbf16>
    %132 = vector.extract_strided_slice %118 {offsets = [0, 0, 0], sizes = [8, 1, 1], strides = [1, 1, 1]} : vector<8x2x1xf32> to vector<8x1x1xf32>
    %133 = vector.shape_cast %132 : vector<8x1x1xf32> to vector<8x1xf32>
    %c0_75 = arith.constant 0 : index
    %c0_76 = arith.constant 0 : index
    %c0_77 = arith.constant 0 : index
    %134 = vector.load %arg23[%c0_75, %c0_76, %c0_77] : memref<2x8x16xf32, #tpu.memory_space<vmem>>, vector<1x8x16xf32>
    %135 = vector.shape_cast %134 : vector<1x8x16xf32> to vector<8x16xf32>
    %136 = vector.broadcast %133 : vector<8x1xf32> to vector<8x16xf32>
    %137 = arith.mulf %136, %135 : vector<8x16xf32>
    %c0_78 = arith.constant 0 : index
    %c0_79 = arith.constant 0 : index
    %c0_80 = arith.constant 0 : index
    %c0_81 = arith.constant 0 : index
    %138 = vector.load %arg8[%c0_78, %c0_79, %c0_80, %c0_81] : memref<1x2x8x16xbf16, #tpu.memory_space<vmem>>, vector<1x1x8x16xbf16>
    %139 = vector.shape_cast %138 : vector<1x1x8x16xbf16> to vector<8x16xbf16>
    %cst_82 = arith.constant dense<0.000000e+00> : vector<8x16xf32>
    %140 = tpu.matmul %131, %139, %cst_82 {dimension_numbers = #tpu.dot_dimension_numbers<[1], [0], [0], [1], [0, 0, 1, 1], [], []>} : vector<8x8xbf16>, vector<8x16xbf16>, vector<8x16xf32> -> vector<8x16xf32>
    %141 = arith.addf %137, %140 : vector<8x16xf32>
    %c0_83 = arith.constant 0 : index
    %c0_84 = arith.constant 0 : index
    %c0_85 = arith.constant 0 : index
    %142 = vector.load %arg23[%c0_83, %c0_84, %c0_85] : memref<2x8x16xf32, #tpu.memory_space<vmem>>, vector<1x8x16xf32>
    %143 = vector.shape_cast %142 : vector<1x8x16xf32> to vector<8x16xf32>
    %144 = vector.shape_cast %141 : vector<8x16xf32> to vector<1x8x16xf32>
    tpu.vector_store %arg23[%c0_83, %c0_84, %c0_85], %144 {strides = array<i32>} : memref<2x8x16xf32, #tpu.memory_space<vmem>>, vector<1x8x16xf32>,
    %145 = vector.extract_strided_slice %121 {offsets = [0, 1, 0], sizes = [8, 1, 8], strides = [1, 1, 1]} : vector<8x2x8xf32> to vector<8x1x8xf32>
    %146 = vector.shape_cast %145 : vector<8x1x8xf32> to vector<8x8xf32>
    %147 = arith.truncf %146 : vector<8x8xf32> to vector<8x8xbf16>
    %148 = vector.extract_strided_slice %118 {offsets = [0, 1, 0], sizes = [8, 1, 1], strides = [1, 1, 1]} : vector<8x2x1xf32> to vector<8x1x1xf32>
    %149 = vector.shape_cast %148 : vector<8x1x1xf32> to vector<8x1xf32>
    %c1 = arith.constant 1 : index
    %c0_86 = arith.constant 0 : index
    %c0_87 = arith.constant 0 : index
    %150 = vector.load %arg23[%c1, %c0_86, %c0_87] : memref<2x8x16xf32, #tpu.memory_space<vmem>>, vector<1x8x16xf32>
    %151 = vector.shape_cast %150 : vector<1x8x16xf32> to vector<8x16xf32>
    %152 = vector.broadcast %149 : vector<8x1xf32> to vector<8x16xf32>
    %153 = arith.mulf %152, %151 : vector<8x16xf32>
    %c0_88 = arith.constant 0 : index
    %c1_89 = arith.constant 1 : index
    %c0_90 = arith.constant 0 : index
    %c0_91 = arith.constant 0 : index
    %154 = vector.load %arg8[%c0_88, %c1_89, %c0_90, %c0_91] : memref<1x2x8x16xbf16, #tpu.memory_space<vmem>>, vector<1x1x8x16xbf16>
    %155 = vector.shape_cast %154 : vector<1x1x8x16xbf16> to vector<8x16xbf16>
    %cst_92 = arith.constant dense<0.000000e+00> : vector<8x16xf32>
    %156 = tpu.matmul %147, %155, %cst_92 {dimension_numbers = #tpu.dot_dimension_numbers<[1], [0], [0], [1], [0, 0, 1, 1], [], []>} : vector<8x8xbf16>, vector<8x16xbf16>, vector<8x16xf32> -> vector<8x16xf32>
    %157 = arith.addf %153, %156 : vector<8x16xf32>
    %c1_93 = arith.constant 1 : index
    %c0_94 = arith.constant 0 : index
    %c0_95 = arith.constant 0 : index
    %158 = vector.load %arg23[%c1_93, %c0_94, %c0_95] : memref<2x8x16xf32, #tpu.memory_space<vmem>>, vector<1x8x16xf32>
    %159 = vector.shape_cast %158 : vector<1x8x16xf32> to vector<8x16xf32>
    %160 = vector.shape_cast %157 : vector<8x16xf32> to vector<1x8x16xf32>
    tpu.vector_store %arg23[%c1_93, %c0_94, %c0_95], %160 {strides = array<i32>} : memref<2x8x16xf32, #tpu.memory_space<vmem>>, vector<1x8x16xf32>,
    %c0_i32_96 = arith.constant 0 : i32
    %161 = arith.cmpi eq, %arg2, %c0_i32_96 : i32
    %162 = arith.extui %161 : i1 to i32
    %c0_i32_97 = arith.constant 0 : i32
    %163 = arith.cmpi ne, %162, %c0_i32_97 : i32
    scf.if %163 {
      %c0_98 = arith.constant 0 : index
      %c0_99 = arith.constant 0 : index
      %c0_100 = arith.constant 0 : index
      %164 = vector.load %arg3[%c0_98, %c0_99, %c0_100] : memref<1x8x32xf32, #tpu.memory_space<vmem>>, vector<1x8x32xf32>
      %165 = vector.shape_cast %164 : vector<1x8x32xf32> to vector<8x32xf32>
      %c0_101 = arith.constant 0 : index
      %c0_102 = arith.constant 0 : index
      %c0_103 = arith.constant 0 : index
      %166 = vector.load %arg22[%c0_101, %c0_102, %c0_103] : memref<8x2x1xf32, #tpu.memory_space<vmem>>, vector<8x2x1xf32>
      %167 = tpu.reciprocal %166 {approx = true} : vector<8x2x1xf32> -> vector<8x2x1xf32>
      %c0_104 = arith.constant 0 : index
      %c0_105 = arith.constant 0 : index
      %168 = vector.load %arg17[%c0_104, %c0_105] : memref<1x32xf32, #tpu.memory_space<vmem>>, vector<1x32xf32>
      %169 = vector.broadcast %168 : vector<1x32xf32> to vector<8x32xf32>
      %170 = arith.addf %169, %165 : vector<8x32xf32>
      %c0_106 = arith.constant 0 : index
      %c0_107 = arith.constant 0 : index
      %c0_108 = arith.constant 0 : index
      %171 = vector.load %arg23[%c0_106, %c0_107, %c0_108] : memref<2x8x16xf32, #tpu.memory_space<vmem>>, vector<1x8x16xf32>
      %172 = vector.shape_cast %171 : vector<1x8x16xf32> to vector<8x16xf32>
      %173 = vector.extract_strided_slice %167 {offsets = [0, 0, 0], sizes = [8, 1, 1], strides = [1, 1, 1]} : vector<8x2x1xf32> to vector<8x1x1xf32>
      %174 = vector.shape_cast %173 : vector<8x1x1xf32> to vector<8x1xf32>
      %175 = vector.broadcast %174 : vector<8x1xf32> to vector<8x16xf32>
      %176 = arith.mulf %172, %175 : vector<8x16xf32>
      %c0_109 = arith.constant 0 : index
      %c0_110 = arith.constant 0 : index
      %c0_111 = arith.constant 0 : index
      %177 = vector.load %arg16[%c0_109, %c0_110, %c0_111] : memref<2x16x32xf32, #tpu.memory_space<vmem>>, vector<1x16x32xf32>
      %178 = vector.shape_cast %177 : vector<1x16x32xf32> to vector<16x32xf32>
      %cst_112 = arith.constant dense<0.000000e+00> : vector<8x32xf32>
      %179 = tpu.matmul %176, %178, %cst_112 {dimension_numbers = #tpu.dot_dimension_numbers<[1], [0], [0], [1], [0, 0, 1, 1], [], []>} : vector<8x16xf32>, vector<16x32xf32>, vector<8x32xf32> -> vector<8x32xf32>
      %180 = arith.addf %170, %179 : vector<8x32xf32>
      %c1_113 = arith.constant 1 : index
      %c0_114 = arith.constant 0 : index
      %c0_115 = arith.constant 0 : index
      %181 = vector.load %arg23[%c1_113, %c0_114, %c0_115] : memref<2x8x16xf32, #tpu.memory_space<vmem>>, vector<1x8x16xf32>
      %182 = vector.shape_cast %181 : vector<1x8x16xf32> to vector<8x16xf32>
      %183 = vector.extract_strided_slice %167 {offsets = [0, 1, 0], sizes = [8, 1, 1], strides = [1, 1, 1]} : vector<8x2x1xf32> to vector<8x1x1xf32>
      %184 = vector.shape_cast %183 : vector<8x1x1xf32> to vector<8x1xf32>
      %185 = vector.broadcast %184 : vector<8x1xf32> to vector<8x16xf32>
      %186 = arith.mulf %182, %185 : vector<8x16xf32>
      %c1_116 = arith.constant 1 : index
      %c0_117 = arith.constant 0 : index
      %c0_118 = arith.constant 0 : index
      %187 = vector.load %arg16[%c1_116, %c0_117, %c0_118] : memref<2x16x32xf32, #tpu.memory_space<vmem>>, vector<1x16x32xf32>
      %188 = vector.shape_cast %187 : vector<1x16x32xf32> to vector<16x32xf32>
      %cst_119 = arith.constant dense<0.000000e+00> : vector<8x32xf32>
      %189 = tpu.matmul %186, %188, %cst_119 {dimension_numbers = #tpu.dot_dimension_numbers<[1], [0], [0], [1], [0, 0, 1, 1], [], []>} : vector<8x16xf32>, vector<16x32xf32>, vector<8x32xf32> -> vector<8x32xf32>
      %190 = arith.addf %180, %189 : vector<8x32xf32>
      %cst_120 = arith.constant dense<0.000000e+00> : vector<8xf32>
      %191 = vector.multi_reduction <add>, %190, %cst_120 [1] : vector<8x32xf32> to vector<8xf32>
      %192 = vector.shape_cast %191 : vector<8xf32> to vector<8x1xf32>
      %cst_121 = arith.constant 3.200000e+01 : f32
      %193 = vector.broadcast %cst_121 : f32 to vector<8x1xf32>
      %194 = arith.divf %192, %193 : vector<8x1xf32>
      %195 = vector.broadcast %194 : vector<8x1xf32> to vector<8x32xf32>
      %196 = arith.subf %190, %195 : vector<8x32xf32>
      %197 = vector.broadcast %194 : vector<8x1xf32> to vector<8x32xf32>
      %198 = arith.subf %190, %197 : vector<8x32xf32>
      %199 = arith.mulf %196, %198 : vector<8x32xf32>
      %cst_122 = arith.constant dense<0.000000e+00> : vector<8xf32>
      %200 = vector.multi_reduction <add>, %199, %cst_122 [1] : vector<8x32xf32> to vector<8xf32>
      %201 = vector.shape_cast %200 : vector<8xf32> to vector<8x1xf32>
      %cst_123 = arith.constant 3.200000e+01 : f32
      %202 = vector.broadcast %cst_123 : f32 to vector<8x1xf32>
      %203 = arith.divf %201, %202 : vector<8x1xf32>
      %204 = vector.broadcast %194 : vector<8x1xf32> to vector<8x32xf32>
      %205 = arith.subf %190, %204 : vector<8x32xf32>
      %cst_124 = arith.constant 9.99999996E-13 : f32
      %206 = vector.broadcast %cst_124 : f32 to vector<8x1xf32>
      %207 = arith.addf %203, %206 : vector<8x1xf32>
      %208 = math.rsqrt %207 : vector<8x1xf32>
      %209 = vector.broadcast %208 : vector<8x1xf32> to vector<8x32xf32>
      %210 = arith.mulf %205, %209 : vector<8x32xf32>
      %c0_125 = arith.constant 0 : index
      %c0_126 = arith.constant 0 : index
      %211 = vector.load %arg18[%c0_125, %c0_126] : memref<1x32xf32, #tpu.memory_space<vmem>>, vector<1x32xf32>
      %212 = vector.broadcast %211 : vector<1x32xf32> to vector<8x32xf32>
      %213 = arith.mulf %210, %212 : vector<8x32xf32>
      %c0_127 = arith.constant 0 : index
      %c0_128 = arith.constant 0 : index
      %214 = vector.load %arg19[%c0_127, %c0_128] : memref<1x32xf32, #tpu.memory_space<vmem>>, vector<1x32xf32>
      %215 = vector.broadcast %214 : vector<1x32xf32> to vector<8x32xf32>
      %216 = arith.addf %213, %215 : vector<8x32xf32>
      %c0_129 = arith.constant 0 : index
      %c0_130 = arith.constant 0 : index
      %c0_131 = arith.constant 0 : index
      %217 = vector.load %arg20[%c0_129, %c0_130, %c0_131] : memref<1x8x32xf32, #tpu.memory_space<vmem>>, vector<1x8x32xf32>
      %218 = vector.shape_cast %217 : vector<1x8x32xf32> to vector<8x32xf32>
      %219 = vector.shape_cast %216 : vector<8x32xf32> to vector<1x8x32xf32>
      tpu.vector_store %arg20[%c0_129, %c0_130, %c0_131], %219 {strides = array<i32>} : memref<1x8x32xf32, #tpu.memory_space<vmem>>, vector<1x8x32xf32>,
    } else {
    }
    return
  }
  func.func @transform_0(%arg0: i32, %arg1: i32, %arg2: i32) -> (i32, i32, i32) {
    %c0_i32 = arith.constant 0 : i32
    %c0_i32_0 = arith.constant 0 : i32
    return %arg0, %arg1, %c0_i32 : i32, i32, i32
  }
  func.func @transform_1(%arg0: i32, %arg1: i32, %arg2: i32) -> (i32, i32, i32, i32) {
    %c0_i32 = arith.constant 0 : i32
    %c0_i32_0 = arith.constant 0 : i32
    %c0_i32_1 = arith.constant 0 : i32
    return %arg0, %arg1, %c0_i32, %c0_i32_0 : i32, i32, i32, i32
  }
  func.func @transform_2(%arg0: i32, %arg1: i32, %arg2: i32) -> (i32, i32, i32, i32) {
    %c0_i32 = arith.constant 0 : i32
    %c0_i32_0 = arith.constant 0 : i32
    %c0_i32_1 = arith.constant 0 : i32
    return %arg0, %arg1, %c0_i32, %c0_i32_0 : i32, i32, i32, i32
  }
  func.func @transform_3(%arg0: i32, %arg1: i32, %arg2: i32) -> (i32, i32, i32, i32) {
    %c0_i32 = arith.constant 0 : i32
    %c0_i32_0 = arith.constant 0 : i32
    %c0_i32_1 = arith.constant 0 : i32
    return %arg0, %arg1, %c0_i32, %c0_i32_0 : i32, i32, i32, i32
  }
  func.func @transform_4(%arg0: i32, %arg1: i32, %arg2: i32) -> (i32, i32, i32) {
    %c0_i32 = arith.constant 0 : i32
    %c0_i32_0 = arith.constant 0 : i32
    return %arg0, %arg2, %c0_i32 : i32, i32, i32
  }
  func.func @transform_5(%arg0: i32, %arg1: i32, %arg2: i32) -> (i32, i32, i32, i32) {
    %c0_i32 = arith.constant 0 : i32
    %c0_i32_0 = arith.constant 0 : i32
    %c0_i32_1 = arith.constant 0 : i32
    return %arg0, %c0_i32, %arg2, %c0_i32_0 : i32, i32, i32, i32
  }
  func.func @transform_6(%arg0: i32, %arg1: i32, %arg2: i32) -> (i32, i32, i32) {
    %c0_i32 = arith.constant 0 : i32
    %c0_i32_0 = arith.constant 0 : i32
    return %arg0, %c0_i32, %arg2 : i32, i32, i32
  }
  func.func @transform_7(%arg0: i32, %arg1: i32, %arg2: i32) -> (i32, i32, i32, i32) {
    %c0_i32 = arith.constant 0 : i32
    %c0_i32_0 = arith.constant 0 : i32
    %c0_i32_1 = arith.constant 0 : i32
    return %arg0, %arg1, %c0_i32, %c0_i32_0 : i32, i32, i32, i32
  }
  func.func @transform_8(%arg0: i32, %arg1: i32, %arg2: i32) -> (i32, i32, i32, i32) {
    %c0_i32 = arith.constant 0 : i32
    %c0_i32_0 = arith.constant 0 : i32
    %c0_i32_1 = arith.constant 0 : i32
    return %arg0, %arg1, %c0_i32, %c0_i32_0 : i32, i32, i32, i32
  }
  func.func @transform_9(%arg0: i32, %arg1: i32, %arg2: i32) -> (i32, i32, i32, i32) {
    %c0_i32 = arith.constant 0 : i32
    %c0_i32_0 = arith.constant 0 : i32
    %c0_i32_1 = arith.constant 0 : i32
    return %arg0, %c0_i32, %arg2, %c0_i32_0 : i32, i32, i32, i32
  }
  func.func @transform_10(%arg0: i32, %arg1: i32, %arg2: i32) -> (i32, i32, i32, i32) {
    %c0_i32 = arith.constant 0 : i32
    %c0_i32_0 = arith.constant 0 : i32
    %c0_i32_1 = arith.constant 0 : i32
    return %arg0, %c0_i32, %arg2, %c0_i32_0 : i32, i32, i32, i32
  }
  func.func @transform_11(%arg0: i32, %arg1: i32, %arg2: i32) -> (i32, i32) {
    %c0_i32 = arith.constant 0 : i32
    %c0_i32_0 = arith.constant 0 : i32
    %c0_i32_1 = arith.constant 0 : i32
    return %c0_i32, %c0_i32_0 : i32, i32
  }
  func.func @transform_12(%arg0: i32, %arg1: i32, %arg2: i32) -> (i32, i32) {
    %c0_i32 = arith.constant 0 : i32
    %c0_i32_0 = arith.constant 0 : i32
    %c0_i32_1 = arith.constant 0 : i32
    return %c0_i32, %c0_i32_0 : i32, i32
  }
  func.func @transform_13(%arg0: i32, %arg1: i32, %arg2: i32) -> (i32, i32, i32) {
    %c0_i32 = arith.constant 0 : i32
    %c0_i32_0 = arith.constant 0 : i32
    %c0_i32_1 = arith.constant 0 : i32
    %c0_i32_2 = arith.constant 0 : i32
    return %c0_i32, %c0_i32_0, %c0_i32_1 : i32, i32, i32
  }
  func.func @transform_14(%arg0: i32, %arg1: i32, %arg2: i32) -> (i32, i32) {
    %c0_i32 = arith.constant 0 : i32
    %c0_i32_0 = arith.constant 0 : i32
    %c0_i32_1 = arith.constant 0 : i32
    return %c0_i32, %c0_i32_0 : i32, i32
  }
  func.func @transform_15(%arg0: i32, %arg1: i32, %arg2: i32) -> (i32, i32) {
    %c0_i32 = arith.constant 0 : i32
    %c0_i32_0 = arith.constant 0 : i32
    %c0_i32_1 = arith.constant 0 : i32
    return %c0_i32, %c0_i32_0 : i32, i32
  }
  func.func @transform_16(%arg0: i32, %arg1: i32, %arg2: i32) -> (i32, i32) {
    %c0_i32 = arith.constant 0 : i32
    %c0_i32_0 = arith.constant 0 : i32
    %c0_i32_1 = arith.constant 0 : i32
    return %c0_i32, %c0_i32_0 : i32, i32
  }
  func.func @transform_17(%arg0: i32, %arg1: i32, %arg2: i32) -> (i32, i32, i32) {
    %c0_i32 = arith.constant 0 : i32
    %c0_i32_0 = arith.constant 0 : i32
    return %arg0, %arg1, %c0_i32 : i32, i32, i32
  }
}

</mosaic_0001>

<llo_original>
// kernel: flat_forward.6
$region0: #{flat_forward.6}
  #allocation0 [shape = 'u32[]', space=smem, size = 0x4, offset = 0x4, fixed_abs, tag = 'smem constant byte address 0x4 - core index']
  #allocation1 [shape = 'u32[144,128]{1,0:T(1,128)}', space=vmem, size = 0x12000, scoped, tag = 'internal scratch']
  %s0 = inlined_call_operand.vmem [shape: f32[16,32], index: 0, kind: input, shape index: {}]
  %s1 = inlined_call_operand.vmem [shape: f32[32,96], index: 1, kind: input, shape index: {}]
  %s2 = inlined_call_operand.vmem [shape: f32[1,96], index: 2, kind: input, shape index: {}]
  %s3 = inlined_call_operand.vmem [shape: f32[16,96], index: 3, kind: output, shape index: {}]
  %s4 = sld [smem:[#allocation0]]
  $region22: #{flat_forward.6} parent=0
    _
  %s6 = ssub.s32 1, %s4
  %s7 = scalar_select 0, %s6, %s4
  // Predicated region
  $region2: #{flat_forward.6} parent=0 // pred_check
    _
  $region3: #{flat_forward.6} parent=0 // pred_check_branch
    %9 = sbr.rel (0) target = $region5
  $region4: #{flat_forward.6} parent=0 // pred_region
    _
  $region5: #{flat_forward.6} parent=0 // pred_fallthru
    _
  // Predicated region
  $region6: #{flat_forward.6} parent=0 // pred_check
    _
  $region7: #{flat_forward.6} parent=0 // pred_check_branch
    %11 = sbr.rel (0) target = $region9
  $region8: #{flat_forward.6} parent=0 // pred_region
    _
  $region9: #{flat_forward.6} parent=0 // pred_fallthru
    _
  // Predicated region
  $region10: #{flat_forward.6} parent=0 // pred_check
    _
  $region11: #{flat_forward.6} parent=0 // pred_check_branch
    %13 = sbr.rel (0) target = $region13
  $region12: #{flat_forward.6} parent=0 // pred_region
    _
  $region13: #{flat_forward.6} parent=0 // pred_fallthru
    _
  %v14 = vld [vmem:[%s0] sm:$0xff]
  %v15 = vld [vmem:[%s0 + $0x8] sm:$0xff]
  %v16 = vld [vmem:[%s1] sm:$0xff]
  %v17 = vld [vmem:[%s1 + $0x8] sm:$0xff]
  %v18 = vld [vmem:[%s1 + $0x10] sm:$0xff]
  %v19 = vld [vmem:[%s1 + $0x18] sm:$0xff]
  %v20 = vld [vmem:[%s2] sm:$0x1]
  %v22 = vlaneseq
  %v23 = vshrl.u32 %v22, 7
  %v24 = vsub.s32 0, %v23
  %v25 = vrot.slane %v20, %v24
  %vm27 = vcmask 261120
  %v29 = vsel %vm27, %v14, 0
  %v32 = vsel %vm27, %v15, 0
  %34 = vmatprep.subr.mxu0 0.0
  %35 = vmatpush1.msra.mxu0 0.0
  %36 = vmatprep.subr.mxu0 0.0
  %37 = vmatpush1.msra.mxu0 0.0
  %38 = vmatprep.subr.mxu0 0.0
  %39 = vmatpush1.msra.mxu0 0.0
  %40 = vmatprep.subr.mxu0 0.0
  %41 = vmatpush1.msra.mxu0 0.0
  %42 = vmatprep.subr.mxu0 0.0
  %43 = vmatpush1.msra.mxu0 0.0
  %44 = vmatprep.subr.mxu0 0.0
  %45 = vmatpush1.msra.mxu0 0.0
  %46 = vmatprep.subr.mxu0 0.0
  %47 = vmatpush1.msra.mxu0 0.0
  %48 = vmatprep.subr.mxu0 0.0
  %49 = vmatpush1.msra.mxu0 0.0
  %50 = vmatprep.subr.mxu0 0.0
  %51 = vmatpush1.msra.mxu0 0.0
  %52 = vmatprep.subr.mxu0 0.0
  %53 = vmatpush1.msra.mxu0 0.0
  %54 = vmatprep.subr.mxu0 0.0
  %55 = vmatpush1.msra.mxu0 0.0
  %56 = vmatprep.subr.mxu0 0.0
  %57 = vmatpush1.msra.mxu0 0.0
  %58 = vmatprep.subr.mxu0 0.0
  %59 = vmatpush1.msra.mxu0 %v19
  %60 = vmatprep.subr.mxu0 0.0
  %61 = vmatpush1.msra.mxu0 %v18
  %62 = vmatprep.subr.mxu0 0.0
  %63 = vmatpush1.msra.mxu0 %v17
  %64 = vmatprep.subr.mxu0 0.0
  %65 = vmatpush1.msra.mxu0 %v16
  %66 = vmatprep.subr.mxu0 0.0
  %67 = vmatpush2.msra.mxu0 0.0
  %68 = vmatprep.subr.mxu0 0.0
  %69 = vmatpush2.msra.mxu0 0.0
  %70 = vmatprep.subr.mxu0 0.0
  %71 = vmatpush2.msra.mxu0 0.0
  %72 = vmatprep.subr.mxu0 0.0
  %73 = vmatpush2.msra.mxu0 0.0
  %74 = vmatprep.subr.mxu0 0.0
  %75 = vmatpush2.msra.mxu0 0.0
  %76 = vmatprep.subr.mxu0 0.0
  %77 = vmatpush2.msra.mxu0 0.0
  %78 = vmatprep.subr.mxu0 0.0
  %79 = vmatpush2.msra.mxu0 0.0
  %80 = vmatprep.subr.mxu0 0.0
  %81 = vmatpush2.msra.mxu0 0.0
  %82 = vmatprep.subr.mxu0 0.0
  %83 = vmatpush2.msra.mxu0 0.0
  %84 = vmatprep.subr.mxu0 0.0
  %85 = vmatpush2.msra.mxu0 0.0
  %86 = vmatprep.subr.mxu0 0.0
  %87 = vmatpush2.msra.mxu0 0.0
  %88 = vmatprep.subr.mxu0 0.0
  %89 = vmatpush2.msra.mxu0 0.0
  %90 = vmatprep.subr.mxu0 0.0
  %91 = vmatpush2.msra.mxu0 0.0
  %92 = vmatprep.subr.mxu0 0.0
  %93 = vmatpush2.msra.mxu0 0.0
  %94 = vmatprep.subr.mxu0 0.0
  %95 = vmatpush2.msra.mxu0 0.0
  %96 = vmatprep.subr.mxu0 0.0
  %97 = vmatpush2.msra.mxu0 0.0
  %98 = vmatprep.mubr.f32.mxu0 0.0
  %99 = vmatmul.mubr.f32.gmra.mxu0 %v29
  %v100 = vpop.f32.mrf.mxu0
  %v101 = vadd.f32 %v25, %v100
  %v102 = vpop.f32.mrf.mxu0
  %103 = vmatprep.mubr.f32.mxu0 0.0
  %104 = vmatmul.mubr.f32.gmra.mxu0 %v32
  %v105 = vpop.f32.mrf.mxu0
  %v106 = vadd.f32 %v25, %v105
  %v107 = vpop.f32.mrf.mxu0
  %108 = vdwg.mxu0
  %vm109 = vcmask 785408
  %110 = vst.msk [vmem:[%s3] sm:$0xff] %vm109, %v101
  %111 = vst.msk [vmem:[%s3 + $0x8] sm:$0xff] %vm109, %v106
  // Predicated region
  $region14: #{flat_forward.6} parent=0 // pred_check
    _
  $region15: #{flat_forward.6} parent=0 // pred_check_branch
    %113 = sbr.rel (0) target = $region17
  $region16: #{flat_forward.6} parent=0 // pred_region
    _
  $region17: #{flat_forward.6} parent=0 // pred_fallthru
    _
  // Predicated region
  $region18: #{flat_forward.6} parent=0 // pred_check
    _
  $region19: #{flat_forward.6} parent=0 // pred_check_branch
    %115 = sbr.rel (0) target = $region21
  $region20: #{flat_forward.6} parent=0 // pred_region
    _
  $region21: #{flat_forward.6} parent=0 // pred_fallthru
    _

// kernel: flat_forward.5
$region0: #{flat_forward.5}
  #allocation0 [shape = 'u32[]', space=smem, size = 0x4, offset = 0x4, fixed_abs, tag = 'smem constant byte address 0x4 - core index']
  #allocation1 [shape = 'u32[144,128]{1,0:T(1,128)}', space=vmem, size = 0x12000, scoped, tag = 'internal scratch']
  %s0 = inlined_call_operand.vmem [shape: f32[16,24], index: 0, kind: input, shape index: {}]
  %s1 = inlined_call_operand.vmem [shape: f32[24,32], index: 1, kind: input, shape index: {}]
  %s2 = inlined_call_operand.vmem [shape: f32[1,32], index: 2, kind: input, shape index: {}]
  %s3 = inlined_call_operand.vmem [shape: f32[16,32], index: 3, kind: output, shape index: {}]
  %s4 = sld [smem:[#allocation0]]
  $region22: #{flat_forward.5} parent=0
    _
  %s6 = ssub.s32 1, %s4
  %s7 = scalar_select 0, %s6, %s4
  // Predicated region
  $region2: #{flat_forward.5} parent=0 // pred_check
    _
  $region3: #{flat_forward.5} parent=0 // pred_check_branch
    %9 = sbr.rel (0) target = $region5
  $region4: #{flat_forward.5} parent=0 // pred_region
    _
  $region5: #{flat_forward.5} parent=0 // pred_fallthru
    _
  // Predicated region
  $region6: #{flat_forward.5} parent=0 // pred_check
    _
  $region7: #{flat_forward.5} parent=0 // pred_check_branch
    %11 = sbr.rel (0) target = $region9
  $region8: #{flat_forward.5} parent=0 // pred_region
    _
  $region9: #{flat_forward.5} parent=0 // pred_fallthru
    _
  // Predicated region
  $region10: #{flat_forward.5} parent=0 // pred_check
    _
  $region11: #{flat_forward.5} parent=0 // pred_check_branch
    %13 = sbr.rel (0) target = $region13
  $region12: #{flat_forward.5} parent=0 // pred_region
    _
  $region13: #{flat_forward.5} parent=0 // pred_fallthru
    _
  %v14 = vld [vmem:[%s0] sm:$0xff]
  %v15 = vld [vmem:[%s0 + $0x8] sm:$0xff]
  %v16 = vld [vmem:[%s1] sm:$0xff]
  %v17 = vld [vmem:[%s1 + $0x8] sm:$0xff]
  %v18 = vld [vmem:[%s1 + $0x10] sm:$0xff]
  %v19 = vld [vmem:[%s2] sm:$0x1]
  %v21 = vlaneseq
  %v22 = vshrl.u32 %v21, 7
  %v23 = vsub.s32 0, %v22
  %v24 = vrot.slane %v19, %v23
  %vm26 = vcmask 195584
  %v28 = vsel %vm26, %v14, 0
  %v31 = vsel %vm26, %v15, 0
  %33 = vmatprep.subr.mxu0 0.0
  %34 = vmatpush1.msra.mxu0 0.0
  %35 = vmatprep.subr.mxu0 0.0
  %36 = vmatpush1.msra.mxu0 0.0
  %37 = vmatprep.subr.mxu0 0.0
  %38 = vmatpush1.msra.mxu0 0.0
  %39 = vmatprep.subr.mxu0 0.0
  %40 = vmatpush1.msra.mxu0 0.0
  %41 = vmatprep.subr.mxu0 0.0
  %42 = vmatpush1.msra.mxu0 0.0
  %43 = vmatprep.subr.mxu0 0.0
  %44 = vmatpush1.msra.mxu0 0.0
  %45 = vmatprep.subr.mxu0 0.0
  %46 = vmatpush1.msra.mxu0 0.0
  %47 = vmatprep.subr.mxu0 0.0
  %48 = vmatpush1.msra.mxu0 0.0
  %49 = vmatprep.subr.mxu0 0.0
  %50 = vmatpush1.msra.mxu0 0.0
  %51 = vmatprep.subr.mxu0 0.0
  %52 = vmatpush1.msra.mxu0 0.0
  %53 = vmatprep.subr.mxu0 0.0
  %54 = vmatpush1.msra.mxu0 0.0
  %55 = vmatprep.subr.mxu0 0.0
  %56 = vmatpush1.msra.mxu0 0.0
  %57 = vmatprep.subr.mxu0 0.0
  %58 = vmatpush1.msra.mxu0 0.0
  %59 = vmatprep.subr.mxu0 0.0
  %60 = vmatpush1.msra.mxu0 %v18
  %61 = vmatprep.subr.mxu0 0.0
  %62 = vmatpush1.msra.mxu0 %v17
  %63 = vmatprep.subr.mxu0 0.0
  %64 = vmatpush1.msra.mxu0 %v16
  %65 = vmatprep.subr.mxu0 0.0
  %66 = vmatpush2.msra.mxu0 0.0
  %67 = vmatprep.subr.mxu0 0.0
  %68 = vmatpush2.msra.mxu0 0.0
  %69 = vmatprep.subr.mxu0 0.0
  %70 = vmatpush2.msra.mxu0 0.0
  %71 = vmatprep.subr.mxu0 0.0
  %72 = vmatpush2.msra.mxu0 0.0
  %73 = vmatprep.subr.mxu0 0.0
  %74 = vmatpush2.msra.mxu0 0.0
  %75 = vmatprep.subr.mxu0 0.0
  %76 = vmatpush2.msra.mxu0 0.0
  %77 = vmatprep.subr.mxu0 0.0
  %78 = vmatpush2.msra.mxu0 0.0
  %79 = vmatprep.subr.mxu0 0.0
  %80 = vmatpush2.msra.mxu0 0.0
  %81 = vmatprep.subr.mxu0 0.0
  %82 = vmatpush2.msra.mxu0 0.0
  %83 = vmatprep.subr.mxu0 0.0
  %84 = vmatpush2.msra.mxu0 0.0
  %85 = vmatprep.subr.mxu0 0.0
  %86 = vmatpush2.msra.mxu0 0.0
  %87 = vmatprep.subr.mxu0 0.0
  %88 = vmatpush2.msra.mxu0 0.0
  %89 = vmatprep.subr.mxu0 0.0
  %90 = vmatpush2.msra.mxu0 0.0
  %91 = vmatprep.subr.mxu0 0.0
  %92 = vmatpush2.msra.mxu0 0.0
  %93 = vmatprep.subr.mxu0 0.0
  %94 = vmatpush2.msra.mxu0 0.0
  %95 = vmatprep.subr.mxu0 0.0
  %96 = vmatpush2.msra.mxu0 0.0
  %97 = vmatprep.mubr.f32.mxu0 0.0
  %98 = vmatmul.mubr.f32.gmra.mxu0 %v28
  %v99 = vpop.f32.mrf.mxu0
  %v100 = vadd.f32 %v24, %v99
  %v101 = vpop.f32.mrf.mxu0
  %102 = vmatprep.mubr.f32.mxu0 0.0
  %103 = vmatmul.mubr.f32.gmra.mxu0 %v31
  %v104 = vpop.f32.mrf.mxu0
  %v105 = vadd.f32 %v24, %v104
  %v106 = vpop.f32.mrf.mxu0
  %107 = vdwg.mxu0
  %vm108 = vcmask 261120
  %109 = vst.msk [vmem:[%s3] sm:$0xff] %vm108, %v100
  %110 = vst.msk [vmem:[%s3 + $0x8] sm:$0xff] %vm108, %v105
  // Predicated region
  $region14: #{flat_forward.5} parent=0 // pred_check
    _
  $region15: #{flat_forward.5} parent=0 // pred_check_branch
    %112 = sbr.rel (0) target = $region17
  $region16: #{flat_forward.5} parent=0 // pred_region
    _
  $region17: #{flat_forward.5} parent=0 // pred_fallthru
    _
  // Predicated region
  $region18: #{flat_forward.5} parent=0 // pred_check
    _
  $region19: #{flat_forward.5} parent=0 // pred_check_branch
    %114 = sbr.rel (0) target = $region21
  $region20: #{flat_forward.5} parent=0 // pred_region
    _
  $region21: #{flat_forward.5} parent=0 // pred_fallthru
    _

// kernel: flat_forward.7
$region0: #{flat_forward.7}
  #allocation0 [shape = 'u32[]', space=smem, size = 0x4, offset = 0x4, fixed_abs, tag = 'smem constant byte address 0x4 - core index']
  #allocation1 [shape = 'u32[144,128]{1,0:T(1,128)}', space=vmem, size = 0x12000, scoped, tag = 'internal scratch']
  #allocation2 [shape = 'f32[8,2,1]{2,1,0:T(2,128)}', space=vmem, size = 0x2000, scoped, tag = 'scratch operand']
  #allocation3 [shape = 'f32[8,2,1]{2,1,0:T(2,128)}', space=vmem, size = 0x2000, scoped, tag = 'scratch operand']
  #allocation4 [shape = 'f32[2,8,16]{2,1,0:T(8,128)}', space=vmem, size = 0x2000, scoped, tag = 'scratch operand']
  #allocation5 [shape = 'bf16[8,8,32]{2,1,0:T(8,128)(2,1)}', space=vmem, size = 0x4000, scoped, tag = 'scratch operand']
  %s0 = inlined_call_operand.vmem [shape: f32[2,8,32], index: 0, kind: input, shape index: {}]
  %s1 = inlined_call_operand.vmem [shape: bf16[2,8,2,32], index: 1, kind: input, shape index: {}]
  %s2 = inlined_call_operand.vmem [shape: bf16[2,8,2,32], index: 2, kind: input, shape index: {}]
  %s3 = inlined_call_operand.vmem [shape: f32[2,8,2,1], index: 3, kind: input, shape index: {}]
  %s4 = inlined_call_operand.vmem [shape: bf16[2,8,32], index: 4, kind: input, shape index: {}]
  %s5 = inlined_call_operand.vmem [shape: bf16[2,2,8,16], index: 5, kind: input, shape index: {}]
  %s6 = inlined_call_operand.vmem [shape: f32[2,1,8], index: 6, kind: input, shape index: {}]
  %s7 = inlined_call_operand.vmem [shape: s32[2,8,1,1], index: 7, kind: input, shape index: {}]
  %s8 = inlined_call_operand.vmem [shape: s32[2,8,1,1], index: 8, kind: input, shape index: {}]
  %s9 = inlined_call_operand.vmem [shape: s32[2,1,8,1], index: 9, kind: input, shape index: {}]
  %s10 = inlined_call_operand.vmem [shape: s32[2,1,8,1], index: 10, kind: input, shape index: {}]
  %s11 = inlined_call_operand.vmem [shape: bf16[132,32], index: 11, kind: input, shape index: {}]
  %s12 = inlined_call_operand.vmem [shape: f32[1,32], index: 12, kind: input, shape index: {}]
  %s13 = inlined_call_operand.vmem [shape: f32[2,16,32], index: 13, kind: input, shape index: {}]
  %s14 = inlined_call_operand.vmem [shape: f32[1,32], index: 14, kind: input, shape index: {}]
  %s15 = inlined_call_operand.vmem [shape: f32[1,32], index: 15, kind: input, shape index: {}]
  %s16 = inlined_call_operand.vmem [shape: f32[1,32], index: 16, kind: input, shape index: {}]
  %s17 = inlined_call_operand.vmem [shape: f32[2,8,32], index: 17, kind: output, shape index: {}]
  %s18 = sld [smem:[#allocation0]]
  $region109: #{flat_forward.7} parent=0
    _
  %s20 = ssub.s32 1, %s18
  %s21 = scalar_select 0, %s20, %s18
  loop: start=0, step=1, limit=4
  $region2: #{flat_forward.7} parent=0 // loop_pre_header
    _
  $region3: #{flat_forward.7} parent=0 // loop_header
    %s23 = sphi 0, %s27
    %p24 = scmp.ge.s32.totalorder %s23, 4
    %s30 = sphi 0, %s49
    %s31 = sphi 0, %s45
    %s32 = sphi 0, %s41
    %s33 = sphi 0, %s30
    %s34 = sphi 0, %s31
    %s35 = sphi 0, %s32
    %s36 = sphi 0, %s33
    %s37 = sphi 0, %s34
    %s38 = sphi 0, %s35
    %s54 = sphi 0, %s56
    %s57 = sphi 0, %s54
    %s58 = sphi 0, %s57
    %s74 = sphi 0, %s58
    %s82 = sphi 0, %s84
    %s85 = sphi 0, %s82
    %s86 = sphi 0, %s85
    %s102 = sphi 0, %s86
    %s110 = sphi 0, %s112
    %s113 = sphi 0, %s110
    %s114 = sphi 0, %s113
    %s130 = sphi 0, %s114
    %s138 = sphi 0, %s140
    %s141 = sphi 0, %s138
    %s142 = sphi 0, %s141
    %s158 = sphi 0, %s142
    %s166 = sphi 0, %s168
    %s169 = sphi 0, %s166
    %s170 = sphi 0, %s169
    %s186 = sphi 0, %s170
    %s194 = sphi 0, %s196
    %s197 = sphi 0, %s194
    %s198 = sphi 0, %s197
    %s214 = sphi 0, %s198
    %s222 = sphi 0, %s224
    %s225 = sphi 0, %s222
    %s226 = sphi 0, %s225
    %s242 = sphi 0, %s226
    %s250 = sphi 0, %s252
    %s253 = sphi 0, %s250
    %s254 = sphi 0, %s253
    %s270 = sphi 0, %s254
    %s278 = sphi 0, %s280
    %s281 = sphi 0, %s278
    %s282 = sphi 0, %s281
    %s298 = sphi 0, %s282
    %s306 = sphi 0, %s308
    %s309 = sphi 0, %s306
    %s310 = sphi 0, %s309
    %s326 = sphi 0, %s310
    %s334 = sphi 0, %s336
    %s337 = sphi 0, %s334
    %s338 = sphi 0, %s337
    %s354 = sphi 0, %s338
    %s358 = sphi 0, %s358
    %s360 = sphi 0, %s358
    %s361 = sphi 0, %s360
    %s375 = sphi 0, %s361
    %s379 = sphi 0, %s379
    %s381 = sphi 0, %s379
    %s382 = sphi 0, %s381
    %s396 = sphi 0, %s382
    %s400 = sphi 0, %s400
    %s402 = sphi 0, %s400
    %s403 = sphi 0, %s402
    %s417 = sphi 0, %s403
    %s421 = sphi 0, %s421
    %s423 = sphi 0, %s421
    %s424 = sphi 0, %s423
    %s438 = sphi 0, %s424
    %s442 = sphi 0, %s442
    %s444 = sphi 0, %s442
    %s445 = sphi 0, %s444
    %s459 = sphi 0, %s445
    %s463 = sphi 0, %s463
    %s465 = sphi 0, %s463
    %s466 = sphi 0, %s465
    %s480 = sphi 0, %s466
    %s488 = sphi 0, %s490
    %s491 = sphi 0, %s488
    %s492 = sphi 0, %s491
    %s508 = sphi 0, %s492
  $region4: #{flat_forward.7} parent=0 // loop_header_branch
    %26 = sbr.rel (%p24) target = $region8
  $region5: #{flat_forward.7} parent=0 // loop_body
    %s28 = ssub.s32 %s23, 1
    %s29 = ssub.s32 %s23, 2
    %s39 = sadd.s32 1, %s32
    %p40 = scmp.ge.s32.totalorder %s39, 1
    %s41 = scalar_select %p40, 0, %s39
    %s42 = sadd.s32 1, %s31
    %s43 = scalar_select %p40, %s42, %s31
    %p44 = scmp.ge.s32.totalorder %s43, 1
    %s45 = scalar_select %p44, 0, %s43
    %s46 = sadd.s32 1, %s30
    %s47 = scalar_select %p44, %s46, %s30
    %p48 = scmp.ge.s32.totalorder %s47, 2
    %s49 = scalar_select %p48, 0, %s47
    %s50 = ssub.s32 %s30, %s49
    %s51 = ssub.s32 %s31, %s45
    %s52 = sor.u32 %s50, %s51
    %p53 = scmp.eq.s32.totalorder %s52, 0
    %s55 = sadd.s32 %s54, 1
    %s56 = scalar_select %p53, %s54, %s55
    %p59 = pneg %p53
    %p60 = scmp.eq.s32.totalorder %s23, 1
    %p61 = por %p59, %p60
    %p62 = scmp.ne.s32.totalorder %s54, %s57
    %p63 = scmp.eq.s32.totalorder %s23, 0
    %p64 = por %p62, %p63
    %p65 = scmp.ne.s32.totalorder %s54, %s57
    %p66 = scmp.eq.s32.totalorder %s28, 1
    %p67 = por %p65, %p66
    %p68 = scmp.ne.s32.totalorder %s57, %s58
    %p69 = scmp.eq.s32.totalorder %s28, 0
    %p70 = por %p68, %p69
    %p71 = scmp.ne.s32.totalorder %s57, %s58
    %p72 = scmp.eq.s32.totalorder %s29, 1
    %p73 = por %p71, %p72
    %p75 = scmp.ne.s32.totalorder %s58, %s74
    %p76 = scmp.eq.s32.totalorder %s29, 0
    %p77 = por %p75, %p76
    %s78 = ssub.s32 %s30, %s49
    %s79 = ssub.s32 %s31, %s45
    %s80 = sor.u32 %s78, %s79
    %p81 = scmp.eq.s32.totalorder %s80, 0
    %s83 = sadd.s32 %s82, 1
    %s84 = scalar_select %p81, %s82, %s83
    %p87 = pneg %p81
    %p88 = scmp.eq.s32.totalorder %s23, 1
    %p89 = por %p87, %p88
    %p90 = scmp.ne.s32.totalorder %s82, %s85
    %p91 = scmp.eq.s32.totalorder %s23, 0
    %p92 = por %p90, %p91
    %p93 = scmp.ne.s32.totalorder %s82, %s85
    %p94 = scmp.eq.s32.totalorder %s28, 1
    %p95 = por %p93, %p94
    %p96 = scmp.ne.s32.totalorder %s85, %s86
    %p97 = scmp.eq.s32.totalorder %s28, 0
    %p98 = por %p96, %p97
    %p99 = scmp.ne.s32.totalorder %s85, %s86
    %p100 = scmp.eq.s32.totalorder %s29, 1
    %p101 = por %p99, %p100
    %p103 = scmp.ne.s32.totalorder %s86, %s102
    %p104 = scmp.eq.s32.totalorder %s29, 0
    %p105 = por %p103, %p104
    %s106 = ssub.s32 %s30, %s49
    %s107 = ssub.s32 %s31, %s45
    %s108 = sor.u32 %s106, %s107
    %p109 = scmp.eq.s32.totalorder %s108, 0
    %s111 = sadd.s32 %s110, 1
    %s112 = scalar_select %p109, %s110, %s111
    %p115 = pneg %p109
    %p116 = scmp.eq.s32.totalorder %s23, 1
    %p117 = por %p115, %p116
    %p118 = scmp.ne.s32.totalorder %s110, %s113
    %p119 = scmp.eq.s32.totalorder %s23, 0
    %p120 = por %p118, %p119
    %p121 = scmp.ne.s32.totalorder %s110, %s113
    %p122 = scmp.eq.s32.totalorder %s28, 1
    %p123 = por %p121, %p122
    %p124 = scmp.ne.s32.totalorder %s113, %s114
    %p125 = scmp.eq.s32.totalorder %s28, 0
    %p126 = por %p124, %p125
    %p127 = scmp.ne.s32.totalorder %s113, %s114
    %p128 = scmp.eq.s32.totalorder %s29, 1
    %p129 = por %p127, %p128
    %p131 = scmp.ne.s32.totalorder %s114, %s130
    %p132 = scmp.eq.s32.totalorder %s29, 0
    %p133 = por %p131, %p132
    %s134 = ssub.s32 %s30, %s49
    %s135 = ssub.s32 %s31, %s45
    %s136 = sor.u32 %s134, %s135
    %p137 = scmp.eq.s32.totalorder %s136, 0
    %s139 = sadd.s32 %s138, 1
    %s140 = scalar_select %p137, %s138, %s139
    %p143 = pneg %p137
    %p144 = scmp.eq.s32.totalorder %s23, 1
    %p145 = por %p143, %p144
    %p146 = scmp.ne.s32.totalorder %s138, %s141
    %p147 = scmp.eq.s32.totalorder %s23, 0
    %p148 = por %p146, %p147
    %p149 = scmp.ne.s32.totalorder %s138, %s141
    %p150 = scmp.eq.s32.totalorder %s28, 1
    %p151 = por %p149, %p150
    %p152 = scmp.ne.s32.totalorder %s141, %s142
    %p153 = scmp.eq.s32.totalorder %s28, 0
    %p154 = por %p152, %p153
    %p155 = scmp.ne.s32.totalorder %s141, %s142
    %p156 = scmp.eq.s32.totalorder %s29, 1
    %p157 = por %p155, %p156
    %p159 = scmp.ne.s32.totalorder %s142, %s158
    %p160 = scmp.eq.s32.totalorder %s29, 0
    %p161 = por %p159, %p160
    %s162 = ssub.s32 %s30, %s49
    %s163 = ssub.s32 %s32, %s41
    %s164 = sor.u32 %s162, %s163
    %p165 = scmp.eq.s32.totalorder %s164, 0
    %s167 = sadd.s32 %s166, 1
    %s168 = scalar_select %p165, %s166, %s167
    %p171 = pneg %p165
    %p172 = scmp.eq.s32.totalorder %s23, 1
    %p173 = por %p171, %p172
    %p174 = scmp.ne.s32.totalorder %s166, %s169
    %p175 = scmp.eq.s32.totalorder %s23, 0
    %p176 = por %p174, %p175
    %p177 = scmp.ne.s32.totalorder %s166, %s169
    %p178 = scmp.eq.s32.totalorder %s28, 1
    %p179 = por %p177, %p178
    %p180 = scmp.ne.s32.totalorder %s169, %s170
    %p181 = scmp.eq.s32.totalorder %s28, 0
    %p182 = por %p180, %p181
    %p183 = scmp.ne.s32.totalorder %s169, %s170
    %p184 = scmp.eq.s32.totalorder %s29, 1
    %p185 = por %p183, %p184
    %p187 = scmp.ne.s32.totalorder %s170, %s186
    %p188 = scmp.eq.s32.totalorder %s29, 0
    %p189 = por %p187, %p188
    %s190 = ssub.s32 %s30, %s49
    %s191 = ssub.s32 %s32, %s41
    %s192 = sor.u32 %s190, %s191
    %p193 = scmp.eq.s32.totalorder %s192, 0
    %s195 = sadd.s32 %s194, 1
    %s196 = scalar_select %p193, %s194, %s195
    %p199 = pneg %p193
    %p200 = scmp.eq.s32.totalorder %s23, 1
    %p201 = por %p199, %p200
    %p202 = scmp.ne.s32.totalorder %s194, %s197
    %p203 = scmp.eq.s32.totalorder %s23, 0
    %p204 = por %p202, %p203
    %p205 = scmp.ne.s32.totalorder %s194, %s197
    %p206 = scmp.eq.s32.totalorder %s28, 1
    %p207 = por %p205, %p206
    %p208 = scmp.ne.s32.totalorder %s197, %s198
    %p209 = scmp.eq.s32.totalorder %s28, 0
    %p210 = por %p208, %p209
    %p211 = scmp.ne.s32.totalorder %s197, %s198
    %p212 = scmp.eq.s32.totalorder %s29, 1
    %p213 = por %p211, %p212
    %p215 = scmp.ne.s32.totalorder %s198, %s214
    %p216 = scmp.eq.s32.totalorder %s29, 0
    %p217 = por %p215, %p216
    %s218 = ssub.s32 %s30, %s49
    %s219 = ssub.s32 %s32, %s41
    %s220 = sor.u32 %s218, %s219
    %p221 = scmp.eq.s32.totalorder %s220, 0
    %s223 = sadd.s32 %s222, 1
    %s224 = scalar_select %p221, %s222, %s223
    %p227 = pneg %p221
    %p228 = scmp.eq.s32.totalorder %s23, 1
    %p229 = por %p227, %p228
    %p230 = scmp.ne.s32.totalorder %s222, %s225
    %p231 = scmp.eq.s32.totalorder %s23, 0
    %p232 = por %p230, %p231
    %p233 = scmp.ne.s32.totalorder %s222, %s225
    %p234 = scmp.eq.s32.totalorder %s28, 1
    %p235 = por %p233, %p234
    %p236 = scmp.ne.s32.totalorder %s225, %s226
    %p237 = scmp.eq.s32.totalorder %s28, 0
    %p238 = por %p236, %p237
    %p239 = scmp.ne.s32.totalorder %s225, %s226
    %p240 = scmp.eq.s32.totalorder %s29, 1
    %p241 = por %p239, %p240
    %p243 = scmp.ne.s32.totalorder %s226, %s242
    %p244 = scmp.eq.s32.totalorder %s29, 0
    %p245 = por %p243, %p244
    %s246 = ssub.s32 %s30, %s49
    %s247 = ssub.s32 %s31, %s45
    %s248 = sor.u32 %s246, %s247
    %p249 = scmp.eq.s32.totalorder %s248, 0
    %s251 = sadd.s32 %s250, 1
    %s252 = scalar_select %p249, %s250, %s251
    %p255 = pneg %p249
    %p256 = scmp.eq.s32.totalorder %s23, 1
    %p257 = por %p255, %p256
    %p258 = scmp.ne.s32.totalorder %s250, %s253
    %p259 = scmp.eq.s32.totalorder %s23, 0
    %p260 = por %p258, %p259
    %p261 = scmp.ne.s32.totalorder %s250, %s253
    %p262 = scmp.eq.s32.totalorder %s28, 1
    %p263 = por %p261, %p262
    %p264 = scmp.ne.s32.totalorder %s253, %s254
    %p265 = scmp.eq.s32.totalorder %s28, 0
    %p266 = por %p264, %p265
    %p267 = scmp.ne.s32.totalorder %s253, %s254
    %p268 = scmp.eq.s32.totalorder %s29, 1
    %p269 = por %p267, %p268
    %p271 = scmp.ne.s32.totalorder %s254, %s270
    %p272 = scmp.eq.s32.totalorder %s29, 0
    %p273 = por %p271, %p272
    %s274 = ssub.s32 %s30, %s49
    %s275 = ssub.s32 %s31, %s45
    %s276 = sor.u32 %s274, %s275
    %p277 = scmp.eq.s32.totalorder %s276, 0
    %s279 = sadd.s32 %s278, 1
    %s280 = scalar_select %p277, %s278, %s279
    %p283 = pneg %p277
    %p284 = scmp.eq.s32.totalorder %s23, 1
    %p285 = por %p283, %p284
    %p286 = scmp.ne.s32.totalorder %s278, %s281
    %p287 = scmp.eq.s32.totalorder %s23, 0
    %p288 = por %p286, %p287
    %p289 = scmp.ne.s32.totalorder %s278, %s281
    %p290 = scmp.eq.s32.totalorder %s28, 1
    %p291 = por %p289, %p290
    %p292 = scmp.ne.s32.totalorder %s281, %s282
    %p293 = scmp.eq.s32.totalorder %s28, 0
    %p294 = por %p292, %p293
    %p295 = scmp.ne.s32.totalorder %s281, %s282
    %p296 = scmp.eq.s32.totalorder %s29, 1
    %p297 = por %p295, %p296
    %p299 = scmp.ne.s32.totalorder %s282, %s298
    %p300 = scmp.eq.s32.totalorder %s29, 0
    %p301 = por %p299, %p300
    %s302 = ssub.s32 %s30, %s49
    %s303 = ssub.s32 %s32, %s41
    %s304 = sor.u32 %s302, %s303
    %p305 = scmp.eq.s32.totalorder %s304, 0
    %s307 = sadd.s32 %s306, 1
    %s308 = scalar_select %p305, %s306, %s307
    %p311 = pneg %p305
    %p312 = scmp.eq.s32.totalorder %s23, 1
    %p313 = por %p311, %p312
    %p314 = scmp.ne.s32.totalorder %s306, %s309
    %p315 = scmp.eq.s32.totalorder %s23, 0
    %p316 = por %p314, %p315
    %p317 = scmp.ne.s32.totalorder %s306, %s309
    %p318 = scmp.eq.s32.totalorder %s28, 1
    %p319 = por %p317, %p318
    %p320 = scmp.ne.s32.totalorder %s309, %s310
    %p321 = scmp.eq.s32.totalorder %s28, 0
    %p322 = por %p320, %p321
    %p323 = scmp.ne.s32.totalorder %s309, %s310
    %p324 = scmp.eq.s32.totalorder %s29, 1
    %p325 = por %p323, %p324
    %p327 = scmp.ne.s32.totalorder %s310, %s326
    %p328 = scmp.eq.s32.totalorder %s29, 0
    %p329 = por %p327, %p328
    %s330 = ssub.s32 %s30, %s49
    %s331 = ssub.s32 %s32, %s41
    %s332 = sor.u32 %s330, %s331
    %p333 = scmp.eq.s32.totalorder %s332, 0
    %s335 = sadd.s32 %s334, 1
    %s336 = scalar_select %p333, %s334, %s335
    %p339 = pneg %p333
    %p340 = scmp.eq.s32.totalorder %s23, 1
    %p341 = por %p339, %p340
    %p342 = scmp.ne.s32.totalorder %s334, %s337
    %p343 = scmp.eq.s32.totalorder %s23, 0
    %p344 = por %p342, %p343
    %p345 = scmp.ne.s32.totalorder %s334, %s337
    %p346 = scmp.eq.s32.totalorder %s28, 1
    %p347 = por %p345, %p346
    %p348 = scmp.ne.s32.totalorder %s337, %s338
    %p349 = scmp.eq.s32.totalorder %s28, 0
    %p350 = por %p348, %p349
    %p351 = scmp.ne.s32.totalorder %s337, %s338
    %p352 = scmp.eq.s32.totalorder %s29, 1
    %p353 = por %p351, %p352
    %p355 = scmp.ne.s32.totalorder %s338, %s354
    %p356 = scmp.eq.s32.totalorder %s29, 0
    %p357 = por %p355, %p356
    %s359 = sadd.s32 %s358, 1
    %p362 = scmp.eq.s32.totalorder %s23, 1
    %p363 = scmp.ne.s32.totalorder %s358, %s360
    %p364 = scmp.eq.s32.totalorder %s23, 0
    %p365 = por %p363, %p364
    %p366 = scmp.ne.s32.totalorder %s358, %s360
    %p367 = scmp.eq.s32.totalorder %s28, 1
    %p368 = por %p366, %p367
    %p369 = scmp.ne.s32.totalorder %s360, %s361
    %p370 = scmp.eq.s32.totalorder %s28, 0
    %p371 = por %p369, %p370
    %p372 = scmp.ne.s32.totalorder %s360, %s361
    %p373 = scmp.eq.s32.totalorder %s29, 1
    %p374 = por %p372, %p373
    %p376 = scmp.ne.s32.totalorder %s361, %s375
    %p377 = scmp.eq.s32.totalorder %s29, 0
    %p378 = por %p376, %p377
    %s380 = sadd.s32 %s379, 1
    %p383 = scmp.eq.s32.totalorder %s23, 1
    %p384 = scmp.ne.s32.totalorder %s379, %s381
    %p385 = scmp.eq.s32.totalorder %s23, 0
    %p386 = por %p384, %p385
    %p387 = scmp.ne.s32.totalorder %s379, %s381
    %p388 = scmp.eq.s32.totalorder %s28, 1
    %p389 = por %p387, %p388
    %p390 = scmp.ne.s32.totalorder %s381, %s382
    %p391 = scmp.eq.s32.totalorder %s28, 0
    %p392 = por %p390, %p391
    %p393 = scmp.ne.s32.totalorder %s381, %s382
    %p394 = scmp.eq.s32.totalorder %s29, 1
    %p395 = por %p393, %p394
    %p397 = scmp.ne.s32.totalorder %s382, %s396
    %p398 = scmp.eq.s32.totalorder %s29, 0
    %p399 = por %p397, %p398
    %s401 = sadd.s32 %s400, 1
    %p404 = scmp.eq.s32.totalorder %s23, 1
    %p405 = scmp.ne.s32.totalorder %s400, %s402
    %p406 = scmp.eq.s32.totalorder %s23, 0
    %p407 = por %p405, %p406
    %p408 = scmp.ne.s32.totalorder %s400, %s402
    %p409 = scmp.eq.s32.totalorder %s28, 1
    %p410 = por %p408, %p409
    %p411 = scmp.ne.s32.totalorder %s402, %s403
    %p412 = scmp.eq.s32.totalorder %s28, 0
    %p413 = por %p411, %p412
    %p414 = scmp.ne.s32.totalorder %s402, %s403
    %p415 = scmp.eq.s32.totalorder %s29, 1
    %p416 = por %p414, %p415
    %p418 = scmp.ne.s32.totalorder %s403, %s417
    %p419 = scmp.eq.s32.totalorder %s29, 0
    %p420 = por %p418, %p419
    %s422 = sadd.s32 %s421, 1
    %p425 = scmp.eq.s32.totalorder %s23, 1
    %p426 = scmp.ne.s32.totalorder %s421, %s423
    %p427 = scmp.eq.s32.totalorder %s23, 0
    %p428 = por %p426, %p427
    %p429 = scmp.ne.s32.totalorder %s421, %s423
    %p430 = scmp.eq.s32.totalorder %s28, 1
    %p431 = por %p429, %p430
    %p432 = scmp.ne.s32.totalorder %s423, %s424
    %p433 = scmp.eq.s32.totalorder %s28, 0
    %p434 = por %p432, %p433
    %p435 = scmp.ne.s32.totalorder %s423, %s424
    %p436 = scmp.eq.s32.totalorder %s29, 1
    %p437 = por %p435, %p436
    %p439 = scmp.ne.s32.totalorder %s424, %s438
    %p440 = scmp.eq.s32.totalorder %s29, 0
    %p441 = por %p439, %p440
    %s443 = sadd.s32 %s442, 1
    %p446 = scmp.eq.s32.totalorder %s23, 1
    %p447 = scmp.ne.s32.totalorder %s442, %s444
    %p448 = scmp.eq.s32.totalorder %s23, 0
    %p449 = por %p447, %p448
    %p450 = scmp.ne.s32.totalorder %s442, %s444
    %p451 = scmp.eq.s32.totalorder %s28, 1
    %p452 = por %p450, %p451
    %p453 = scmp.ne.s32.totalorder %s444, %s445
    %p454 = scmp.eq.s32.totalorder %s28, 0
    %p455 = por %p453, %p454
    %p456 = scmp.ne.s32.totalorder %s444, %s445
    %p457 = scmp.eq.s32.totalorder %s29, 1
    %p458 = por %p456, %p457
    %p460 = scmp.ne.s32.totalorder %s445, %s459
    %p461 = scmp.eq.s32.totalorder %s29, 0
    %p462 = por %p460, %p461
    %s464 = sadd.s32 %s463, 1
    %p467 = scmp.eq.s32.totalorder %s23, 1
    %p468 = scmp.ne.s32.totalorder %s463, %s465
    %p469 = scmp.eq.s32.totalorder %s23, 0
    %p470 = por %p468, %p469
    %p471 = scmp.ne.s32.totalorder %s463, %s465
    %p472 = scmp.eq.s32.totalorder %s28, 1
    %p473 = por %p471, %p472
    %p474 = scmp.ne.s32.totalorder %s465, %s466
    %p475 = scmp.eq.s32.totalorder %s28, 0
    %p476 = por %p474, %p475
    %p477 = scmp.ne.s32.totalorder %s465, %s466
    %p478 = scmp.eq.s32.totalorder %s29, 1
    %p479 = por %p477, %p478
    %p481 = scmp.ne.s32.totalorder %s466, %s480
    %p482 = scmp.eq.s32.totalorder %s29, 0
    %p483 = por %p481, %p482
    %s484 = ssub.s32 %s30, %s49
    %s485 = ssub.s32 %s31, %s45
    %s486 = sor.u32 %s484, %s485
    %p487 = scmp.eq.s32.totalorder %s486, 0
    %s489 = sadd.s32 %s488, 1
    %s490 = scalar_select %p487, %s488, %s489
    %p493 = pneg %p487
    %p494 = scmp.eq.s32.totalorder %s23, 1
    %p495 = por %p493, %p494
    %p496 = scmp.ne.s32.totalorder %s488, %s491
    %p497 = scmp.eq.s32.totalorder %s23, 0
    %p498 = por %p496, %p497
    %p499 = scmp.ne.s32.totalorder %s488, %s491
    %p500 = scmp.eq.s32.totalorder %s28, 1
    %p501 = por %p499, %p500
    %p502 = scmp.ne.s32.totalorder %s491, %s492
    %p503 = scmp.eq.s32.totalorder %s28, 0
    %p504 = por %p502, %p503
    %p505 = scmp.ne.s32.totalorder %s491, %s492
    %p506 = scmp.eq.s32.totalorder %s29, 1
    %p507 = por %p505, %p506
    %p509 = scmp.ne.s32.totalorder %s492, %s508
    %p510 = scmp.eq.s32.totalorder %s29, 0
    %p511 = por %p509, %p510
    %p512 = scmp.le.s32.totalorder 1, %s23
    %p513 = scmp.lt.s32.totalorder %s23, 3
    %p514 = pnand %p512, %p513
    %p515 = pneg %p514
    // Predicated region
    $region9: #{flat_forward.7} parent=5 // pred_check
      _
    $region10: #{flat_forward.7} parent=5 // pred_check_branch
      %517 = sbr.rel (%p514) target = $region12
    $region11: #{flat_forward.7} parent=5 // pred_region
      %s518 = ssub.s32 %s23, 1
      // Predicated region
      $region13: #{flat_forward.7} parent=11 // pred_check
        %p519 = pneg %p371
      $region14: #{flat_forward.7} parent=11 // pred_check_branch
        %521 = sbr.rel (%p519) target = $region16
      $region15: #{flat_forward.7} parent=11 // pred_region
        _
      $region16: #{flat_forward.7} parent=11 // pred_fallthru
        _
      // Predicated region
      $region17: #{flat_forward.7} parent=11 // pred_check
        %p522 = pneg %p392
      $region18: #{flat_forward.7} parent=11 // pred_check_branch
        %524 = sbr.rel (%p522) target = $region20
      $region19: #{flat_forward.7} parent=11 // pred_region
        _
      $region20: #{flat_forward.7} parent=11 // pred_fallthru
        _
      // Predicated region
      $region21: #{flat_forward.7} parent=11 // pred_check
        %p525 = pneg %p413
      $region22: #{flat_forward.7} parent=11 // pred_check_branch
        %527 = sbr.rel (%p525) target = $region24
      $region23: #{flat_forward.7} parent=11 // pred_region
        _
      $region24: #{flat_forward.7} parent=11 // pred_fallthru
        _
      // Predicated region
      $region25: #{flat_forward.7} parent=11 // pred_check
        %p528 = pneg %p434
      $region26: #{flat_forward.7} parent=11 // pred_check_branch
        %530 = sbr.rel (%p528) target = $region28
      $region27: #{flat_forward.7} parent=11 // pred_region
        _
      $region28: #{flat_forward.7} parent=11 // pred_fallthru
        _
      // Predicated region
      $region29: #{flat_forward.7} parent=11 // pred_check
        %p531 = pneg %p455
      $region30: #{flat_forward.7} parent=11 // pred_check_branch
        %533 = sbr.rel (%p531) target = $region32
      $region31: #{flat_forward.7} parent=11 // pred_region
        _
      $region32: #{flat_forward.7} parent=11 // pred_fallthru
        _
      // Predicated region
      $region33: #{flat_forward.7} parent=11 // pred_check
        %p534 = pneg %p476
      $region34: #{flat_forward.7} parent=11 // pred_check_branch
        %536 = sbr.rel (%p534) target = $region36
      $region35: #{flat_forward.7} parent=11 // pred_region
        _
      $region36: #{flat_forward.7} parent=11 // pred_fallthru
        _
    $region12: #{flat_forward.7} parent=5 // pred_fallthru
      _
    %p537 = scmp.lt.s32.totalorder %s23, 2
    // Predicated region
    $region37: #{flat_forward.7} parent=5 // pred_check
      %p538 = pneg %p537
    $region38: #{flat_forward.7} parent=5 // pred_check_branch
      %540 = sbr.rel (%p538) target = $region40
    $region39: #{flat_forward.7} parent=5 // pred_region
      // Predicated region
      $region41: #{flat_forward.7} parent=39 // pred_check
        %p541 = pneg %p64
      $region42: #{flat_forward.7} parent=39 // pred_check_branch
        %543 = sbr.rel (%p541) target = $region44
      $region43: #{flat_forward.7} parent=39 // pred_region
        %p544 = scmp.lt.s32.totalorder %s30, 1
        %s545 = scalar_select %p544, %s30, 1
        %p546 = scmp.lt.s32.totalorder %s31, 0
        %s547 = scalar_select %p546, %s31, 0
        %s548 = sadd.s32 %s547, %s545
        %s549 = smul.addr %s548, 8
        %s550 = scalar_lea.vmem %s0, %s549
      $region44: #{flat_forward.7} parent=39 // pred_fallthru
        _
      // Predicated region
      $region45: #{flat_forward.7} parent=39 // pred_check
        %p551 = pneg %p92
      $region46: #{flat_forward.7} parent=39 // pred_check_branch
        %553 = sbr.rel (%p551) target = $region48
      $region47: #{flat_forward.7} parent=39 // pred_region
        %s554 = smul.u32 8, %s31
        %p555 = scmp.lt.s32.totalorder %s30, 1
        %s556 = scalar_select %p555, %s30, 1
        %p557 = scmp.lt.s32.totalorder %s554, 7
        %s558 = scalar_select %p557, %s554, 7
        %s559 = smul.addr %s556, 8
        %s560 = sadd.s32 %s558, %s559
        %s561 = scalar_lea.vmem %s1, %s560
        %s562 = smul.u32 8, %s31
      $region48: #{flat_forward.7} parent=39 // pred_fallthru
        _
      // Predicated region
      $region49: #{flat_forward.7} parent=39 // pred_check
        %p563 = pneg %p120
      $region50: #{flat_forward.7} parent=39 // pred_check_branch
        %565 = sbr.rel (%p563) target = $region52
      $region51: #{flat_forward.7} parent=39 // pred_region
        %s566 = smul.u32 8, %s31
        %p567 = scmp.lt.s32.totalorder %s30, 1
        %s568 = scalar_select %p567, %s30, 1
        %p569 = scmp.lt.s32.totalorder %s566, 7
        %s570 = scalar_select %p569, %s566, 7
        %s571 = smul.addr %s568, 8
        %s572 = sadd.s32 %s570, %s571
        %s573 = scalar_lea.vmem %s2, %s572
        %s574 = smul.u32 8, %s31
      $region52: #{flat_forward.7} parent=39 // pred_fallthru
        _
      // Predicated region
      $region53: #{flat_forward.7} parent=39 // pred_check
        %p575 = pneg %p148
      $region54: #{flat_forward.7} parent=39 // pred_check_branch
        %577 = sbr.rel (%p575) target = $region56
      $region55: #{flat_forward.7} parent=39 // pred_region
        %s578 = smul.u32 8, %s31
        %p579 = scmp.lt.s32.totalorder %s30, 1
        %s580 = scalar_select %p579, %s30, 1
        %p581 = scmp.lt.s32.totalorder %s578, 7
        %s582 = scalar_select %p581, %s578, 7
        %s583 = smul.addr %s580, 8
        %s584 = sadd.s32 %s582, %s583
        %s585 = smul.addr %s584, 2
        %s586 = scalar_lea.vmem %s3, %s585
        %s587 = smul.u32 8, %s31
      $region56: #{flat_forward.7} parent=39 // pred_fallthru
        _
      // Predicated region
      $region57: #{flat_forward.7} parent=39 // pred_check
        %p588 = pneg %p176
      $region58: #{flat_forward.7} parent=39 // pred_check_branch
        %590 = sbr.rel (%p588) target = $region60
      $region59: #{flat_forward.7} parent=39 // pred_region
        %p591 = scmp.lt.s32.totalorder %s30, 1
        %s592 = scalar_select %p591, %s30, 1
        %p593 = scmp.lt.s32.totalorder %s32, 0
        %s594 = scalar_select %p593, %s32, 0
        %s595 = sadd.s32 %s594, %s592
        %s596 = smul.addr %s595, 4
        %s597 = scalar_lea.vmem %s4, %s596
      $region60: #{flat_forward.7} parent=39 // pred_fallthru
        _
      // Predicated region
      $region61: #{flat_forward.7} parent=39 // pred_check
        %p598 = pneg %p204
      $region62: #{flat_forward.7} parent=39 // pred_check_branch
        %600 = sbr.rel (%p598) target = $region64
      $region63: #{flat_forward.7} parent=39 // pred_region
        %p601 = scmp.lt.s32.totalorder %s30, 1
        %s602 = scalar_select %p601, %s30, 1
        %p603 = scmp.lt.s32.totalorder %s32, 0
        %s604 = scalar_select %p603, %s32, 0
        %s605 = smul.addr %s602, 2
        %s606 = sadd.s32 %s604, %s605
        %s607 = smul.addr %s606, 4
        %s608 = scalar_lea.vmem %s5, %s607
      $region64: #{flat_forward.7} parent=39 // pred_fallthru
        _
      // Predicated region
      $region65: #{flat_forward.7} parent=39 // pred_check
        %p609 = pneg %p232
      $region66: #{flat_forward.7} parent=39 // pred_check_branch
        %611 = sbr.rel (%p609) target = $region68
      $region67: #{flat_forward.7} parent=39 // pred_region
        %p612 = scmp.lt.s32.totalorder %s30, 1
        %s613 = scalar_select %p612, %s30, 1
        %p614 = scmp.lt.s32.totalorder %s32, 0
        %s615 = scalar_select %p614, %s32, 0
        %s616 = sadd.s32 %s615, %s613
        %s617 = scalar_lea.vmem %s6, %s616
      $region68: #{flat_forward.7} parent=39 // pred_fallthru
        _
      // Predicated region
      $region69: #{flat_forward.7} parent=39 // pred_check
        %p618 = pneg %p260
      $region70: #{flat_forward.7} parent=39 // pred_check_branch
        %620 = sbr.rel (%p618) target = $region72
      $region71: #{flat_forward.7} parent=39 // pred_region
        %s621 = smul.u32 8, %s31
        %p622 = scmp.lt.s32.totalorder %s30, 1
        %s623 = scalar_select %p622, %s30, 1
        %p624 = scmp.lt.s32.totalorder %s621, 7
        %s625 = scalar_select %p624, %s621, 7
        %s626 = smul.addr %s623, 8
        %s627 = sadd.s32 %s625, %s626
        %s628 = scalar_lea.vmem %s7, %s627
        %s629 = smul.u32 8, %s31
      $region72: #{flat_forward.7} parent=39 // pred_fallthru
        _
      // Predicated region
      $region73: #{flat_forward.7} parent=39 // pred_check
        %p630 = pneg %p288
      $region74: #{flat_forward.7} parent=39 // pred_check_branch
        %632 = sbr.rel (%p630) target = $region76
      $region75: #{flat_forward.7} parent=39 // pred_region
        %s633 = smul.u32 8, %s31
        %p634 = scmp.lt.s32.totalorder %s30, 1
        %s635 = scalar_select %p634, %s30, 1
        %p636 = scmp.lt.s32.totalorder %s633, 7
        %s637 = scalar_select %p636, %s633, 7
        %s638 = smul.addr %s635, 8
        %s639 = sadd.s32 %s637, %s638
        %s640 = scalar_lea.vmem %s8, %s639
        %s641 = smul.u32 8, %s31
      $region76: #{flat_forward.7} parent=39 // pred_fallthru
        _
      // Predicated region
      $region77: #{flat_forward.7} parent=39 // pred_check
        %p642 = pneg %p316
      $region78: #{flat_forward.7} parent=39 // pred_check_branch
        %644 = sbr.rel (%p642) target = $region80
      $region79: #{flat_forward.7} parent=39 // pred_region
        %p645 = scmp.lt.s32.totalorder %s30, 1
        %s646 = scalar_select %p645, %s30, 1
        %p647 = scmp.lt.s32.totalorder %s32, 0
        %s648 = scalar_select %p647, %s32, 0
        %s649 = sadd.s32 %s648, %s646
        %s650 = smul.addr %s649, 8
        %s651 = scalar_lea.vmem %s9, %s650
      $region80: #{flat_forward.7} parent=39 // pred_fallthru
        _
      // Predicated region
      $region81: #{flat_forward.7} parent=39 // pred_check
        %p652 = pneg %p344
      $region82: #{flat_forward.7} parent=39 // pred_check_branch
        %654 = sbr.rel (%p652) target = $region84
      $region83: #{flat_forward.7} parent=39 // pred_region
        %p655 = scmp.lt.s32.totalorder %s30, 1
        %s656 = scalar_select %p655, %s30, 1
        %p657 = scmp.lt.s32.totalorder %s32, 0
        %s658 = scalar_select %p657, %s32, 0
        %s659 = sadd.s32 %s658, %s656
        %s660 = smul.addr %s659, 8
        %s661 = scalar_lea.vmem %s10, %s660
      $region84: #{flat_forward.7} parent=39 // pred_fallthru
        _
    $region40: #{flat_forward.7} parent=5 // pred_fallthru
      _
    %p662 = scmp.le.s32.totalorder 1, %s23
    %p663 = scmp.lt.s32.totalorder %s23, 3
    %p664 = pnand %p662, %p663
    %p665 = pneg %p664
    // Predicated region
    $region85: #{flat_forward.7} parent=5 // pred_check
      _
    $region86: #{flat_forward.7} parent=5 // pred_check_branch
      %667 = sbr.rel (%p664) target = $region88
    $region87: #{flat_forward.7} parent=5 // pred_region
      %s668 = ssub.s32 %s23, 1
      %p669 = scmp.lt.s32.totalorder %s33, 1
      %s670 = scalar_select %p669, %s33, 1
      %p671 = scmp.lt.s32.totalorder %s34, 0
      %s672 = scalar_select %p671, %s34, 0
      %s673 = sadd.s32 %s672, %s670
      %s674 = smul.addr %s673, 8
      %s675 = scalar_lea.vmem %s0, %s674
      %p676 = pneg %p70
      %p677 = pneg %p67
      %s678 = smul.u32 8, %s34
      %p679 = scmp.lt.s32.totalorder %s33, 1
      %s680 = scalar_select %p679, %s33, 1
      %p681 = scmp.lt.s32.totalorder %s678, 7
      %s682 = scalar_select %p681, %s678, 7
      %s683 = smul.addr %s680, 8
      %s684 = sadd.s32 %s682, %s683
      %s685 = scalar_lea.vmem %s1, %s684
      %p686 = pneg %p98
      %p687 = pneg %p95
      %s688 = smul.u32 8, %s34
      %p689 = scmp.lt.s32.totalorder %s33, 1
      %s690 = scalar_select %p689, %s33, 1
      %p691 = scmp.lt.s32.totalorder %s688, 7
      %s692 = scalar_select %p691, %s688, 7
      %s693 = smul.addr %s690, 8
      %s694 = sadd.s32 %s692, %s693
      %s695 = scalar_lea.vmem %s2, %s694
      %p696 = pneg %p126
      %p697 = pneg %p123
      %s698 = smul.u32 8, %s34
      %p699 = scmp.lt.s32.totalorder %s33, 1
      %s700 = scalar_select %p699, %s33, 1
      %p701 = scmp.lt.s32.totalorder %s698, 7
      %s702 = scalar_select %p701, %s698, 7
      %s703 = smul.addr %s700, 8
      %s704 = sadd.s32 %s702, %s703
      %s705 = smul.addr %s704, 2
      %s706 = scalar_lea.vmem %s3, %s705
      %p707 = pneg %p154
      %p708 = pneg %p151
      %p709 = scmp.lt.s32.totalorder %s33, 1
      %s710 = scalar_select %p709, %s33, 1
      %p711 = scmp.lt.s32.totalorder %s35, 0
      %s712 = scalar_select %p711, %s35, 0
      %s713 = sadd.s32 %s712, %s710
      %s714 = smul.addr %s713, 4
      %s715 = scalar_lea.vmem %s4, %s714
      %p716 = pneg %p182
      %p717 = pneg %p179
      %p718 = scmp.lt.s32.totalorder %s33, 1
      %s719 = scalar_select %p718, %s33, 1
      %p720 = scmp.lt.s32.totalorder %s35, 0
      %s721 = scalar_select %p720, %s35, 0
      %s722 = smul.addr %s719, 2
      %s723 = sadd.s32 %s721, %s722
      %s724 = smul.addr %s723, 4
      %s725 = scalar_lea.vmem %s5, %s724
      %p726 = pneg %p210
      %p727 = pneg %p207
      %p728 = scmp.lt.s32.totalorder %s33, 1
      %s729 = scalar_select %p728, %s33, 1
      %p730 = scmp.lt.s32.totalorder %s35, 0
      %s731 = scalar_select %p730, %s35, 0
      %s732 = sadd.s32 %s731, %s729
      %s733 = scalar_lea.vmem %s6, %s732
      %p734 = pneg %p238
      %p735 = pneg %p235
      %s736 = smul.u32 8, %s34
      %p737 = scmp.lt.s32.totalorder %s33, 1
      %s738 = scalar_select %p737, %s33, 1
      %p739 = scmp.lt.s32.totalorder %s736, 7
      %s740 = scalar_select %p739, %s736, 7
      %s741 = smul.addr %s738, 8
      %s742 = sadd.s32 %s740, %s741
      %s743 = scalar_lea.vmem %s7, %s742
      %p744 = pneg %p266
      %p745 = pneg %p263
      %s746 = smul.u32 8, %s34
      %p747 = scmp.lt.s32.totalorder %s33, 1
      %s748 = scalar_select %p747, %s33, 1
      %p749 = scmp.lt.s32.totalorder %s746, 7
      %s750 = scalar_select %p749, %s746, 7
      %s751 = smul.addr %s748, 8
      %s752 = sadd.s32 %s750, %s751
      %s753 = scalar_lea.vmem %s8, %s752
      %p754 = pneg %p294
      %p755 = pneg %p291
      %p756 = scmp.lt.s32.totalorder %s33, 1
      %s757 = scalar_select %p756, %s33, 1
      %p758 = scmp.lt.s32.totalorder %s35, 0
      %s759 = scalar_select %p758, %s35, 0
      %s760 = sadd.s32 %s759, %s757
      %s761 = smul.addr %s760, 8
      %s762 = scalar_lea.vmem %s9, %s761
      %p763 = pneg %p322
      %p764 = pneg %p319
      %p765 = scmp.lt.s32.totalorder %s33, 1
      %s766 = scalar_select %p765, %s33, 1
      %p767 = scmp.lt.s32.totalorder %s35, 0
      %s768 = scalar_select %p767, %s35, 0
      %s769 = sadd.s32 %s768, %s766
      %s770 = smul.addr %s769, 8
      %s771 = scalar_lea.vmem %s10, %s770
      %p772 = pneg %p350
      %p773 = pneg %p347
      %p774 = pneg %p371
      %p775 = pneg %p368
      %p776 = pneg %p392
      %p777 = pneg %p389
      %p778 = pneg %p413
      %p779 = pneg %p410
      %p780 = pneg %p434
      %p781 = pneg %p431
      %p782 = pneg %p455
      %p783 = pneg %p452
      %p784 = pneg %p476
      %p785 = pneg %p473
      %p786 = pneg %p504
      %p787 = pneg %p501
      %p788 = scmp.lt.s32.totalorder %s33, 1
      %s789 = scalar_select %p788, %s33, 1
      %p790 = scmp.lt.s32.totalorder %s34, 0
      %s791 = scalar_select %p790, %s34, 0
      %s792 = sadd.s32 %s791, %s789
      %s793 = smul.addr %s792, 8
      %s794 = scalar_lea.vmem %s17, %s793
      %p795 = scmp.lt.s32.totalorder %s33, 1
      %s796 = scalar_select %p795, %s33, 1
      %p797 = scmp.lt.s32.totalorder %s34, 0
      %s798 = scalar_select %p797, %s34, 0
      %s799 = sadd.s32 %s798, %s796
      %s800 = smul.addr %s799, 8
      %s801 = scalar_lea.vmem %s0, %s800
      %s802 = smul.u32 8, %s34
      %p803 = scmp.lt.s32.totalorder %s33, 1
      %s804 = scalar_select %p803, %s33, 1
      %p805 = scmp.lt.s32.totalorder %s802, 7
      %s806 = scalar_select %p805, %s802, 7
      %s807 = smul.addr %s804, 8
      %s808 = sadd.s32 %s806, %s807
      %s809 = scalar_lea.vmem %s1, %s808
      %s810 = smul.u32 8, %s34
      %s811 = smul.u32 8, %s34
      %p812 = scmp.lt.s32.totalorder %s33, 1
      %s813 = scalar_select %p812, %s33, 1
      %p814 = scmp.lt.s32.totalorder %s811, 7
      %s815 = scalar_select %p814, %s811, 7
      %s816 = smul.addr %s813, 8
      %s817 = sadd.s32 %s815, %s816
      %s818 = scalar_lea.vmem %s2, %s817
      %s819 = smul.u32 8, %s34
      %s820 = smul.u32 8, %s34
      %p821 = scmp.lt.s32.totalorder %s33, 1
      %s822 = scalar_select %p821, %s33, 1
      %p823 = scmp.lt.s32.totalorder %s820, 7
      %s824 = scalar_select %p823, %s820, 7
      %s825 = smul.addr %s822, 8
      %s826 = sadd.s32 %s824, %s825
      %s827 = smul.addr %s826, 2
      %s828 = scalar_lea.vmem %s3, %s827
      %s829 = smul.u32 8, %s34
      %p830 = scmp.lt.s32.totalorder %s33, 1
      %s831 = scalar_select %p830, %s33, 1
      %p832 = scmp.lt.s32.totalorder %s35, 0
      %s833 = scalar_select %p832, %s35, 0
      %s834 = sadd.s32 %s833, %s831
      %s835 = smul.addr %s834, 4
      %s836 = scalar_lea.vmem %s4, %s835
      %p837 = scmp.lt.s32.totalorder %s33, 1
      %s838 = scalar_select %p837, %s33, 1
      %p839 = scmp.lt.s32.totalorder %s35, 0
      %s840 = scalar_select %p839, %s35, 0
      %s841 = smul.addr %s838, 2
      %s842 = sadd.s32 %s840, %s841
      %s843 = smul.addr %s842, 4
      %s844 = scalar_lea.vmem %s5, %s843
      %p845 = scmp.lt.s32.totalorder %s33, 1
      %s846 = scalar_select %p845, %s33, 1
      %p847 = scmp.lt.s32.totalorder %s35, 0
      %s848 = scalar_select %p847, %s35, 0
      %s849 = sadd.s32 %s848, %s846
      %s850 = scalar_lea.vmem %s6, %s849
      %s851 = smul.u32 8, %s34
      %p852 = scmp.lt.s32.totalorder %s33, 1
      %s853 = scalar_select %p852, %s33, 1
      %p854 = scmp.lt.s32.totalorder %s851, 7
      %s855 = scalar_select %p854, %s851, 7
      %s856 = smul.addr %s853, 8
      %s857 = sadd.s32 %s855, %s856
      %s858 = scalar_lea.vmem %s7, %s857
      %s859 = smul.u32 8, %s34
      %s860 = smul.u32 8, %s34
      %p861 = scmp.lt.s32.totalorder %s33, 1
      %s862 = scalar_select %p861, %s33, 1
      %p863 = scmp.lt.s32.totalorder %s860, 7
      %s864 = scalar_select %p863, %s860, 7
      %s865 = smul.addr %s862, 8
      %s866 = sadd.s32 %s864, %s865
      %s867 = scalar_lea.vmem %s8, %s866
      %s868 = smul.u32 8, %s34
      %p869 = scmp.lt.s32.totalorder %s33, 1
      %s870 = scalar_select %p869, %s33, 1
      %p871 = scmp.lt.s32.totalorder %s35, 0
      %s872 = scalar_select %p871, %s35, 0
      %s873 = sadd.s32 %s872, %s870
      %s874 = smul.addr %s873, 8
      %s875 = scalar_lea.vmem %s9, %s874
      %p876 = scmp.lt.s32.totalorder %s33, 1
      %s877 = scalar_select %p876, %s33, 1
      %p878 = scmp.lt.s32.totalorder %s35, 0
      %s879 = scalar_select %p878, %s35, 0
      %s880 = sadd.s32 %s879, %s877
      %s881 = smul.addr %s880, 8
      %s882 = scalar_lea.vmem %s10, %s881
      %p883 = scmp.lt.s32.totalorder %s33, 1
      %s884 = scalar_select %p883, %s33, 1
      %p885 = scmp.lt.s32.totalorder %s34, 0
      %s886 = scalar_select %p885, %s34, 0
      %s887 = sadd.s32 %s886, %s884
      %s888 = smul.addr %s887, 8
      %s889 = scalar_lea.vmem %s17, %s888
      %p891 = scmp.eq.s32.totalorder %s35, 0
      // Predicated region
      $region89: #{flat_forward.7} parent=87 // pred_check
        %p892 = pneg %p891
      $region90: #{flat_forward.7} parent=87 // pred_check_branch
        %894 = sbr.rel (%p892) target = $region92
      $region91: #{flat_forward.7} parent=87 // pred_region
        %vm895 = vcmask 1024
        %896 = vst.msk [vmem:[#allocation2] sm:$0x3] %vm895, -inf
        %897 = vst.msk [vmem:[#allocation2 + $0x2] sm:$0x3] %vm895, -inf
        %898 = vst.msk [vmem:[#allocation2 + $0x4] sm:$0x3] %vm895, -inf
        %899 = vst.msk [vmem:[#allocation2 + $0x6] sm:$0x3] %vm895, -inf
        %900 = vst.msk [vmem:[#allocation2 + $0x8] sm:$0x3] %vm895, -inf
        %901 = vst.msk [vmem:[#allocation2 + $0xa] sm:$0x3] %vm895, -inf
        %902 = vst.msk [vmem:[#allocation2 + $0xc] sm:$0x3] %vm895, -inf
        %903 = vst.msk [vmem:[#allocation2 + $0xe] sm:$0x3] %vm895, -inf
        %904 = vst.msk [vmem:[#allocation3] sm:$0x3] %vm895, 0.0
        %905 = vst.msk [vmem:[#allocation3 + $0x2] sm:$0x3] %vm895, 0.0
        %906 = vst.msk [vmem:[#allocation3 + $0x4] sm:$0x3] %vm895, 0.0
        %907 = vst.msk [vmem:[#allocation3 + $0x6] sm:$0x3] %vm895, 0.0
        %908 = vst.msk [vmem:[#allocation3 + $0x8] sm:$0x3] %vm895, 0.0
        %909 = vst.msk [vmem:[#allocation3 + $0xa] sm:$0x3] %vm895, 0.0
        %910 = vst.msk [vmem:[#allocation3 + $0xc] sm:$0x3] %vm895, 0.0
        %911 = vst.msk [vmem:[#allocation3 + $0xe] sm:$0x3] %vm895, 0.0
        %vm912 = vcmask 130048
        %913 = vst.msk [vmem:[#allocation4] sm:$0xff] %vm912, 0.0
        %914 = vst.msk [vmem:[#allocation4 + $0x8] sm:$0xff] %vm912, 0.0
      $region92: #{flat_forward.7} parent=87 // pred_fallthru
        _
      %v915 = vld [vmem:[%s858] sm:$0x1]
      %v916 = vld [vmem:[%s858 + $0x1] sm:$0x1]
      %v917 = vld [vmem:[%s858 + $0x2] sm:$0x1]
      %v918 = vld [vmem:[%s858 + $0x3] sm:$0x1]
      %v919 = vld [vmem:[%s858 + $0x4] sm:$0x1]
      %v920 = vld [vmem:[%s858 + $0x5] sm:$0x1]
      %v921 = vld [vmem:[%s858 + $0x6] sm:$0x1]
      %v922 = vld [vmem:[%s858 + $0x7] sm:$0x1]
      %v923 = vld [vmem:[%s867] sm:$0x1]
      %v924 = vld [vmem:[%s867 + $0x1] sm:$0x1]
      %v925 = vld [vmem:[%s867 + $0x2] sm:$0x1]
      %v926 = vld [vmem:[%s867 + $0x3] sm:$0x1]
      %v927 = vld [vmem:[%s867 + $0x4] sm:$0x1]
      %v928 = vld [vmem:[%s867 + $0x5] sm:$0x1]
      %v929 = vld [vmem:[%s867 + $0x6] sm:$0x1]
      %v930 = vld [vmem:[%s867 + $0x7] sm:$0x1]
      %v931 = vld [vmem:[%s875] sm:$0xff]
      %v932 = vld [vmem:[%s882] sm:$0xff]
      %v933 = vld [vmem:[%s12] sm:$0x1]
      %v934 = vlaneseq
      %v935 = vand.u32 %v934, 127
      %v936 = vadd.s32 %v935, 128
      %v937 = vlaneseq
      %v938 = vshrl.u32 %v937, 7
      %v939 = vsub.s32 0, %v938
      %v940 = vrot.slane %v915, %v939
      %v941 = vlaneseq
      %v942 = vshrl.u32 %v941, 7
      %v943 = vsub.s32 0, %v942
      %v944 = vrot.slane %v916, %v943
      %v945 = vlaneseq
      %v946 = vshrl.u32 %v945, 7
      %v947 = vsub.s32 0, %v946
      %v948 = vrot.slane %v917, %v947
      %v949 = vlaneseq
      %v950 = vshrl.u32 %v949, 7
      %v951 = vsub.s32 0, %v950
      %v952 = vrot.slane %v918, %v951
      %v953 = vlaneseq
      %v954 = vshrl.u32 %v953, 7
      %v955 = vsub.s32 0, %v954
      %v956 = vrot.slane %v919, %v955
      %v957 = vlaneseq
      %v958 = vshrl.u32 %v957, 7
      %v959 = vsub.s32 0, %v958
      %v960 = vrot.slane %v920, %v959
      %v961 = vlaneseq
      %v962 = vshrl.u32 %v961, 7
      %v963 = vsub.s32 0, %v962
      %v964 = vrot.slane %v921, %v963
      %v965 = vlaneseq
      %v966 = vshrl.u32 %v965, 7
      %v967 = vsub.s32 0, %v966
      %v968 = vrot.slane %v922, %v967
      %v969 = vsub.s32 %v940, %v931
      %v970 = vsub.s32 %v944, %v931
      %v971 = vsub.s32 %v948, %v931
      %v972 = vsub.s32 %v952, %v931
      %v973 = vsub.s32 %v956, %v931
      %v974 = vsub.s32 %v960, %v931
      %v975 = vsub.s32 %v964, %v931
      %v976 = vsub.s32 %v968, %v931
      %v977 = vadd.s32 %v969, 16
      %v978 = vadd.s32 %v970, 16
      %v979 = vadd.s32 %v971, 16
      %v980 = vadd.s32 %v972, 16
      %v981 = vadd.s32 %v973, 16
      %v982 = vadd.s32 %v974, 16
      %v983 = vadd.s32 %v975, 16
      %v984 = vadd.s32 %v976, 16
      %vm985 = vcmp.gt.s32.totalorder %v977, 0
      %v986 = vsel %vm985, %v977, 0
      %vm987 = vcmp.gt.s32.totalorder %v978, 0
      %v988 = vsel %vm987, %v978, 0
      %vm989 = vcmp.gt.s32.totalorder %v979, 0
      %v990 = vsel %vm989, %v979, 0
      %vm991 = vcmp.gt.s32.totalorder %v980, 0
      %v992 = vsel %vm991, %v980, 0
      %vm993 = vcmp.gt.s32.totalorder %v981, 0
      %v994 = vsel %vm993, %v981, 0
      %vm995 = vcmp.gt.s32.totalorder %v982, 0
      %v996 = vsel %vm995, %v982, 0
      %vm997 = vcmp.gt.s32.totalorder %v983, 0
      %v998 = vsel %vm997, %v983, 0
      %vm999 = vcmp.gt.s32.totalorder %v984, 0
      %v1000 = vsel %vm999, %v984, 0
      %vm1001 = vcmp.lt.s32.totalorder %v986, 32
      %v1002 = vsel %vm1001, %v986, 32
      %vm1003 = vcmp.lt.s32.totalorder %v988, 32
      %v1004 = vsel %vm1003, %v988, 32
      %vm1005 = vcmp.lt.s32.totalorder %v990, 32
      %v1006 = vsel %vm1005, %v990, 32
      %vm1007 = vcmp.lt.s32.totalorder %v992, 32
      %v1008 = vsel %vm1007, %v992, 32
      %vm1009 = vcmp.lt.s32.totalorder %v994, 32
      %v1010 = vsel %vm1009, %v994, 32
      %vm1011 = vcmp.lt.s32.totalorder %v996, 32
      %v1012 = vsel %vm1011, %v996, 32
      %vm1013 = vcmp.lt.s32.totalorder %v998, 32
      %v1014 = vsel %vm1013, %v998, 32
      %vm1015 = vcmp.lt.s32.totalorder %v1000, 32
      %v1016 = vsel %vm1015, %v1000, 32
      %1017 = vset.pattern.permute.xlu0 0
      %1018 = vperm.xlu0 %1017, %v1002
      %v1019 = vpop.permute.xlu0 %1018
      %1020 = vset.pattern.permute.xlu0 0
      %1021 = vperm.xlu0 %1020, %v1004
      %v1022 = vpop.permute.xlu0 %1021
      %1023 = vset.pattern.permute.xlu0 0
      %1024 = vperm.xlu0 %1023, %v1006
      %v1025 = vpop.permute.xlu0 %1024
      %1026 = vset.pattern.permute.xlu0 0
      %1027 = vperm.xlu0 %1026, %v1008
      %v1028 = vpop.permute.xlu0 %1027
      %1029 = vset.pattern.permute.xlu0 0
      %1030 = vperm.xlu0 %1029, %v1010
      %v1031 = vpop.permute.xlu0 %1030
      %1032 = vset.pattern.permute.xlu0 0
      %1033 = vperm.xlu0 %1032, %v1012
      %v1034 = vpop.permute.xlu0 %1033
      %1035 = vset.pattern.permute.xlu0 0
      %1036 = vperm.xlu0 %1035, %v1014
      %v1037 = vpop.permute.xlu0 %1036
      %1038 = vset.pattern.permute.xlu0 0
      %1039 = vperm.xlu0 %1038, %v1016
      %v1040 = vpop.permute.xlu0 %1039
      %vm1041 = vcmp.eq.s32.totalorder %v935, %v1019
      %vm1042 = vcmp.eq.s32.totalorder %v936, %v1019
      %vm1043 = vcmp.eq.s32.totalorder %v935, %v1022
      %vm1044 = vcmp.eq.s32.totalorder %v936, %v1022
      %vm1045 = vcmp.eq.s32.totalorder %v935, %v1025
      %vm1046 = vcmp.eq.s32.totalorder %v936, %v1025
      %vm1047 = vcmp.eq.s32.totalorder %v935, %v1028
      %vm1048 = vcmp.eq.s32.totalorder %v936, %v1028
      %vm1049 = vcmp.eq.s32.totalorder %v935, %v1031
      %vm1050 = vcmp.eq.s32.totalorder %v936, %v1031
      %vm1051 = vcmp.eq.s32.totalorder %v935, %v1034
      %vm1052 = vcmp.eq.s32.totalorder %v936, %v1034
      %vm1053 = vcmp.eq.s32.totalorder %v935, %v1037
      %vm1054 = vcmp.eq.s32.totalorder %v936, %v1037
      %vm1055 = vcmp.eq.s32.totalorder %v935, %v1040
      %vm1056 = vcmp.eq.s32.totalorder %v936, %v1040
      %v1057 = vsel %vm1041, 1, 0
      %v1058 = vsel %vm1042, 1, 0
      %v1059 = vsel %vm1043, 1, 0
      %v1060 = vsel %vm1044, 1, 0
      %v1061 = vsel %vm1045, 1, 0
      %v1062 = vsel %vm1046, 1, 0
      %v1063 = vsel %vm1047, 1, 0
      %v1064 = vsel %vm1048, 1, 0
      %v1065 = vsel %vm1049, 1, 0
      %v1066 = vsel %vm1050, 1, 0
      %v1067 = vsel %vm1051, 1, 0
      %v1068 = vsel %vm1052, 1, 0
      %v1069 = vsel %vm1053, 1, 0
      %v1070 = vsel %vm1054, 1, 0
      %v1071 = vsel %vm1055, 1, 0
      %v1072 = vsel %vm1056, 1, 0
      %v1073 = vcvt.s32.f32 %v1057
      %v1074 = vcvt.s32.f32 %v1058
      %v1075 = vcvt.s32.f32 %v1059
      %v1076 = vcvt.s32.f32 %v1060
      %v1077 = vcvt.s32.f32 %v1061
      %v1078 = vcvt.s32.f32 %v1062
      %v1079 = vcvt.s32.f32 %v1063
      %v1080 = vcvt.s32.f32 %v1064
      %v1081 = vcvt.s32.f32 %v1065
      %v1082 = vcvt.s32.f32 %v1066
      %v1083 = vcvt.s32.f32 %v1067
      %v1084 = vcvt.s32.f32 %v1068
      %v1085 = vcvt.s32.f32 %v1069
      %v1086 = vcvt.s32.f32 %v1070
      %v1087 = vcvt.s32.f32 %v1071
      %v1088 = vcvt.s32.f32 %v1072
      %v1089 = vsub.s32 %v940, %v932
      %v1090 = vsub.s32 %v944, %v932
      %v1091 = vsub.s32 %v948, %v932
      %v1092 = vsub.s32 %v952, %v932
      %v1093 = vsub.s32 %v956, %v932
      %v1094 = vsub.s32 %v960, %v932
      %v1095 = vsub.s32 %v964, %v932
      %v1096 = vsub.s32 %v968, %v932
      %v1097 = vadd.s32 %v1089, 16
      %v1098 = vadd.s32 %v1090, 16
      %v1099 = vadd.s32 %v1091, 16
      %v1100 = vadd.s32 %v1092, 16
      %v1101 = vadd.s32 %v1093, 16
      %v1102 = vadd.s32 %v1094, 16
      %v1103 = vadd.s32 %v1095, 16
      %v1104 = vadd.s32 %v1096, 16
      %vm1105 = vcmp.gt.s32.totalorder %v1097, 0
      %v1106 = vsel %vm1105, %v1097, 0
      %vm1107 = vcmp.gt.s32.totalorder %v1098, 0
      %v1108 = vsel %vm1107, %v1098, 0
      %vm1109 = vcmp.gt.s32.totalorder %v1099, 0
      %v1110 = vsel %vm1109, %v1099, 0
      %vm1111 = vcmp.gt.s32.totalorder %v1100, 0
      %v1112 = vsel %vm1111, %v1100, 0
      %vm1113 = vcmp.gt.s32.totalorder %v1101, 0
      %v1114 = vsel %vm1113, %v1101, 0
      %vm1115 = vcmp.gt.s32.totalorder %v1102, 0
      %v1116 = vsel %vm1115, %v1102, 0
      %vm1117 = vcmp.gt.s32.totalorder %v1103, 0
      %v1118 = vsel %vm1117, %v1103, 0
      %vm1119 = vcmp.gt.s32.totalorder %v1104, 0
      %v1120 = vsel %vm1119, %v1104, 0
      %vm1121 = vcmp.lt.s32.totalorder %v1106, 32
      %v1122 = vsel %vm1121, %v1106, 32
      %vm1123 = vcmp.lt.s32.totalorder %v1108, 32
      %v1124 = vsel %vm1123, %v1108, 32
      %vm1125 = vcmp.lt.s32.totalorder %v1110, 32
      %v1126 = vsel %vm1125, %v1110, 32
      %vm1127 = vcmp.lt.s32.totalorder %v1112, 32
      %v1128 = vsel %vm1127, %v1112, 32
      %vm1129 = vcmp.lt.s32.totalorder %v1114, 32
      %v1130 = vsel %vm1129, %v1114, 32
      %vm1131 = vcmp.lt.s32.totalorder %v1116, 32
      %v1132 = vsel %vm1131, %v1116, 32
      %vm1133 = vcmp.lt.s32.totalorder %v1118, 32
      %v1134 = vsel %vm1133, %v1118, 32
      %vm1135 = vcmp.lt.s32.totalorder %v1120, 32
      %v1136 = vsel %vm1135, %v1120, 32
      %v1137 = vadd.s32 %v1122, 33
      %v1138 = vadd.s32 %v1124, 33
      %v1139 = vadd.s32 %v1126, 33
      %v1140 = vadd.s32 %v1128, 33
      %v1141 = vadd.s32 %v1130, 33
      %v1142 = vadd.s32 %v1132, 33
      %v1143 = vadd.s32 %v1134, 33
      %v1144 = vadd.s32 %v1136, 33
      %1145 = vset.pattern.permute.xlu0 0
      %1146 = vperm.xlu0 %1145, %v1137
      %v1147 = vpop.permute.xlu0 %1146
      %1148 = vset.pattern.permute.xlu0 0
      %1149 = vperm.xlu0 %1148, %v1138
      %v1150 = vpop.permute.xlu0 %1149
      %1151 = vset.pattern.permute.xlu0 0
      %1152 = vperm.xlu0 %1151, %v1139
      %v1153 = vpop.permute.xlu0 %1152
      %1154 = vset.pattern.permute.xlu0 0
      %1155 = vperm.xlu0 %1154, %v1140
      %v1156 = vpop.permute.xlu0 %1155
      %1157 = vset.pattern.permute.xlu0 0
      %1158 = vperm.xlu0 %1157, %v1141
      %v1159 = vpop.permute.xlu0 %1158
      %1160 = vset.pattern.permute.xlu0 0
      %1161 = vperm.xlu0 %1160, %v1142
      %v1162 = vpop.permute.xlu0 %1161
      %1163 = vset.pattern.permute.xlu0 0
      %1164 = vperm.xlu0 %1163, %v1143
      %v1165 = vpop.permute.xlu0 %1164
      %1166 = vset.pattern.permute.xlu0 0
      %1167 = vperm.xlu0 %1166, %v1144
      %v1168 = vpop.permute.xlu0 %1167
      %vm1169 = vcmp.eq.s32.totalorder %v935, %v1147
      %vm1170 = vcmp.eq.s32.totalorder %v936, %v1147
      %vm1171 = vcmp.eq.s32.totalorder %v935, %v1150
      %vm1172 = vcmp.eq.s32.totalorder %v936, %v1150
      %vm1173 = vcmp.eq.s32.totalorder %v935, %v1153
      %vm1174 = vcmp.eq.s32.totalorder %v936, %v1153
      %vm1175 = vcmp.eq.s32.totalorder %v935, %v1156
      %vm1176 = vcmp.eq.s32.totalorder %v936, %v1156
      %vm1177 = vcmp.eq.s32.totalorder %v935, %v1159
      %vm1178 = vcmp.eq.s32.totalorder %v936, %v1159
      %vm1179 = vcmp.eq.s32.totalorder %v935, %v1162
      %vm1180 = vcmp.eq.s32.totalorder %v936, %v1162
      %vm1181 = vcmp.eq.s32.totalorder %v935, %v1165
      %vm1182 = vcmp.eq.s32.totalorder %v936, %v1165
      %vm1183 = vcmp.eq.s32.totalorder %v935, %v1168
      %vm1184 = vcmp.eq.s32.totalorder %v936, %v1168
      %v1185 = vsel %vm1169, 1, 0
      %v1186 = vsel %vm1170, 1, 0
      %v1187 = vsel %vm1171, 1, 0
      %v1188 = vsel %vm1172, 1, 0
      %v1189 = vsel %vm1173, 1, 0
      %v1190 = vsel %vm1174, 1, 0
      %v1191 = vsel %vm1175, 1, 0
      %v1192 = vsel %vm1176, 1, 0
      %v1193 = vsel %vm1177, 1, 0
      %v1194 = vsel %vm1178, 1, 0
      %v1195 = vsel %vm1179, 1, 0
      %v1196 = vsel %vm1180, 1, 0
      %v1197 = vsel %vm1181, 1, 0
      %v1198 = vsel %vm1182, 1, 0
      %v1199 = vsel %vm1183, 1, 0
      %v1200 = vsel %vm1184, 1, 0
      %v1201 = vcvt.s32.f32 %v1185
      %v1202 = vcvt.s32.f32 %v1186
      %v1203 = vcvt.s32.f32 %v1187
      %v1204 = vcvt.s32.f32 %v1188
      %v1205 = vcvt.s32.f32 %v1189
      %v1206 = vcvt.s32.f32 %v1190
      %v1207 = vcvt.s32.f32 %v1191
      %v1208 = vcvt.s32.f32 %v1192
      %v1209 = vcvt.s32.f32 %v1193
      %v1210 = vcvt.s32.f32 %v1194
      %v1211 = vcvt.s32.f32 %v1195
      %v1212 = vcvt.s32.f32 %v1196
      %v1213 = vcvt.s32.f32 %v1197
      %v1214 = vcvt.s32.f32 %v1198
      %v1215 = vcvt.s32.f32 %v1199
      %v1216 = vcvt.s32.f32 %v1200
      %v1217 = vadd.f32 %v1073, %v1201
      %v1218 = vadd.f32 %v1074, %v1202
      %v1219 = vadd.f32 %v1075, %v1203
      %v1220 = vadd.f32 %v1076, %v1204
      %v1221 = vadd.f32 %v1077, %v1205
      %v1222 = vadd.f32 %v1078, %v1206
      %v1223 = vadd.f32 %v1079, %v1207
      %v1224 = vadd.f32 %v1080, %v1208
      %v1225 = vadd.f32 %v1081, %v1209
      %v1226 = vadd.f32 %v1082, %v1210
      %v1227 = vadd.f32 %v1083, %v1211
      %v1228 = vadd.f32 %v1084, %v1212
      %v1229 = vadd.f32 %v1085, %v1213
      %v1230 = vadd.f32 %v1086, %v1214
      %v1231 = vadd.f32 %v1087, %v1215
      %v1232 = vadd.f32 %v1088, %v1216
      %v1233 = vlaneseq
      %v1234 = vshrl.u32 %v1233, 7
      %v1235 = vsub.s32 0, %v1234
      %v1236 = vrot.slane %v923, %v1235
      %v1237 = vlaneseq
      %v1238 = vshrl.u32 %v1237, 7
      %v1239 = vsub.s32 0, %v1238
      %v1240 = vrot.slane %v924, %v1239
      %v1241 = vlaneseq
      %v1242 = vshrl.u32 %v1241, 7
      %v1243 = vsub.s32 0, %v1242
      %v1244 = vrot.slane %v925, %v1243
      %v1245 = vlaneseq
      %v1246 = vshrl.u32 %v1245, 7
      %v1247 = vsub.s32 0, %v1246
      %v1248 = vrot.slane %v926, %v1247
      %v1249 = vlaneseq
      %v1250 = vshrl.u32 %v1249, 7
      %v1251 = vsub.s32 0, %v1250
      %v1252 = vrot.slane %v927, %v1251
      %v1253 = vlaneseq
      %v1254 = vshrl.u32 %v1253, 7
      %v1255 = vsub.s32 0, %v1254
      %v1256 = vrot.slane %v928, %v1255
      %v1257 = vlaneseq
      %v1258 = vshrl.u32 %v1257, 7
      %v1259 = vsub.s32 0, %v1258
      %v1260 = vrot.slane %v929, %v1259
      %v1261 = vlaneseq
      %v1262 = vshrl.u32 %v1261, 7
      %v1263 = vsub.s32 0, %v1262
      %v1264 = vrot.slane %v930, %v1263
      %v1265 = vsub.s32 %v1236, %v931
      %v1266 = vsub.s32 %v1240, %v931
      %v1267 = vsub.s32 %v1244, %v931
      %v1268 = vsub.s32 %v1248, %v931
      %v1269 = vsub.s32 %v1252, %v931
      %v1270 = vsub.s32 %v1256, %v931
      %v1271 = vsub.s32 %v1260, %v931
      %v1272 = vsub.s32 %v1264, %v931
      %v1273 = vadd.s32 %v1265, 16
      %v1274 = vadd.s32 %v1266, 16
      %v1275 = vadd.s32 %v1267, 16
      %v1276 = vadd.s32 %v1268, 16
      %v1277 = vadd.s32 %v1269, 16
      %v1278 = vadd.s32 %v1270, 16
      %v1279 = vadd.s32 %v1271, 16
      %v1280 = vadd.s32 %v1272, 16
      %vm1281 = vcmp.gt.s32.totalorder %v1273, 0
      %v1282 = vsel %vm1281, %v1273, 0
      %vm1283 = vcmp.gt.s32.totalorder %v1274, 0
      %v1284 = vsel %vm1283, %v1274, 0
      %vm1285 = vcmp.gt.s32.totalorder %v1275, 0
      %v1286 = vsel %vm1285, %v1275, 0
      %vm1287 = vcmp.gt.s32.totalorder %v1276, 0
      %v1288 = vsel %vm1287, %v1276, 0
      %vm1289 = vcmp.gt.s32.totalorder %v1277, 0
      %v1290 = vsel %vm1289, %v1277, 0
      %vm1291 = vcmp.gt.s32.totalorder %v1278, 0
      %v1292 = vsel %vm1291, %v1278, 0
      %vm1293 = vcmp.gt.s32.totalorder %v1279, 0
      %v1294 = vsel %vm1293, %v1279, 0
      %vm1295 = vcmp.gt.s32.totalorder %v1280, 0
      %v1296 = vsel %vm1295, %v1280, 0
      %vm1297 = vcmp.lt.s32.totalorder %v1282, 32
      %v1298 = vsel %vm1297, %v1282, 32
      %vm1299 = vcmp.lt.s32.totalorder %v1284, 32
      %v1300 = vsel %vm1299, %v1284, 32
      %vm1301 = vcmp.lt.s32.totalorder %v1286, 32
      %v1302 = vsel %vm1301, %v1286, 32
      %vm1303 = vcmp.lt.s32.totalorder %v1288, 32
      %v1304 = vsel %vm1303, %v1288, 32
      %vm1305 = vcmp.lt.s32.totalorder %v1290, 32
      %v1306 = vsel %vm1305, %v1290, 32
      %vm1307 = vcmp.lt.s32.totalorder %v1292, 32
      %v1308 = vsel %vm1307, %v1292, 32
      %vm1309 = vcmp.lt.s32.totalorder %v1294, 32
      %v1310 = vsel %vm1309, %v1294, 32
      %vm1311 = vcmp.lt.s32.totalorder %v1296, 32
      %v1312 = vsel %vm1311, %v1296, 32
      %v1313 = vadd.s32 %v1298, 66
      %v1314 = vadd.s32 %v1300, 66
      %v1315 = vadd.s32 %v1302, 66
      %v1316 = vadd.s32 %v1304, 66
      %v1317 = vadd.s32 %v1306, 66
      %v1318 = vadd.s32 %v1308, 66
      %v1319 = vadd.s32 %v1310, 66
      %v1320 = vadd.s32 %v1312, 66
      %1321 = vset.pattern.permute.xlu0 0
      %1322 = vperm.xlu0 %1321, %v1313
      %v1323 = vpop.permute.xlu0 %1322
      %1324 = vset.pattern.permute.xlu0 0
      %1325 = vperm.xlu0 %1324, %v1314
      %v1326 = vpop.permute.xlu0 %1325
      %1327 = vset.pattern.permute.xlu0 0
      %1328 = vperm.xlu0 %1327, %v1315
      %v1329 = vpop.permute.xlu0 %1328
      %1330 = vset.pattern.permute.xlu0 0
      %1331 = vperm.xlu0 %1330, %v1316
      %v1332 = vpop.permute.xlu0 %1331
      %1333 = vset.pattern.permute.xlu0 0
      %1334 = vperm.xlu0 %1333, %v1317
      %v1335 = vpop.permute.xlu0 %1334
      %1336 = vset.pattern.permute.xlu0 0
      %1337 = vperm.xlu0 %1336, %v1318
      %v1338 = vpop.permute.xlu0 %1337
      %1339 = vset.pattern.permute.xlu0 0
      %1340 = vperm.xlu0 %1339, %v1319
      %v1341 = vpop.permute.xlu0 %1340
      %1342 = vset.pattern.permute.xlu0 0
      %1343 = vperm.xlu0 %1342, %v1320
      %v1344 = vpop.permute.xlu0 %1343
      %vm1345 = vcmp.eq.s32.totalorder %v935, %v1323
      %vm1346 = vcmp.eq.s32.totalorder %v936, %v1323
      %vm1347 = vcmp.eq.s32.totalorder %v935, %v1326
      %vm1348 = vcmp.eq.s32.totalorder %v936, %v1326
      %vm1349 = vcmp.eq.s32.totalorder %v935, %v1329
      %vm1350 = vcmp.eq.s32.totalorder %v936, %v1329
      %vm1351 = vcmp.eq.s32.totalorder %v935, %v1332
      %vm1352 = vcmp.eq.s32.totalorder %v936, %v1332
      %vm1353 = vcmp.eq.s32.totalorder %v935, %v1335
      %vm1354 = vcmp.eq.s32.totalorder %v936, %v1335
      %vm1355 = vcmp.eq.s32.totalorder %v935, %v1338
      %vm1356 = vcmp.eq.s32.totalorder %v936, %v1338
      %vm1357 = vcmp.eq.s32.totalorder %v935, %v1341
      %vm1358 = vcmp.eq.s32.totalorder %v936, %v1341
      %vm1359 = vcmp.eq.s32.totalorder %v935, %v1344
      %vm1360 = vcmp.eq.s32.totalorder %v936, %v1344
      %v1361 = vsel %vm1345, 1, 0
      %v1362 = vsel %vm1346, 1, 0
      %v1363 = vsel %vm1347, 1, 0
      %v1364 = vsel %vm1348, 1, 0
      %v1365 = vsel %vm1349, 1, 0
      %v1366 = vsel %vm1350, 1, 0
      %v1367 = vsel %vm1351, 1, 0
      %v1368 = vsel %vm1352, 1, 0
      %v1369 = vsel %vm1353, 1, 0
      %v1370 = vsel %vm1354, 1, 0
      %v1371 = vsel %vm1355, 1, 0
      %v1372 = vsel %vm1356, 1, 0
      %v1373 = vsel %vm1357, 1, 0
      %v1374 = vsel %vm1358, 1, 0
      %v1375 = vsel %vm1359, 1, 0
      %v1376 = vsel %vm1360, 1, 0
      %v1377 = vcvt.s32.f32 %v1361
      %v1378 = vcvt.s32.f32 %v1362
      %v1379 = vcvt.s32.f32 %v1363
      %v1380 = vcvt.s32.f32 %v1364
      %v1381 = vcvt.s32.f32 %v1365
      %v1382 = vcvt.s32.f32 %v1366
      %v1383 = vcvt.s32.f32 %v1367
      %v1384 = vcvt.s32.f32 %v1368
      %v1385 = vcvt.s32.f32 %v1369
      %v1386 = vcvt.s32.f32 %v1370
      %v1387 = vcvt.s32.f32 %v1371
      %v1388 = vcvt.s32.f32 %v1372
      %v1389 = vcvt.s32.f32 %v1373
      %v1390 = vcvt.s32.f32 %v1374
      %v1391 = vcvt.s32.f32 %v1375
      %v1392 = vcvt.s32.f32 %v1376
      %v1393 = vadd.f32 %v1217, %v1377
      %v1394 = vadd.f32 %v1218, %v1378
      %v1395 = vadd.f32 %v1219, %v1379
      %v1396 = vadd.f32 %v1220, %v1380
      %v1397 = vadd.f32 %v1221, %v1381
      %v1398 = vadd.f32 %v1222, %v1382
      %v1399 = vadd.f32 %v1223, %v1383
      %v1400 = vadd.f32 %v1224, %v1384
      %v1401 = vadd.f32 %v1225, %v1385
      %v1402 = vadd.f32 %v1226, %v1386
      %v1403 = vadd.f32 %v1227, %v1387
      %v1404 = vadd.f32 %v1228, %v1388
      %v1405 = vadd.f32 %v1229, %v1389
      %v1406 = vadd.f32 %v1230, %v1390
      %v1407 = vadd.f32 %v1231, %v1391
      %v1408 = vadd.f32 %v1232, %v1392
      %v1409 = vsub.s32 %v1236, %v932
      %v1410 = vsub.s32 %v1240, %v932
      %v1411 = vsub.s32 %v1244, %v932
      %v1412 = vsub.s32 %v1248, %v932
      %v1413 = vsub.s32 %v1252, %v932
      %v1414 = vsub.s32 %v1256, %v932
      %v1415 = vsub.s32 %v1260, %v932
      %v1416 = vsub.s32 %v1264, %v932
      %v1417 = vadd.s32 %v1409, 16
      %v1418 = vadd.s32 %v1410, 16
      %v1419 = vadd.s32 %v1411, 16
      %v1420 = vadd.s32 %v1412, 16
      %v1421 = vadd.s32 %v1413, 16
      %v1422 = vadd.s32 %v1414, 16
      %v1423 = vadd.s32 %v1415, 16
      %v1424 = vadd.s32 %v1416, 16
      %vm1425 = vcmp.gt.s32.totalorder %v1417, 0
      %v1426 = vsel %vm1425, %v1417, 0
      %vm1427 = vcmp.gt.s32.totalorder %v1418, 0
      %v1428 = vsel %vm1427, %v1418, 0
      %vm1429 = vcmp.gt.s32.totalorder %v1419, 0
      %v1430 = vsel %vm1429, %v1419, 0
      %vm1431 = vcmp.gt.s32.totalorder %v1420, 0
      %v1432 = vsel %vm1431, %v1420, 0
      %vm1433 = vcmp.gt.s32.totalorder %v1421, 0
      %v1434 = vsel %vm1433, %v1421, 0
      %vm1435 = vcmp.gt.s32.totalorder %v1422, 0
      %v1436 = vsel %vm1435, %v1422, 0
      %vm1437 = vcmp.gt.s32.totalorder %v1423, 0
      %v1438 = vsel %vm1437, %v1423, 0
      %vm1439 = vcmp.gt.s32.totalorder %v1424, 0
      %v1440 = vsel %vm1439, %v1424, 0
      %vm1441 = vcmp.lt.s32.totalorder %v1426, 32
      %v1442 = vsel %vm1441, %v1426, 32
      %vm1443 = vcmp.lt.s32.totalorder %v1428, 32
      %v1444 = vsel %vm1443, %v1428, 32
      %vm1445 = vcmp.lt.s32.totalorder %v1430, 32
      %v1446 = vsel %vm1445, %v1430, 32
      %vm1447 = vcmp.lt.s32.totalorder %v1432, 32
      %v1448 = vsel %vm1447, %v1432, 32
      %vm1449 = vcmp.lt.s32.totalorder %v1434, 32
      %v1450 = vsel %vm1449, %v1434, 32
      %vm1451 = vcmp.lt.s32.totalorder %v1436, 32
      %v1452 = vsel %vm1451, %v1436, 32
      %vm1453 = vcmp.lt.s32.totalorder %v1438, 32
      %v1454 = vsel %vm1453, %v1438, 32
      %vm1455 = vcmp.lt.s32.totalorder %v1440, 32
      %v1456 = vsel %vm1455, %v1440, 32
      %v1457 = vadd.s32 %v1442, 99
      %v1458 = vadd.s32 %v1444, 99
      %v1459 = vadd.s32 %v1446, 99
      %v1460 = vadd.s32 %v1448, 99
      %v1461 = vadd.s32 %v1450, 99
      %v1462 = vadd.s32 %v1452, 99
      %v1463 = vadd.s32 %v1454, 99
      %v1464 = vadd.s32 %v1456, 99
      %1465 = vset.pattern.permute.xlu0 0
      %1466 = vperm.xlu0 %1465, %v1457
      %v1467 = vpop.permute.xlu0 %1466
      %1468 = vset.pattern.permute.xlu0 0
      %1469 = vperm.xlu0 %1468, %v1458
      %v1470 = vpop.permute.xlu0 %1469
      %1471 = vset.pattern.permute.xlu0 0
      %1472 = vperm.xlu0 %1471, %v1459
      %v1473 = vpop.permute.xlu0 %1472
      %1474 = vset.pattern.permute.xlu0 0
      %1475 = vperm.xlu0 %1474, %v1460
      %v1476 = vpop.permute.xlu0 %1475
      %1477 = vset.pattern.permute.xlu0 0
      %1478 = vperm.xlu0 %1477, %v1461
      %v1479 = vpop.permute.xlu0 %1478
      %1480 = vset.pattern.permute.xlu0 0
      %1481 = vperm.xlu0 %1480, %v1462
      %v1482 = vpop.permute.xlu0 %1481
      %1483 = vset.pattern.permute.xlu0 0
      %1484 = vperm.xlu0 %1483, %v1463
      %v1485 = vpop.permute.xlu0 %1484
      %1486 = vset.pattern.permute.xlu0 0
      %1487 = vperm.xlu0 %1486, %v1464
      %v1488 = vpop.permute.xlu0 %1487
      %vm1489 = vcmp.eq.s32.totalorder %v935, %v1467
      %vm1490 = vcmp.eq.s32.totalorder %v936, %v1467
      %vm1491 = vcmp.eq.s32.totalorder %v935, %v1470
      %vm1492 = vcmp.eq.s32.totalorder %v936, %v1470
      %vm1493 = vcmp.eq.s32.totalorder %v935, %v1473
      %vm1494 = vcmp.eq.s32.totalorder %v936, %v1473
      %vm1495 = vcmp.eq.s32.totalorder %v935, %v1476
      %vm1496 = vcmp.eq.s32.totalorder %v936, %v1476
      %vm1497 = vcmp.eq.s32.totalorder %v935, %v1479
      %vm1498 = vcmp.eq.s32.totalorder %v936, %v1479
      %vm1499 = vcmp.eq.s32.totalorder %v935, %v1482
      %vm1500 = vcmp.eq.s32.totalorder %v936, %v1482
      %vm1501 = vcmp.eq.s32.totalorder %v935, %v1485
      %vm1502 = vcmp.eq.s32.totalorder %v936, %v1485
      %vm1503 = vcmp.eq.s32.totalorder %v935, %v1488
      %vm1504 = vcmp.eq.s32.totalorder %v936, %v1488
      %v1505 = vsel %vm1489, 1, 0
      %v1506 = vsel %vm1490, 1, 0
      %v1507 = vsel %vm1491, 1, 0
      %v1508 = vsel %vm1492, 1, 0
      %v1509 = vsel %vm1493, 1, 0
      %v1510 = vsel %vm1494, 1, 0
      %v1511 = vsel %vm1495, 1, 0
      %v1512 = vsel %vm1496, 1, 0
      %v1513 = vsel %vm1497, 1, 0
      %v1514 = vsel %vm1498, 1, 0
      %v1515 = vsel %vm1499, 1, 0
      %v1516 = vsel %vm1500, 1, 0
      %v1517 = vsel %vm1501, 1, 0
      %v1518 = vsel %vm1502, 1, 0
      %v1519 = vsel %vm1503, 1, 0
      %v1520 = vsel %vm1504, 1, 0
      %v1521 = vcvt.s32.f32 %v1505
      %v1522 = vcvt.s32.f32 %v1506
      %v1523 = vcvt.s32.f32 %v1507
      %v1524 = vcvt.s32.f32 %v1508
      %v1525 = vcvt.s32.f32 %v1509
      %v1526 = vcvt.s32.f32 %v1510
      %v1527 = vcvt.s32.f32 %v1511
      %v1528 = vcvt.s32.f32 %v1512
      %v1529 = vcvt.s32.f32 %v1513
      %v1530 = vcvt.s32.f32 %v1514
      %v1531 = vcvt.s32.f32 %v1515
      %v1532 = vcvt.s32.f32 %v1516
      %v1533 = vcvt.s32.f32 %v1517
      %v1534 = vcvt.s32.f32 %v1518
      %v1535 = vcvt.s32.f32 %v1519
      %v1536 = vcvt.s32.f32 %v1520
      %v1537 = vadd.f32 %v1393, %v1521
      %v1538 = vadd.f32 %v1394, %v1522
      %v1539 = vadd.f32 %v1395, %v1523
      %v1540 = vadd.f32 %v1396, %v1524
      %v1541 = vadd.f32 %v1397, %v1525
      %v1542 = vadd.f32 %v1398, %v1526
      %v1543 = vadd.f32 %v1399, %v1527
      %v1544 = vadd.f32 %v1400, %v1528
      %v1545 = vadd.f32 %v1401, %v1529
      %v1546 = vadd.f32 %v1402, %v1530
      %v1547 = vadd.f32 %v1403, %v1531
      %v1548 = vadd.f32 %v1404, %v1532
      %v1549 = vadd.f32 %v1405, %v1533
      %v1550 = vadd.f32 %v1406, %v1534
      %v1551 = vadd.f32 %v1407, %v1535
      %v1552 = vadd.f32 %v1408, %v1536
      %v1553 = vpack.c.bf16 %v1537, %v1537
      %v1554 = vpack.c.bf16 %v1538, %v1538
      %v1555 = vpack.c.bf16 %v1539, %v1539
      %v1556 = vpack.c.bf16 %v1540, %v1540
      %v1557 = vpack.c.bf16 %v1541, %v1541
      %v1558 = vpack.c.bf16 %v1542, %v1542
      %v1559 = vpack.c.bf16 %v1543, %v1543
      %v1560 = vpack.c.bf16 %v1544, %v1544
      %v1561 = vpack.c.bf16 %v1545, %v1545
      %v1562 = vpack.c.bf16 %v1546, %v1546
      %v1563 = vpack.c.bf16 %v1547, %v1547
      %v1564 = vpack.c.bf16 %v1548, %v1548
      %v1565 = vpack.c.bf16 %v1549, %v1549
      %v1566 = vpack.c.bf16 %v1550, %v1550
      %v1567 = vpack.c.bf16 %v1551, %v1551
      %v1568 = vpack.c.bf16 %v1552, %v1552
      %v1585 = vunpack.c.l.b16 %v1553
      %v1586 = vunpack.c.l.b16 %v1554
      %v1587 = vunpack.c.l.b16 %v1555
      %v1588 = vunpack.c.l.b16 %v1556
      %v1589 = vunpack.c.l.b16 %v1557
      %v1590 = vunpack.c.l.b16 %v1558
      %v1591 = vunpack.c.l.b16 %v1559
      %v1592 = vunpack.c.l.b16 %v1560
      %v1593 = vunpack.c.l.b16 %v1561
      %v1594 = vunpack.c.l.b16 %v1562
      %v1595 = vunpack.c.l.b16 %v1563
      %v1596 = vunpack.c.l.b16 %v1564
      %v1597 = vunpack.c.l.b16 %v1565
      %v1598 = vunpack.c.l.b16 %v1566
      %v1599 = vunpack.c.l.b16 %v1567
      %v1600 = vunpack.c.l.b16 %v1568
      %v1601 = vld [vmem:[%s11] sm:$0xf]
      %v1602 = vld [vmem:[%s11 + $0x4] sm:$0xf]
      %v1603 = vld [vmem:[%s11 + $0x8] sm:$0xf]
      %v1604 = vld [vmem:[%s11 + $0xc] sm:$0xf]
      %v1605 = vld [vmem:[%s11 + $0x10] sm:$0xf]
      %v1606 = vld [vmem:[%s11 + $0x14] sm:$0xf]
      %v1607 = vld [vmem:[%s11 + $0x18] sm:$0xf]
      %v1608 = vld [vmem:[%s11 + $0x1c] sm:$0xf]
      %v1609 = vld [vmem:[%s11 + $0x20] sm:$0xf]
      %v1610 = vld [vmem:[%s11 + $0x24] sm:$0xf]
      %v1611 = vld [vmem:[%s11 + $0x28] sm:$0xf]
      %v1612 = vld [vmem:[%s11 + $0x2c] sm:$0xf]
      %v1613 = vld [vmem:[%s11 + $0x30] sm:$0xf]
      %v1614 = vld [vmem:[%s11 + $0x34] sm:$0xf]
      %v1615 = vld [vmem:[%s11 + $0x38] sm:$0xf]
      %v1616 = vld [vmem:[%s11 + $0x3c] sm:$0xf]
      %v1617 = vld [vmem:[%s11 + $0x40] sm:$0x3]
      %v1619 = vlaneseq
      %v1620 = vshrl.u32 %v1619, 7
      %v1621 = vsub.s32 0, %v1620
      %v1622 = vrot.slane %v933, %v1621
      %v1624 = vpack.c.b16 %v1587, %v1585
      %v1625 = vpack.c.b16 %v1588, %v1586
      %v1626 = vpack.c.b16 %v1591, %v1589
      %v1627 = vpack.c.b16 %v1592, %v1590
      %v1628 = vpack.c.b16 %v1595, %v1593
      %v1629 = vpack.c.b16 %v1596, %v1594
      %v1630 = vpack.c.b16 %v1599, %v1597
      %v1631 = vpack.c.b16 %v1600, %v1598
      %v1653 = vunpack.c.l.b16 %v1601
      %v1654 = vunpack.c.l.b16 %v1602
      %v1655 = vunpack.c.l.b16 %v1603
      %v1656 = vunpack.c.l.b16 %v1604
      %v1657 = vunpack.c.l.b16 %v1605
      %v1658 = vunpack.c.l.b16 %v1606
      %v1659 = vunpack.c.l.b16 %v1607
      %v1660 = vunpack.c.l.b16 %v1608
      %v1661 = vunpack.c.l.b16 %v1609
      %v1662 = vunpack.c.l.b16 %v1610
      %v1663 = vunpack.c.l.b16 %v1611
      %v1664 = vunpack.c.l.b16 %v1612
      %v1665 = vunpack.c.l.b16 %v1613
      %v1666 = vunpack.c.l.b16 %v1614
      %v1667 = vunpack.c.l.b16 %v1615
      %v1668 = vunpack.c.l.b16 %v1616
      %v1669 = vunpack.c.l.b16 %v1617
      %v1670 = vpack.c.b16 %v1654, %v1653
      %v1671 = vpack.c.b16 %v1656, %v1655
      %v1672 = vpack.c.b16 %v1658, %v1657
      %v1673 = vpack.c.b16 %v1660, %v1659
      %v1674 = vpack.c.b16 %v1662, %v1661
      %v1675 = vpack.c.b16 %v1664, %v1663
      %v1676 = vpack.c.b16 %v1666, %v1665
      %v1677 = vpack.c.b16 %v1668, %v1667
      %v1678 = vpack.c.b16 %v1669, %v1669
      %vm1687 = vcmask 31744
      %v1689 = vsel %vm1687, %v1625, 0
      %v1692 = vsel %vm1687, %v1627, 0
      %v1695 = vsel %vm1687, %v1629, 0
      %v1698 = vsel %vm1687, %v1631, 0
      %vm1700 = vcmask 1041408
      %v1702 = vsel %vm1700, %v1678, 0
      %1704 = vmatprep.subr.bf16.mxu0 0
      %1705 = vmatpush1.bf16.msra.mxu0 %v1677
      %1706 = vmatprep.subr.bf16.mxu0 0
      %1707 = vmatpush1.bf16.msra.mxu0 %v1676
      %1708 = vmatprep.subr.bf16.mxu0 0
      %1709 = vmatpush1.bf16.msra.mxu0 %v1675
      %1710 = vmatprep.subr.bf16.mxu0 0
      %1711 = vmatpush1.bf16.msra.mxu0 %v1674
      %1712 = vmatprep.subr.bf16.mxu0 0
      %1713 = vmatpush1.bf16.msra.mxu0 %v1673
      %1714 = vmatprep.subr.bf16.mxu0 0
      %1715 = vmatpush1.bf16.msra.mxu0 %v1672
      %1716 = vmatprep.subr.bf16.mxu0 0
      %1717 = vmatpush1.bf16.msra.mxu0 %v1671
      %1718 = vmatprep.subr.bf16.mxu0 0
      %1719 = vmatpush1.bf16.msra.mxu0 %v1670
      %1720 = vmatprep.subr.bf16.mxu0 0
      %1721 = vmatpush2.bf16.msra.mxu0 0
      %1722 = vmatprep.subr.bf16.mxu0 0
      %1723 = vmatpush2.bf16.msra.mxu0 0
      %1724 = vmatprep.subr.bf16.mxu0 0
      %1725 = vmatpush2.bf16.msra.mxu0 0
      %1726 = vmatprep.subr.bf16.mxu0 0
      %1727 = vmatpush2.bf16.msra.mxu0 0
      %1728 = vmatprep.subr.bf16.mxu0 0
      %1729 = vmatpush2.bf16.msra.mxu0 0
      %1730 = vmatprep.subr.bf16.mxu0 0
      %1731 = vmatpush2.bf16.msra.mxu0 0
      %1732 = vmatprep.subr.bf16.mxu0 0
      %1733 = vmatpush2.bf16.msra.mxu0 0
      %1734 = vmatprep.subr.bf16.mxu0 0
      %1735 = vmatpush2.bf16.msra.mxu0 %v1702
      %1736 = vmatprep.mubr.bf16.mxu0 %v1689
      %1737 = vmatmul.mubr.bf16.gmra.mxu0 %v1624
      %v1738 = vpop.f32.mrf.mxu0
      %v1739 = vadd.f32 %v1622, %v1738
      %v1740 = vpop.f32.mrf.mxu0
      %v1741 = vpop.f32.mrf.mxu0
      %v1742 = vadd.f32 %v1622, %v1741
      %v1743 = vpop.f32.mrf.mxu0
      %1744 = vmatprep.mubr.bf16.mxu0 %v1692
      %1745 = vmatmul.mubr.bf16.gmra.mxu0 %v1626
      %v1746 = vpop.f32.mrf.mxu0
      %v1747 = vadd.f32 %v1622, %v1746
      %v1748 = vpop.f32.mrf.mxu0
      %v1749 = vpop.f32.mrf.mxu0
      %v1750 = vadd.f32 %v1622, %v1749
      %v1751 = vpop.f32.mrf.mxu0
      %1752 = vmatprep.mubr.bf16.mxu0 %v1695
      %1753 = vmatmul.mubr.bf16.gmra.mxu0 %v1628
      %v1754 = vpop.f32.mrf.mxu0
      %v1755 = vadd.f32 %v1622, %v1754
      %v1756 = vpop.f32.mrf.mxu0
      %v1757 = vpop.f32.mrf.mxu0
      %v1758 = vadd.f32 %v1622, %v1757
      %v1759 = vpop.f32.mrf.mxu0
      %1760 = vmatprep.mubr.bf16.mxu0 %v1698
      %1761 = vmatmul.mubr.bf16.gmra.mxu0 %v1630
      %v1762 = vpop.f32.mrf.mxu0
      %v1763 = vadd.f32 %v1622, %v1762
      %v1764 = vpop.f32.mrf.mxu0
      %v1765 = vpop.f32.mrf.mxu0
      %v1766 = vadd.f32 %v1622, %v1765
      %v1767 = vpop.f32.mrf.mxu0
      %1768 = vdwg.mxu0
      %v1769 = vmax.f32 %v1739, 0.0
      %v1770 = vmax.f32 %v1742, 0.0
      %v1771 = vmax.f32 %v1747, 0.0
      %v1772 = vmax.f32 %v1750, 0.0
      %v1773 = vmax.f32 %v1755, 0.0
      %v1774 = vmax.f32 %v1758, 0.0
      %v1775 = vmax.f32 %v1763, 0.0
      %v1776 = vmax.f32 %v1766, 0.0
      %v1777 = vpack.c.bf16 %v1770, %v1769
      %v1778 = vpack.c.bf16 %v1772, %v1771
      %v1779 = vpack.c.bf16 %v1774, %v1773
      %v1780 = vpack.c.bf16 %v1776, %v1775
      %v1785 = vunpack.c.l.b16 %v1777
      %v1786 = vunpack.c.h.b16 %v1777
      %v1787 = vunpack.c.l.b16 %v1778
      %v1788 = vunpack.c.h.b16 %v1778
      %v1789 = vunpack.c.l.b16 %v1779
      %v1790 = vunpack.c.h.b16 %v1779
      %v1791 = vunpack.c.l.b16 %v1780
      %v1792 = vunpack.c.h.b16 %v1780
      %v1793 = vpack.c.b16 %v1785, %v1785
      %v1794 = vpack.c.b16 %v1786, %v1786
      %v1795 = vpack.c.b16 %v1787, %v1787
      %v1796 = vpack.c.b16 %v1788, %v1788
      %v1797 = vpack.c.b16 %v1789, %v1789
      %v1798 = vpack.c.b16 %v1790, %v1790
      %v1799 = vpack.c.b16 %v1791, %v1791
      %v1800 = vpack.c.b16 %v1792, %v1792
      %vm1809 = vcmask 257024
      %1810 = vst.msk [vmem:[#allocation5] sm:$0xf] %vm1809, %v1793
      %1811 = vst.msk [vmem:[#allocation5 + $0x4] sm:$0xf] %vm1809, %v1794
      %1812 = vst.msk [vmem:[#allocation5 + $0x8] sm:$0xf] %vm1809, %v1795
      %1813 = vst.msk [vmem:[#allocation5 + $0xc] sm:$0xf] %vm1809, %v1796
      %1814 = vst.msk [vmem:[#allocation5 + $0x10] sm:$0xf] %vm1809, %v1797
      %1815 = vst.msk [vmem:[#allocation5 + $0x14] sm:$0xf] %vm1809, %v1798
      %1816 = vst.msk [vmem:[#allocation5 + $0x18] sm:$0xf] %vm1809, %v1799
      %1817 = vst.msk [vmem:[#allocation5 + $0x1c] sm:$0xf] %vm1809, %v1800
      %v1818 = vld [vmem:[#allocation5] sm:$0xf]
      %v1819 = vld [vmem:[#allocation5 + $0x4] sm:$0xf]
      %v1820 = vld [vmem:[#allocation5 + $0x8] sm:$0xf]
      %v1821 = vld [vmem:[#allocation5 + $0xc] sm:$0xf]
      %v1822 = vld [vmem:[#allocation5 + $0x10] sm:$0xf]
      %v1823 = vld [vmem:[#allocation5 + $0x14] sm:$0xf]
      %v1824 = vld [vmem:[#allocation5 + $0x18] sm:$0xf]
      %v1825 = vld [vmem:[#allocation5 + $0x1c] sm:$0xf]
      %v1826 = vld [vmem:[%s809] sm:$0x1]
      %v1827 = vld [vmem:[%s809 + $0x1] sm:$0x1]
      %v1828 = vld [vmem:[%s809 + $0x2] sm:$0x1]
      %v1829 = vld [vmem:[%s809 + $0x3] sm:$0x1]
      %v1830 = vld [vmem:[%s809 + $0x4] sm:$0x1]
      %v1831 = vld [vmem:[%s809 + $0x5] sm:$0x1]
      %v1832 = vld [vmem:[%s809 + $0x6] sm:$0x1]
      %v1833 = vld [vmem:[%s809 + $0x7] sm:$0x1]
      %v1834 = vld [vmem:[%s818] sm:$0x1]
      %v1835 = vld [vmem:[%s818 + $0x1] sm:$0x1]
      %v1836 = vld [vmem:[%s818 + $0x2] sm:$0x1]
      %v1837 = vld [vmem:[%s818 + $0x3] sm:$0x1]
      %v1838 = vld [vmem:[%s818 + $0x4] sm:$0x1]
      %v1839 = vld [vmem:[%s818 + $0x5] sm:$0x1]
      %v1840 = vld [vmem:[%s818 + $0x6] sm:$0x1]
      %v1841 = vld [vmem:[%s818 + $0x7] sm:$0x1]
      %v1842 = vld [vmem:[%s836] sm:$0xf]
      %vm1843 = vcmask 261120
      %v1845 = vsel %vm1843, %v1834, 0
      %v1848 = vsel %vm1843, %v1818, 0
      %1850 = vmatprep.subr.bf16.mxu0 0
      %1851 = vmatpush1.bf16.xpose.msra.mxu0 0
      %1852 = vmatprep.subr.bf16.mxu0 0
      %1853 = vmatpush1.bf16.xpose.msra.mxu0 0
      %1854 = vmatprep.subr.bf16.mxu0 0
      %1855 = vmatpush1.bf16.xpose.msra.mxu0 0
      %1856 = vmatprep.subr.bf16.mxu0 0
      %1857 = vmatpush1.bf16.xpose.msra.mxu0 0
      %1858 = vmatprep.subr.bf16.mxu0 0
      %1859 = vmatpush1.bf16.xpose.msra.mxu0 0
      %1860 = vmatprep.subr.bf16.mxu0 0
      %1861 = vmatpush1.bf16.xpose.msra.mxu0 0
      %1862 = vmatprep.subr.bf16.mxu0 0
      %1863 = vmatpush1.bf16.xpose.msra.mxu0 0
      %1864 = vmatprep.subr.bf16.mxu0 0
      %1865 = vmatpush1.bf16.xpose.msra.mxu0 %v1848
      %1866 = vmatprep.subr.bf16.mxu0 0
      %1867 = vmatpush2.bf16.xpose.msra.mxu0 0
      %1868 = vmatprep.subr.bf16.mxu0 0
      %1869 = vmatpush2.bf16.xpose.msra.mxu0 0
      %1870 = vmatprep.subr.bf16.mxu0 0
      %1871 = vmatpush2.bf16.xpose.msra.mxu0 0
      %1872 = vmatprep.subr.bf16.mxu0 0
      %1873 = vmatpush2.bf16.xpose.msra.mxu0 0
      %1874 = vmatprep.subr.bf16.mxu0 0
      %1875 = vmatpush2.bf16.xpose.msra.mxu0 0
      %1876 = vmatprep.subr.bf16.mxu0 0
      %1877 = vmatpush2.bf16.xpose.msra.mxu0 0
      %1878 = vmatprep.subr.bf16.mxu0 0
      %1879 = vmatpush2.bf16.xpose.msra.mxu0 0
      %1880 = vmatprep.subr.bf16.mxu0 0
      %1881 = vmatpush2.bf16.xpose.msra.mxu0 0
      %1882 = vmatprep.mubr.bf16.mxu0 0
      %1883 = vmatmul.mubr.bf16.gmra.mxu0 %v1845
      %v1884 = vpop.f32.mrf.mxu0
      %v1885 = vadd.f32 0.0, %v1884
      %v1886 = vpop.f32.mrf.mxu0
      %v1887 = vpop.f32.mrf.mxu0
      %v1888 = vpop.f32.mrf.mxu0
      %1889 = vdwg.mxu0
      %v1891 = vsel %vm1843, %v1835, 0
      %v1894 = vsel %vm1843, %v1819, 0
      %1896 = vmatprep.subr.bf16.mxu0 0
      %1897 = vmatpush1.bf16.xpose.msra.mxu0 0
      %1898 = vmatprep.subr.bf16.mxu0 0
      %1899 = vmatpush1.bf16.xpose.msra.mxu0 0
      %1900 = vmatprep.subr.bf16.mxu0 0
      %1901 = vmatpush1.bf16.xpose.msra.mxu0 0
      %1902 = vmatprep.subr.bf16.mxu0 0
      %1903 = vmatpush1.bf16.xpose.msra.mxu0 0
      %1904 = vmatprep.subr.bf16.mxu0 0
      %1905 = vmatpush1.bf16.xpose.msra.mxu0 0
      %1906 = vmatprep.subr.bf16.mxu0 0
      %1907 = vmatpush1.bf16.xpose.msra.mxu0 0
      %1908 = vmatprep.subr.bf16.mxu0 0
      %1909 = vmatpush1.bf16.xpose.msra.mxu0 0
      %1910 = vmatprep.subr.bf16.mxu0 0
      %1911 = vmatpush1.bf16.xpose.msra.mxu0 %v1894
      %1912 = vmatprep.subr.bf16.mxu0 0
      %1913 = vmatpush2.bf16.xpose.msra.mxu0 0
      %1914 = vmatprep.subr.bf16.mxu0 0
      %1915 = vmatpush2.bf16.xpose.msra.mxu0 0
      %1916 = vmatprep.subr.bf16.mxu0 0
      %1917 = vmatpush2.bf16.xpose.msra.mxu0 0
      %1918 = vmatprep.subr.bf16.mxu0 0
      %1919 = vmatpush2.bf16.xpose.msra.mxu0 0
      %1920 = vmatprep.subr.bf16.mxu0 0
      %1921 = vmatpush2.bf16.xpose.msra.mxu0 0
      %1922 = vmatprep.subr.bf16.mxu0 0
      %1923 = vmatpush2.bf16.xpose.msra.mxu0 0
      %1924 = vmatprep.subr.bf16.mxu0 0
      %1925 = vmatpush2.bf16.xpose.msra.mxu0 0
      %1926 = vmatprep.subr.bf16.mxu0 0
      %1927 = vmatpush2.bf16.xpose.msra.mxu0 0
      %1928 = vmatprep.mubr.bf16.mxu0 0
      %1929 = vmatmul.mubr.bf16.gmra.mxu0 %v1891
      %v1930 = vpop.f32.mrf.mxu0
      %v1931 = vadd.f32 0.0, %v1930
      %v1932 = vpop.f32.mrf.mxu0
      %v1933 = vpop.f32.mrf.mxu0
      %v1934 = vpop.f32.mrf.mxu0
      %1935 = vdwg.mxu0
      %v1937 = vsel %vm1843, %v1836, 0
      %v1940 = vsel %vm1843, %v1820, 0
      %1942 = vmatprep.subr.bf16.mxu0 0
      %1943 = vmatpush1.bf16.xpose.msra.mxu0 0
      %1944 = vmatprep.subr.bf16.mxu0 0
      %1945 = vmatpush1.bf16.xpose.msra.mxu0 0
      %1946 = vmatprep.subr.bf16.mxu0 0
      %1947 = vmatpush1.bf16.xpose.msra.mxu0 0
      %1948 = vmatprep.subr.bf16.mxu0 0
      %1949 = vmatpush1.bf16.xpose.msra.mxu0 0
      %1950 = vmatprep.subr.bf16.mxu0 0
      %1951 = vmatpush1.bf16.xpose.msra.mxu0 0
      %1952 = vmatprep.subr.bf16.mxu0 0
      %1953 = vmatpush1.bf16.xpose.msra.mxu0 0
      %1954 = vmatprep.subr.bf16.mxu0 0
      %1955 = vmatpush1.bf16.xpose.msra.mxu0 0
      %1956 = vmatprep.subr.bf16.mxu0 0
      %1957 = vmatpush1.bf16.xpose.msra.mxu0 %v1940
      %1958 = vmatprep.subr.bf16.mxu0 0
      %1959 = vmatpush2.bf16.xpose.msra.mxu0 0
      %1960 = vmatprep.subr.bf16.mxu0 0
      %1961 = vmatpush2.bf16.xpose.msra.mxu0 0
      %1962 = vmatprep.subr.bf16.mxu0 0
      %1963 = vmatpush2.bf16.xpose.msra.mxu0 0
      %1964 = vmatprep.subr.bf16.mxu0 0
      %1965 = vmatpush2.bf16.xpose.msra.mxu0 0
      %1966 = vmatprep.subr.bf16.mxu0 0
      %1967 = vmatpush2.bf16.xpose.msra.mxu0 0
      %1968 = vmatprep.subr.bf16.mxu0 0
      %1969 = vmatpush2.bf16.xpose.msra.mxu0 0
      %1970 = vmatprep.subr.bf16.mxu0 0
      %1971 = vmatpush2.bf16.xpose.msra.mxu0 0
      %1972 = vmatprep.subr.bf16.mxu0 0
      %1973 = vmatpush2.bf16.xpose.msra.mxu0 0
      %1974 = vmatprep.mubr.bf16.mxu0 0
      %1975 = vmatmul.mubr.bf16.gmra.mxu0 %v1937
      %v1976 = vpop.f32.mrf.mxu0
      %v1977 = vadd.f32 0.0, %v1976
      %v1978 = vpop.f32.mrf.mxu0
      %v1979 = vpop.f32.mrf.mxu0
      %v1980 = vpop.f32.mrf.mxu0
      %1981 = vdwg.mxu0
      %v1983 = vsel %vm1843, %v1837, 0
      %v1986 = vsel %vm1843, %v1821, 0
      %1988 = vmatprep.subr.bf16.mxu0 0
      %1989 = vmatpush1.bf16.xpose.msra.mxu0 0
      %1990 = vmatprep.subr.bf16.mxu0 0
      %1991 = vmatpush1.bf16.xpose.msra.mxu0 0
      %1992 = vmatprep.subr.bf16.mxu0 0
      %1993 = vmatpush1.bf16.xpose.msra.mxu0 0
      %1994 = vmatprep.subr.bf16.mxu0 0
      %1995 = vmatpush1.bf16.xpose.msra.mxu0 0
      %1996 = vmatprep.subr.bf16.mxu0 0
      %1997 = vmatpush1.bf16.xpose.msra.mxu0 0
      %1998 = vmatprep.subr.bf16.mxu0 0
      %1999 = vmatpush1.bf16.xpose.msra.mxu0 0
      %2000 = vmatprep.subr.bf16.mxu0 0
      %2001 = vmatpush1.bf16.xpose.msra.mxu0 0
      %2002 = vmatprep.subr.bf16.mxu0 0
      %2003 = vmatpush1.bf16.xpose.msra.mxu0 %v1986
      %2004 = vmatprep.subr.bf16.mxu0 0
      %2005 = vmatpush2.bf16.xpose.msra.mxu0 0
      %2006 = vmatprep.subr.bf16.mxu0 0
      %2007 = vmatpush2.bf16.xpose.msra.mxu0 0
      %2008 = vmatprep.subr.bf16.mxu0 0
      %2009 = vmatpush2.bf16.xpose.msra.mxu0 0
      %2010 = vmatprep.subr.bf16.mxu0 0
      %2011 = vmatpush2.bf16.xpose.msra.mxu0 0
      %2012 = vmatprep.subr.bf16.mxu0 0
      %2013 = vmatpush2.bf16.xpose.msra.mxu0 0
      %2014 = vmatprep.subr.bf16.mxu0 0
      %2015 = vmatpush2.bf16.xpose.msra.mxu0 0
      %2016 = vmatprep.subr.bf16.mxu0 0
      %2017 = vmatpush2.bf16.xpose.msra.mxu0 0
      %2018 = vmatprep.subr.bf16.mxu0 0
      %2019 = vmatpush2.bf16.xpose.msra.mxu0 0
      %2020 = vmatprep.mubr.bf16.mxu0 0
      %2021 = vmatmul.mubr.bf16.gmra.mxu0 %v1983
      %v2022 = vpop.f32.mrf.mxu0
      %v2023 = vadd.f32 0.0, %v2022
      %v2024 = vpop.f32.mrf.mxu0
      %v2025 = vpop.f32.mrf.mxu0
      %v2026 = vpop.f32.mrf.mxu0
      %2027 = vdwg.mxu0
      %v2029 = vsel %vm1843, %v1838, 0
      %v2032 = vsel %vm1843, %v1822, 0
      %2034 = vmatprep.subr.bf16.mxu0 0
      %2035 = vmatpush1.bf16.xpose.msra.mxu0 0
      %2036 = vmatprep.subr.bf16.mxu0 0
      %2037 = vmatpush1.bf16.xpose.msra.mxu0 0
      %2038 = vmatprep.subr.bf16.mxu0 0
      %2039 = vmatpush1.bf16.xpose.msra.mxu0 0
      %2040 = vmatprep.subr.bf16.mxu0 0
      %2041 = vmatpush1.bf16.xpose.msra.mxu0 0
      %2042 = vmatprep.subr.bf16.mxu0 0
      %2043 = vmatpush1.bf16.xpose.msra.mxu0 0
      %2044 = vmatprep.subr.bf16.mxu0 0
      %2045 = vmatpush1.bf16.xpose.msra.mxu0 0
      %2046 = vmatprep.subr.bf16.mxu0 0
      %2047 = vmatpush1.bf16.xpose.msra.mxu0 0
      %2048 = vmatprep.subr.bf16.mxu0 0
      %2049 = vmatpush1.bf16.xpose.msra.mxu0 %v2032
      %2050 = vmatprep.subr.bf16.mxu0 0
      %2051 = vmatpush2.bf16.xpose.msra.mxu0 0
      %2052 = vmatprep.subr.bf16.mxu0 0
      %2053 = vmatpush2.bf16.xpose.msra.mxu0 0
      %2054 = vmatprep.subr.bf16.mxu0 0
      %2055 = vmatpush2.bf16.xpose.msra.mxu0 0
      %2056 = vmatprep.subr.bf16.mxu0 0
      %2057 = vmatpush2.bf16.xpose.msra.mxu0 0
      %2058 = vmatprep.subr.bf16.mxu0 0
      %2059 = vmatpush2.bf16.xpose.msra.mxu0 0
      %2060 = vmatprep.subr.bf16.mxu0 0
      %2061 = vmatpush2.bf16.xpose.msra.mxu0 0
      %2062 = vmatprep.subr.bf16.mxu0 0
      %2063 = vmatpush2.bf16.xpose.msra.mxu0 0
      %2064 = vmatprep.subr.bf16.mxu0 0
      %2065 = vmatpush2.bf16.xpose.msra.mxu0 0
      %2066 = vmatprep.mubr.bf16.mxu0 0
      %2067 = vmatmul.mubr.bf16.gmra.mxu0 %v2029
      %v2068 = vpop.f32.mrf.mxu0
      %v2069 = vadd.f32 0.0, %v2068
      %v2070 = vpop.f32.mrf.mxu0
      %v2071 = vpop.f32.mrf.mxu0
      %v2072 = vpop.f32.mrf.mxu0
      %2073 = vdwg.mxu0
      %v2075 = vsel %vm1843, %v1839, 0
      %v2078 = vsel %vm1843, %v1823, 0
      %2080 = vmatprep.subr.bf16.mxu0 0
      %2081 = vmatpush1.bf16.xpose.msra.mxu0 0
      %2082 = vmatprep.subr.bf16.mxu0 0
      %2083 = vmatpush1.bf16.xpose.msra.mxu0 0
      %2084 = vmatprep.subr.bf16.mxu0 0
      %2085 = vmatpush1.bf16.xpose.msra.mxu0 0
      %2086 = vmatprep.subr.bf16.mxu0 0
      %2087 = vmatpush1.bf16.xpose.msra.mxu0 0
      %2088 = vmatprep.subr.bf16.mxu0 0
      %2089 = vmatpush1.bf16.xpose.msra.mxu0 0
      %2090 = vmatprep.subr.bf16.mxu0 0
      %2091 = vmatpush1.bf16.xpose.msra.mxu0 0
      %2092 = vmatprep.subr.bf16.mxu0 0
      %2093 = vmatpush1.bf16.xpose.msra.mxu0 0
      %2094 = vmatprep.subr.bf16.mxu0 0
      %2095 = vmatpush1.bf16.xpose.msra.mxu0 %v2078
      %2096 = vmatprep.subr.bf16.mxu0 0
      %2097 = vmatpush2.bf16.xpose.msra.mxu0 0
      %2098 = vmatprep.subr.bf16.mxu0 0
      %2099 = vmatpush2.bf16.xpose.msra.mxu0 0
      %2100 = vmatprep.subr.bf16.mxu0 0
      %2101 = vmatpush2.bf16.xpose.msra.mxu0 0
      %2102 = vmatprep.subr.bf16.mxu0 0
      %2103 = vmatpush2.bf16.xpose.msra.mxu0 0
      %2104 = vmatprep.subr.bf16.mxu0 0
      %2105 = vmatpush2.bf16.xpose.msra.mxu0 0
      %2106 = vmatprep.subr.bf16.mxu0 0
      %2107 = vmatpush2.bf16.xpose.msra.mxu0 0
      %2108 = vmatprep.subr.bf16.mxu0 0
      %2109 = vmatpush2.bf16.xpose.msra.mxu0 0
      %2110 = vmatprep.subr.bf16.mxu0 0
      %2111 = vmatpush2.bf16.xpose.msra.mxu0 0
      %2112 = vmatprep.mubr.bf16.mxu0 0
      %2113 = vmatmul.mubr.bf16.gmra.mxu0 %v2075
      %v2114 = vpop.f32.mrf.mxu0
      %v2115 = vadd.f32 0.0, %v2114
      %v2116 = vpop.f32.mrf.mxu0
      %v2117 = vpop.f32.mrf.mxu0
      %v2118 = vpop.f32.mrf.mxu0
      %2119 = vdwg.mxu0
      %v2121 = vsel %vm1843, %v1840, 0
      %v2124 = vsel %vm1843, %v1824, 0
      %2126 = vmatprep.subr.bf16.mxu0 0
      %2127 = vmatpush1.bf16.xpose.msra.mxu0 0
      %2128 = vmatprep.subr.bf16.mxu0 0
      %2129 = vmatpush1.bf16.xpose.msra.mxu0 0
      %2130 = vmatprep.subr.bf16.mxu0 0
      %2131 = vmatpush1.bf16.xpose.msra.mxu0 0
      %2132 = vmatprep.subr.bf16.mxu0 0
      %2133 = vmatpush1.bf16.xpose.msra.mxu0 0
      %2134 = vmatprep.subr.bf16.mxu0 0
      %2135 = vmatpush1.bf16.xpose.msra.mxu0 0
      %2136 = vmatprep.subr.bf16.mxu0 0
      %2137 = vmatpush1.bf16.xpose.msra.mxu0 0
      %2138 = vmatprep.subr.bf16.mxu0 0
      %2139 = vmatpush1.bf16.xpose.msra.mxu0 0
      %2140 = vmatprep.subr.bf16.mxu0 0
      %2141 = vmatpush1.bf16.xpose.msra.mxu0 %v2124
      %2142 = vmatprep.subr.bf16.mxu0 0
      %2143 = vmatpush2.bf16.xpose.msra.mxu0 0
      %2144 = vmatprep.subr.bf16.mxu0 0
      %2145 = vmatpush2.bf16.xpose.msra.mxu0 0
      %2146 = vmatprep.subr.bf16.mxu0 0
      %2147 = vmatpush2.bf16.xpose.msra.mxu0 0
      %2148 = vmatprep.subr.bf16.mxu0 0
      %2149 = vmatpush2.bf16.xpose.msra.mxu0 0
      %2150 = vmatprep.subr.bf16.mxu0 0
      %2151 = vmatpush2.bf16.xpose.msra.mxu0 0
      %2152 = vmatprep.subr.bf16.mxu0 0
      %2153 = vmatpush2.bf16.xpose.msra.mxu0 0
      %2154 = vmatprep.subr.bf16.mxu0 0
      %2155 = vmatpush2.bf16.xpose.msra.mxu0 0
      %2156 = vmatprep.subr.bf16.mxu0 0
      %2157 = vmatpush2.bf16.xpose.msra.mxu0 0
      %2158 = vmatprep.mubr.bf16.mxu0 0
      %2159 = vmatmul.mubr.bf16.gmra.mxu0 %v2121
      %v2160 = vpop.f32.mrf.mxu0
      %v2161 = vadd.f32 0.0, %v2160
      %v2162 = vpop.f32.mrf.mxu0
      %v2163 = vpop.f32.mrf.mxu0
      %v2164 = vpop.f32.mrf.mxu0
      %2165 = vdwg.mxu0
      %v2167 = vsel %vm1843, %v1841, 0
      %v2170 = vsel %vm1843, %v1825, 0
      %2172 = vmatprep.subr.bf16.mxu0 0
      %2173 = vmatpush1.bf16.xpose.msra.mxu0 0
      %2174 = vmatprep.subr.bf16.mxu0 0
      %2175 = vmatpush1.bf16.xpose.msra.mxu0 0
      %2176 = vmatprep.subr.bf16.mxu0 0
      %2177 = vmatpush1.bf16.xpose.msra.mxu0 0
      %2178 = vmatprep.subr.bf16.mxu0 0
      %2179 = vmatpush1.bf16.xpose.msra.mxu0 0
      %2180 = vmatprep.subr.bf16.mxu0 0
      %2181 = vmatpush1.bf16.xpose.msra.mxu0 0
      %2182 = vmatprep.subr.bf16.mxu0 0
      %2183 = vmatpush1.bf16.xpose.msra.mxu0 0
      %2184 = vmatprep.subr.bf16.mxu0 0
      %2185 = vmatpush1.bf16.xpose.msra.mxu0 0
      %2186 = vmatprep.subr.bf16.mxu0 0
      %2187 = vmatpush1.bf16.xpose.msra.mxu0 %v2170
      %2188 = vmatprep.subr.bf16.mxu0 0
      %2189 = vmatpush2.bf16.xpose.msra.mxu0 0
      %2190 = vmatprep.subr.bf16.mxu0 0
      %2191 = vmatpush2.bf16.xpose.msra.mxu0 0
      %2192 = vmatprep.subr.bf16.mxu0 0
      %2193 = vmatpush2.bf16.xpose.msra.mxu0 0
      %2194 = vmatprep.subr.bf16.mxu0 0
      %2195 = vmatpush2.bf16.xpose.msra.mxu0 0
      %2196 = vmatprep.subr.bf16.mxu0 0
      %2197 = vmatpush2.bf16.xpose.msra.mxu0 0
      %2198 = vmatprep.subr.bf16.mxu0 0
      %2199 = vmatpush2.bf16.xpose.msra.mxu0 0
      %2200 = vmatprep.subr.bf16.mxu0 0
      %2201 = vmatpush2.bf16.xpose.msra.mxu0 0
      %2202 = vmatprep.subr.bf16.mxu0 0
      %2203 = vmatpush2.bf16.xpose.msra.mxu0 0
      %2204 = vmatprep.mubr.bf16.mxu0 0
      %2205 = vmatmul.mubr.bf16.gmra.mxu0 %v2167
      %v2206 = vpop.f32.mrf.mxu0
      %v2207 = vadd.f32 0.0, %v2206
      %v2208 = vpop.f32.mrf.mxu0
      %v2209 = vpop.f32.mrf.mxu0
      %v2210 = vpop.f32.mrf.mxu0
      %2211 = vdwg.mxu0
      %v2213 = vsel %vm1843, %v1826, 0
      %v2216 = vsel %vm1843, %v1842, 0
      %2218 = vmatprep.subr.bf16.mxu0 0
      %2219 = vmatpush1.bf16.xpose.msra.mxu0 0
      %2220 = vmatprep.subr.bf16.mxu0 0
      %2221 = vmatpush1.bf16.xpose.msra.mxu0 0
      %2222 = vmatprep.subr.bf16.mxu0 0
      %2223 = vmatpush1.bf16.xpose.msra.mxu0 0
      %2224 = vmatprep.subr.bf16.mxu0 0
      %2225 = vmatpush1.bf16.xpose.msra.mxu0 0
      %2226 = vmatprep.subr.bf16.mxu0 0
      %2227 = vmatpush1.bf16.xpose.msra.mxu0 0
      %2228 = vmatprep.subr.bf16.mxu0 0
      %2229 = vmatpush1.bf16.xpose.msra.mxu0 0
      %2230 = vmatprep.subr.bf16.mxu0 0
      %2231 = vmatpush1.bf16.xpose.msra.mxu0 0
      %2232 = vmatprep.subr.bf16.mxu0 0
      %2233 = vmatpush1.bf16.xpose.msra.mxu0 %v2216
      %2234 = vmatprep.subr.bf16.mxu0 0
      %2235 = vmatpush2.bf16.xpose.msra.mxu0 0
      %2236 = vmatprep.subr.bf16.mxu0 0
      %2237 = vmatpush2.bf16.xpose.msra.mxu0 0
      %2238 = vmatprep.subr.bf16.mxu0 0
      %2239 = vmatpush2.bf16.xpose.msra.mxu0 0
      %2240 = vmatprep.subr.bf16.mxu0 0
      %2241 = vmatpush2.bf16.xpose.msra.mxu0 0
      %2242 = vmatprep.subr.bf16.mxu0 0
      %2243 = vmatpush2.bf16.xpose.msra.mxu0 0
      %2244 = vmatprep.subr.bf16.mxu0 0
      %2245 = vmatpush2.bf16.xpose.msra.mxu0 0
      %2246 = vmatprep.subr.bf16.mxu0 0
      %2247 = vmatpush2.bf16.xpose.msra.mxu0 0
      %2248 = vmatprep.subr.bf16.mxu0 0
      %2249 = vmatpush2.bf16.xpose.msra.mxu0 0
      %2250 = vmatprep.mubr.bf16.mxu0 0
      %2251 = vmatmul.mubr.bf16.gmra.mxu0 %v2213
      %v2252 = vpop.f32.mrf.mxu0
      %v2253 = vadd.f32 %v1885, %v2252
      %v2254 = vpop.f32.mrf.mxu0
      %v2255 = vpop.f32.mrf.mxu0
      %v2256 = vpop.f32.mrf.mxu0
      %2257 = vdwg.mxu0
      %v2259 = vsel %vm1843, %v1827, 0
      %2261 = vmatprep.subr.bf16.mxu0 0
      %2262 = vmatpush1.bf16.xpose.msra.mxu0 0
      %2263 = vmatprep.subr.bf16.mxu0 0
      %2264 = vmatpush1.bf16.xpose.msra.mxu0 0
      %2265 = vmatprep.subr.bf16.mxu0 0
      %2266 = vmatpush1.bf16.xpose.msra.mxu0 0
      %2267 = vmatprep.subr.bf16.mxu0 0
      %2268 = vmatpush1.bf16.xpose.msra.mxu0 0
      %2269 = vmatprep.subr.bf16.mxu0 0
      %2270 = vmatpush1.bf16.xpose.msra.mxu0 0
      %2271 = vmatprep.subr.bf16.mxu0 0
      %2272 = vmatpush1.bf16.xpose.msra.mxu0 0
      %2273 = vmatprep.subr.bf16.mxu0 0
      %2274 = vmatpush1.bf16.xpose.msra.mxu0 0
      %2275 = vmatprep.subr.bf16.mxu0 0
      %2276 = vmatpush1.bf16.xpose.msra.mxu0 %v2216
      %2277 = vmatprep.subr.bf16.mxu0 0
      %2278 = vmatpush2.bf16.xpose.msra.mxu0 0
      %2279 = vmatprep.subr.bf16.mxu0 0
      %2280 = vmatpush2.bf16.xpose.msra.mxu0 0
      %2281 = vmatprep.subr.bf16.mxu0 0
      %2282 = vmatpush2.bf16.xpose.msra.mxu0 0
      %2283 = vmatprep.subr.bf16.mxu0 0
      %2284 = vmatpush2.bf16.xpose.msra.mxu0 0
      %2285 = vmatprep.subr.bf16.mxu0 0
      %2286 = vmatpush2.bf16.xpose.msra.mxu0 0
      %2287 = vmatprep.subr.bf16.mxu0 0
      %2288 = vmatpush2.bf16.xpose.msra.mxu0 0
      %2289 = vmatprep.subr.bf16.mxu0 0
      %2290 = vmatpush2.bf16.xpose.msra.mxu0 0
      %2291 = vmatprep.subr.bf16.mxu0 0
      %2292 = vmatpush2.bf16.xpose.msra.mxu0 0
      %2293 = vmatprep.mubr.bf16.mxu0 0
      %2294 = vmatmul.mubr.bf16.gmra.mxu0 %v2259
      %v2295 = vpop.f32.mrf.mxu0
      %v2296 = vadd.f32 %v1931, %v2295
      %v2297 = vpop.f32.mrf.mxu0
      %v2298 = vpop.f32.mrf.mxu0
      %v2299 = vpop.f32.mrf.mxu0
      %2300 = vdwg.mxu0
      %v2302 = vsel %vm1843, %v1828, 0
      %2304 = vmatprep.subr.bf16.mxu0 0
      %2305 = vmatpush1.bf16.xpose.msra.mxu0 0
      %2306 = vmatprep.subr.bf16.mxu0 0
      %2307 = vmatpush1.bf16.xpose.msra.mxu0 0
      %2308 = vmatprep.subr.bf16.mxu0 0
      %2309 = vmatpush1.bf16.xpose.msra.mxu0 0
      %2310 = vmatprep.subr.bf16.mxu0 0
      %2311 = vmatpush1.bf16.xpose.msra.mxu0 0
      %2312 = vmatprep.subr.bf16.mxu0 0
      %2313 = vmatpush1.bf16.xpose.msra.mxu0 0
      %2314 = vmatprep.subr.bf16.mxu0 0
      %2315 = vmatpush1.bf16.xpose.msra.mxu0 0
      %2316 = vmatprep.subr.bf16.mxu0 0
      %2317 = vmatpush1.bf16.xpose.msra.mxu0 0
      %2318 = vmatprep.subr.bf16.mxu0 0
      %2319 = vmatpush1.bf16.xpose.msra.mxu0 %v2216
      %2320 = vmatprep.subr.bf16.mxu0 0
      %2321 = vmatpush2.bf16.xpose.msra.mxu0 0
      %2322 = vmatprep.subr.bf16.mxu0 0
      %2323 = vmatpush2.bf16.xpose.msra.mxu0 0
      %2324 = vmatprep.subr.bf16.mxu0 0
      %2325 = vmatpush2.bf16.xpose.msra.mxu0 0
      %2326 = vmatprep.subr.bf16.mxu0 0
      %2327 = vmatpush2.bf16.xpose.msra.mxu0 0
      %2328 = vmatprep.subr.bf16.mxu0 0
      %2329 = vmatpush2.bf16.xpose.msra.mxu0 0
      %2330 = vmatprep.subr.bf16.mxu0 0
      %2331 = vmatpush2.bf16.xpose.msra.mxu0 0
      %2332 = vmatprep.subr.bf16.mxu0 0
      %2333 = vmatpush2.bf16.xpose.msra.mxu0 0
      %2334 = vmatprep.subr.bf16.mxu0 0
      %2335 = vmatpush2.bf16.xpose.msra.mxu0 0
      %2336 = vmatprep.mubr.bf16.mxu0 0
      %2337 = vmatmul.mubr.bf16.gmra.mxu0 %v2302
      %v2338 = vpop.f32.mrf.mxu0
      %v2339 = vadd.f32 %v1977, %v2338
      %v2340 = vpop.f32.mrf.mxu0
      %v2341 = vpop.f32.mrf.mxu0
      %v2342 = vpop.f32.mrf.mxu0
      %2343 = vdwg.mxu0
      %v2345 = vsel %vm1843, %v1829, 0
      %2347 = vmatprep.subr.bf16.mxu0 0
      %2348 = vmatpush1.bf16.xpose.msra.mxu0 0
      %2349 = vmatprep.subr.bf16.mxu0 0
      %2350 = vmatpush1.bf16.xpose.msra.mxu0 0
      %2351 = vmatprep.subr.bf16.mxu0 0
      %2352 = vmatpush1.bf16.xpose.msra.mxu0 0
      %2353 = vmatprep.subr.bf16.mxu0 0
      %2354 = vmatpush1.bf16.xpose.msra.mxu0 0
      %2355 = vmatprep.subr.bf16.mxu0 0
      %2356 = vmatpush1.bf16.xpose.msra.mxu0 0
      %2357 = vmatprep.subr.bf16.mxu0 0
      %2358 = vmatpush1.bf16.xpose.msra.mxu0 0
      %2359 = vmatprep.subr.bf16.mxu0 0
      %2360 = vmatpush1.bf16.xpose.msra.mxu0 0
      %2361 = vmatprep.subr.bf16.mxu0 0
      %2362 = vmatpush1.bf16.xpose.msra.mxu0 %v2216
      %2363 = vmatprep.subr.bf16.mxu0 0
      %2364 = vmatpush2.bf16.xpose.msra.mxu0 0
      %2365 = vmatprep.subr.bf16.mxu0 0
      %2366 = vmatpush2.bf16.xpose.msra.mxu0 0
      %2367 = vmatprep.subr.bf16.mxu0 0
      %2368 = vmatpush2.bf16.xpose.msra.mxu0 0
      %2369 = vmatprep.subr.bf16.mxu0 0
      %2370 = vmatpush2.bf16.xpose.msra.mxu0 0
      %2371 = vmatprep.subr.bf16.mxu0 0
      %2372 = vmatpush2.bf16.xpose.msra.mxu0 0
      %2373 = vmatprep.subr.bf16.mxu0 0
      %2374 = vmatpush2.bf16.xpose.msra.mxu0 0
      %2375 = vmatprep.subr.bf16.mxu0 0
      %2376 = vmatpush2.bf16.xpose.msra.mxu0 0
      %2377 = vmatprep.subr.bf16.mxu0 0
      %2378 = vmatpush2.bf16.xpose.msra.mxu0 0
      %2379 = vmatprep.mubr.bf16.mxu0 0
      %2380 = vmatmul.mubr.bf16.gmra.mxu0 %v2345
      %v2381 = vpop.f32.mrf.mxu0
      %v2382 = vadd.f32 %v2023, %v2381
      %v2383 = vpop.f32.mrf.mxu0
      %v2384 = vpop.f32.mrf.mxu0
      %v2385 = vpop.f32.mrf.mxu0
      %2386 = vdwg.mxu0
      %v2388 = vsel %vm1843, %v1830, 0
      %2390 = vmatprep.subr.bf16.mxu0 0
      %2391 = vmatpush1.bf16.xpose.msra.mxu0 0
      %2392 = vmatprep.subr.bf16.mxu0 0
      %2393 = vmatpush1.bf16.xpose.msra.mxu0 0
      %2394 = vmatprep.subr.bf16.mxu0 0
      %2395 = vmatpush1.bf16.xpose.msra.mxu0 0
      %2396 = vmatprep.subr.bf16.mxu0 0
      %2397 = vmatpush1.bf16.xpose.msra.mxu0 0
      %2398 = vmatprep.subr.bf16.mxu0 0
      %2399 = vmatpush1.bf16.xpose.msra.mxu0 0
      %2400 = vmatprep.subr.bf16.mxu0 0
      %2401 = vmatpush1.bf16.xpose.msra.mxu0 0
      %2402 = vmatprep.subr.bf16.mxu0 0
      %2403 = vmatpush1.bf16.xpose.msra.mxu0 0
      %2404 = vmatprep.subr.bf16.mxu0 0
      %2405 = vmatpush1.bf16.xpose.msra.mxu0 %v2216
      %2406 = vmatprep.subr.bf16.mxu0 0
      %2407 = vmatpush2.bf16.xpose.msra.mxu0 0
      %2408 = vmatprep.subr.bf16.mxu0 0
      %2409 = vmatpush2.bf16.xpose.msra.mxu0 0
      %2410 = vmatprep.subr.bf16.mxu0 0
      %2411 = vmatpush2.bf16.xpose.msra.mxu0 0
      %2412 = vmatprep.subr.bf16.mxu0 0
      %2413 = vmatpush2.bf16.xpose.msra.mxu0 0
      %2414 = vmatprep.subr.bf16.mxu0 0
      %2415 = vmatpush2.bf16.xpose.msra.mxu0 0
      %2416 = vmatprep.subr.bf16.mxu0 0
      %2417 = vmatpush2.bf16.xpose.msra.mxu0 0
      %2418 = vmatprep.subr.bf16.mxu0 0
      %2419 = vmatpush2.bf16.xpose.msra.mxu0 0
      %2420 = vmatprep.subr.bf16.mxu0 0
      %2421 = vmatpush2.bf16.xpose.msra.mxu0 0
      %2422 = vmatprep.mubr.bf16.mxu0 0
      %2423 = vmatmul.mubr.bf16.gmra.mxu0 %v2388
      %v2424 = vpop.f32.mrf.mxu0
      %v2425 = vadd.f32 %v2069, %v2424
      %v2426 = vpop.f32.mrf.mxu0
      %v2427 = vpop.f32.mrf.mxu0
      %v2428 = vpop.f32.mrf.mxu0
      %2429 = vdwg.mxu0
      %v2431 = vsel %vm1843, %v1831, 0
      %2433 = vmatprep.subr.bf16.mxu0 0
      %2434 = vmatpush1.bf16.xpose.msra.mxu0 0
      %2435 = vmatprep.subr.bf16.mxu0 0
      %2436 = vmatpush1.bf16.xpose.msra.mxu0 0
      %2437 = vmatprep.subr.bf16.mxu0 0
      %2438 = vmatpush1.bf16.xpose.msra.mxu0 0
      %2439 = vmatprep.subr.bf16.mxu0 0
      %2440 = vmatpush1.bf16.xpose.msra.mxu0 0
      %2441 = vmatprep.subr.bf16.mxu0 0
      %2442 = vmatpush1.bf16.xpose.msra.mxu0 0
      %2443 = vmatprep.subr.bf16.mxu0 0
      %2444 = vmatpush1.bf16.xpose.msra.mxu0 0
      %2445 = vmatprep.subr.bf16.mxu0 0
      %2446 = vmatpush1.bf16.xpose.msra.mxu0 0
      %2447 = vmatprep.subr.bf16.mxu0 0
      %2448 = vmatpush1.bf16.xpose.msra.mxu0 %v2216
      %2449 = vmatprep.subr.bf16.mxu0 0
      %2450 = vmatpush2.bf16.xpose.msra.mxu0 0
      %2451 = vmatprep.subr.bf16.mxu0 0
      %2452 = vmatpush2.bf16.xpose.msra.mxu0 0
      %2453 = vmatprep.subr.bf16.mxu0 0
      %2454 = vmatpush2.bf16.xpose.msra.mxu0 0
      %2455 = vmatprep.subr.bf16.mxu0 0
      %2456 = vmatpush2.bf16.xpose.msra.mxu0 0
      %2457 = vmatprep.subr.bf16.mxu0 0
      %2458 = vmatpush2.bf16.xpose.msra.mxu0 0
      %2459 = vmatprep.subr.bf16.mxu0 0
      %2460 = vmatpush2.bf16.xpose.msra.mxu0 0
      %2461 = vmatprep.subr.bf16.mxu0 0
      %2462 = vmatpush2.bf16.xpose.msra.mxu0 0
      %2463 = vmatprep.subr.bf16.mxu0 0
      %2464 = vmatpush2.bf16.xpose.msra.mxu0 0
      %2465 = vmatprep.mubr.bf16.mxu0 0
      %2466 = vmatmul.mubr.bf16.gmra.mxu0 %v2431
      %v2467 = vpop.f32.mrf.mxu0
      %v2468 = vadd.f32 %v2115, %v2467
      %v2469 = vpop.f32.mrf.mxu0
      %v2470 = vpop.f32.mrf.mxu0
      %v2471 = vpop.f32.mrf.mxu0
      %2472 = vdwg.mxu0
      %v2474 = vsel %vm1843, %v1832, 0
      %2476 = vmatprep.subr.bf16.mxu0 0
      %2477 = vmatpush1.bf16.xpose.msra.mxu0 0
      %2478 = vmatprep.subr.bf16.mxu0 0
      %2479 = vmatpush1.bf16.xpose.msra.mxu0 0
      %2480 = vmatprep.subr.bf16.mxu0 0
      %2481 = vmatpush1.bf16.xpose.msra.mxu0 0
      %2482 = vmatprep.subr.bf16.mxu0 0
      %2483 = vmatpush1.bf16.xpose.msra.mxu0 0
      %2484 = vmatprep.subr.bf16.mxu0 0
      %2485 = vmatpush1.bf16.xpose.msra.mxu0 0
      %2486 = vmatprep.subr.bf16.mxu0 0
      %2487 = vmatpush1.bf16.xpose.msra.mxu0 0
      %2488 = vmatprep.subr.bf16.mxu0 0
      %2489 = vmatpush1.bf16.xpose.msra.mxu0 0
      %2490 = vmatprep.subr.bf16.mxu0 0
      %2491 = vmatpush1.bf16.xpose.msra.mxu0 %v2216
      %2492 = vmatprep.subr.bf16.mxu0 0
      %2493 = vmatpush2.bf16.xpose.msra.mxu0 0
      %2494 = vmatprep.subr.bf16.mxu0 0
      %2495 = vmatpush2.bf16.xpose.msra.mxu0 0
      %2496 = vmatprep.subr.bf16.mxu0 0
      %2497 = vmatpush2.bf16.xpose.msra.mxu0 0
      %2498 = vmatprep.subr.bf16.mxu0 0
      %2499 = vmatpush2.bf16.xpose.msra.mxu0 0
      %2500 = vmatprep.subr.bf16.mxu0 0
      %2501 = vmatpush2.bf16.xpose.msra.mxu0 0
      %2502 = vmatprep.subr.bf16.mxu0 0
      %2503 = vmatpush2.bf16.xpose.msra.mxu0 0
      %2504 = vmatprep.subr.bf16.mxu0 0
      %2505 = vmatpush2.bf16.xpose.msra.mxu0 0
      %2506 = vmatprep.subr.bf16.mxu0 0
      %2507 = vmatpush2.bf16.xpose.msra.mxu0 0
      %2508 = vmatprep.mubr.bf16.mxu0 0
      %2509 = vmatmul.mubr.bf16.gmra.mxu0 %v2474
      %v2510 = vpop.f32.mrf.mxu0
      %v2511 = vadd.f32 %v2161, %v2510
      %v2512 = vpop.f32.mrf.mxu0
      %v2513 = vpop.f32.mrf.mxu0
      %v2514 = vpop.f32.mrf.mxu0
      %2515 = vdwg.mxu0
      %v2517 = vsel %vm1843, %v1833, 0
      %2519 = vmatprep.subr.bf16.mxu0 0
      %2520 = vmatpush1.bf16.xpose.msra.mxu0 0
      %2521 = vmatprep.subr.bf16.mxu0 0
      %2522 = vmatpush1.bf16.xpose.msra.mxu0 0
      %2523 = vmatprep.subr.bf16.mxu0 0
      %2524 = vmatpush1.bf16.xpose.msra.mxu0 0
      %2525 = vmatprep.subr.bf16.mxu0 0
      %2526 = vmatpush1.bf16.xpose.msra.mxu0 0
      %2527 = vmatprep.subr.bf16.mxu0 0
      %2528 = vmatpush1.bf16.xpose.msra.mxu0 0
      %2529 = vmatprep.subr.bf16.mxu0 0
      %2530 = vmatpush1.bf16.xpose.msra.mxu0 0
      %2531 = vmatprep.subr.bf16.mxu0 0
      %2532 = vmatpush1.bf16.xpose.msra.mxu0 0
      %2533 = vmatprep.subr.bf16.mxu0 0
      %2534 = vmatpush1.bf16.xpose.msra.mxu0 %v2216
      %2535 = vmatprep.subr.bf16.mxu0 0
      %2536 = vmatpush2.bf16.xpose.msra.mxu0 0
      %2537 = vmatprep.subr.bf16.mxu0 0
      %2538 = vmatpush2.bf16.xpose.msra.mxu0 0
      %2539 = vmatprep.subr.bf16.mxu0 0
      %2540 = vmatpush2.bf16.xpose.msra.mxu0 0
      %2541 = vmatprep.subr.bf16.mxu0 0
      %2542 = vmatpush2.bf16.xpose.msra.mxu0 0
      %2543 = vmatprep.subr.bf16.mxu0 0
      %2544 = vmatpush2.bf16.xpose.msra.mxu0 0
      %2545 = vmatprep.subr.bf16.mxu0 0
      %2546 = vmatpush2.bf16.xpose.msra.mxu0 0
      %2547 = vmatprep.subr.bf16.mxu0 0
      %2548 = vmatpush2.bf16.xpose.msra.mxu0 0
      %2549 = vmatprep.subr.bf16.mxu0 0
      %2550 = vmatpush2.bf16.xpose.msra.mxu0 0
      %2551 = vmatprep.mubr.bf16.mxu0 0
      %2552 = vmatmul.mubr.bf16.gmra.mxu0 %v2517
      %v2553 = vpop.f32.mrf.mxu0
      %v2554 = vadd.f32 %v2207, %v2553
      %v2555 = vpop.f32.mrf.mxu0
      %v2556 = vpop.f32.mrf.mxu0
      %v2557 = vpop.f32.mrf.mxu0
      %2558 = vdwg.mxu0
      %v2559 = vld [vmem:[%s828] sm:$0x3]
      %v2560 = vld [vmem:[%s828 + $0x2] sm:$0x3]
      %v2561 = vld [vmem:[%s828 + $0x4] sm:$0x3]
      %v2562 = vld [vmem:[%s828 + $0x6] sm:$0x3]
      %v2563 = vld [vmem:[%s828 + $0x8] sm:$0x3]
      %v2564 = vld [vmem:[%s828 + $0xa] sm:$0x3]
      %v2565 = vld [vmem:[%s828 + $0xc] sm:$0x3]
      %v2566 = vld [vmem:[%s828 + $0xe] sm:$0x3]
      %2568 = vset.pattern.permute.xlu0 0
      %2569 = vperm.xlu0 %2568, %v2559
      %v2570 = vpop.permute.xlu0 %2569
      %2573 = vset.pattern.permute.xlu0 0
      %2574 = vperm.xlu0 %2573, %v2560
      %v2575 = vpop.permute.xlu0 %2574
      %2578 = vset.pattern.permute.xlu0 0
      %2579 = vperm.xlu0 %2578, %v2561
      %v2580 = vpop.permute.xlu0 %2579
      %2583 = vset.pattern.permute.xlu0 0
      %2584 = vperm.xlu0 %2583, %v2562
      %v2585 = vpop.permute.xlu0 %2584
      %2588 = vset.pattern.permute.xlu0 0
      %2589 = vperm.xlu0 %2588, %v2563
      %v2590 = vpop.permute.xlu0 %2589
      %2593 = vset.pattern.permute.xlu0 0
      %2594 = vperm.xlu0 %2593, %v2564
      %v2595 = vpop.permute.xlu0 %2594
      %2598 = vset.pattern.permute.xlu0 0
      %2599 = vperm.xlu0 %2598, %v2565
      %v2600 = vpop.permute.xlu0 %2599
      %2603 = vset.pattern.permute.xlu0 0
      %2604 = vperm.xlu0 %2603, %v2566
      %v2605 = vpop.permute.xlu0 %2604
      %v2607 = vadd.f32 %v2253, %v2570
      %v2608 = vadd.f32 %v2296, %v2575
      %v2609 = vadd.f32 %v2339, %v2580
      %v2610 = vadd.f32 %v2382, %v2585
      %v2611 = vadd.f32 %v2425, %v2590
      %v2612 = vadd.f32 %v2468, %v2595
      %v2613 = vadd.f32 %v2511, %v2600
      %v2614 = vadd.f32 %v2554, %v2605
      %v2615 = vmul.f32 %v2607, 0.25
      %v2616 = vmul.f32 %v2608, 0.25
      %v2617 = vmul.f32 %v2609, 0.25
      %v2618 = vmul.f32 %v2610, 0.25
      %v2619 = vmul.f32 %v2611, 0.25
      %v2620 = vmul.f32 %v2612, 0.25
      %v2621 = vmul.f32 %v2613, 0.25
      %v2622 = vmul.f32 %v2614, 0.25
      %v2623 = vld [vmem:[%s850] sm:$0x1]
      %vm2624 = vcmp.gt.f32.partialorder %v2623, 0.0
      %v2625 = vsel %vm2624, 1, 0
      %v2626 = vlaneseq
      %v2627 = vshrl.u32 %v2626, 7
      %v2628 = vsub.s32 0, %v2627
      %v2629 = vrot.slane %v2625, %v2628
      %vm2630 = vcmp.eq.s32.totalorder %v2629, 1
      %v2631 = vsel %vm2630, %v2615, -1e+15
      %v2632 = vsel %vm2630, %v2616, -1e+15
      %v2633 = vsel %vm2630, %v2617, -1e+15
      %v2634 = vsel %vm2630, %v2618, -1e+15
      %v2635 = vsel %vm2630, %v2619, -1e+15
      %v2636 = vsel %vm2630, %v2620, -1e+15
      %v2637 = vsel %vm2630, %v2621, -1e+15
      %v2638 = vsel %vm2630, %v2622, -1e+15
      %v2639 = vld [vmem:[#allocation2] sm:$0x3]
      %v2640 = vld [vmem:[#allocation2 + $0x2] sm:$0x3]
      %v2641 = vld [vmem:[#allocation2 + $0x4] sm:$0x3]
      %v2642 = vld [vmem:[#allocation2 + $0x6] sm:$0x3]
      %v2643 = vld [vmem:[#allocation2 + $0x8] sm:$0x3]
      %v2644 = vld [vmem:[#allocation2 + $0xa] sm:$0x3]
      %v2645 = vld [vmem:[#allocation2 + $0xc] sm:$0x3]
      %v2646 = vld [vmem:[#allocation2 + $0xe] sm:$0x3]
      %vm2647 = vcmask 58368
      %v2648 = vsel %vm2647, %v2631, -inf
      %2649 = vmax.xlane.f32.xlu0 %v2648
      %v2650 = vpop.xlane.xlu0 %2649
      %v2651 = vsel %vm2647, %v2632, -inf
      %2652 = vmax.xlane.f32.xlu0 %v2651
      %v2653 = vpop.xlane.xlu0 %2652
      %v2654 = vsel %vm2647, %v2633, -inf
      %2655 = vmax.xlane.f32.xlu0 %v2654
      %v2656 = vpop.xlane.xlu0 %2655
      %v2657 = vsel %vm2647, %v2634, -inf
      %2658 = vmax.xlane.f32.xlu0 %v2657
      %v2659 = vpop.xlane.xlu0 %2658
      %v2660 = vsel %vm2647, %v2635, -inf
      %2661 = vmax.xlane.f32.xlu0 %v2660
      %v2662 = vpop.xlane.xlu0 %2661
      %v2663 = vsel %vm2647, %v2636, -inf
      %2664 = vmax.xlane.f32.xlu0 %v2663
      %v2665 = vpop.xlane.xlu0 %2664
      %v2666 = vsel %vm2647, %v2637, -inf
      %2667 = vmax.xlane.f32.xlu0 %v2666
      %v2668 = vpop.xlane.xlu0 %2667
      %v2669 = vsel %vm2647, %v2638, -inf
      %2670 = vmax.xlane.f32.xlu0 %v2669
      %v2671 = vpop.xlane.xlu0 %2670
      %v2672 = vmax.f32 %v2639, %v2650
      %v2673 = vmax.f32 %v2640, %v2653
      %v2674 = vmax.f32 %v2641, %v2656
      %v2675 = vmax.f32 %v2642, %v2659
      %v2676 = vmax.f32 %v2643, %v2662
      %v2677 = vmax.f32 %v2644, %v2665
      %v2678 = vmax.f32 %v2645, %v2668
      %v2679 = vmax.f32 %v2646, %v2671
      %v2680 = vsub.f32 %v2639, %v2672
      %v2681 = vsub.f32 %v2640, %v2673
      %v2682 = vsub.f32 %v2641, %v2674
      %v2683 = vsub.f32 %v2642, %v2675
      %v2684 = vsub.f32 %v2643, %v2676
      %v2685 = vsub.f32 %v2644, %v2677
      %v2686 = vsub.f32 %v2645, %v2678
      %v2687 = vsub.f32 %v2646, %v2679
      %v2688 = vmul.f32 %v2680, 1.442695
      %v2689 = vpow.pop %v2688
      %v2690 = vmul.f32 %v2681, 1.442695
      %v2691 = vpow.pop %v2690
      %v2692 = vmul.f32 %v2682, 1.442695
      %v2693 = vpow.pop %v2692
      %v2694 = vmul.f32 %v2683, 1.442695
      %v2695 = vpow.pop %v2694
      %v2696 = vmul.f32 %v2684, 1.442695
      %v2697 = vpow.pop %v2696
      %v2698 = vmul.f32 %v2685, 1.442695
      %v2699 = vpow.pop %v2698
      %v2700 = vmul.f32 %v2686, 1.442695
      %v2701 = vpow.pop %v2700
      %v2702 = vmul.f32 %v2687, 1.442695
      %v2703 = vpow.pop %v2702
      %2705 = vset.pattern.permute.xlu0 0
      %2706 = vperm.xlu0 %2705, %v2672
      %v2707 = vpop.permute.xlu0 %2706
      %2710 = vset.pattern.permute.xlu0 0
      %2711 = vperm.xlu0 %2710, %v2673
      %v2712 = vpop.permute.xlu0 %2711
      %2715 = vset.pattern.permute.xlu0 0
      %2716 = vperm.xlu0 %2715, %v2674
      %v2717 = vpop.permute.xlu0 %2716
      %2720 = vset.pattern.permute.xlu0 0
      %2721 = vperm.xlu0 %2720, %v2675
      %v2722 = vpop.permute.xlu0 %2721
      %2725 = vset.pattern.permute.xlu0 0
      %2726 = vperm.xlu0 %2725, %v2676
      %v2727 = vpop.permute.xlu0 %2726
      %2730 = vset.pattern.permute.xlu0 0
      %2731 = vperm.xlu0 %2730, %v2677
      %v2732 = vpop.permute.xlu0 %2731
      %2735 = vset.pattern.permute.xlu0 0
      %2736 = vperm.xlu0 %2735, %v2678
      %v2737 = vpop.permute.xlu0 %2736
      %2740 = vset.pattern.permute.xlu0 0
      %2741 = vperm.xlu0 %2740, %v2679
      %v2742 = vpop.permute.xlu0 %2741
      %v2744 = vsub.f32 %v2631, %v2707
      %v2745 = vsub.f32 %v2632, %v2712
      %v2746 = vsub.f32 %v2633, %v2717
      %v2747 = vsub.f32 %v2634, %v2722
      %v2748 = vsub.f32 %v2635, %v2727
      %v2749 = vsub.f32 %v2636, %v2732
      %v2750 = vsub.f32 %v2637, %v2737
      %v2751 = vsub.f32 %v2638, %v2742
      %v2752 = vmul.f32 %v2744, 1.442695
      %v2753 = vpow.pop %v2752
      %v2754 = vmul.f32 %v2745, 1.442695
      %v2755 = vpow.pop %v2754
      %v2756 = vmul.f32 %v2746, 1.442695
      %v2757 = vpow.pop %v2756
      %v2758 = vmul.f32 %v2747, 1.442695
      %v2759 = vpow.pop %v2758
      %v2760 = vmul.f32 %v2748, 1.442695
      %v2761 = vpow.pop %v2760
      %v2762 = vmul.f32 %v2749, 1.442695
      %v2763 = vpow.pop %v2762
      %v2764 = vmul.f32 %v2750, 1.442695
      %v2765 = vpow.pop %v2764
      %v2766 = vmul.f32 %v2751, 1.442695
      %v2767 = vpow.pop %v2766
      %v2768 = vld [vmem:[#allocation3] sm:$0x3]
      %v2769 = vld [vmem:[#allocation3 + $0x2] sm:$0x3]
      %v2770 = vld [vmem:[#allocation3 + $0x4] sm:$0x3]
      %v2771 = vld [vmem:[#allocation3 + $0x6] sm:$0x3]
      %v2772 = vld [vmem:[#allocation3 + $0x8] sm:$0x3]
      %v2773 = vld [vmem:[#allocation3 + $0xa] sm:$0x3]
      %v2774 = vld [vmem:[#allocation3 + $0xc] sm:$0x3]
      %v2775 = vld [vmem:[#allocation3 + $0xe] sm:$0x3]
      %v2776 = vmul.f32 %v2689, %v2768
      %v2777 = vmul.f32 %v2691, %v2769
      %v2778 = vmul.f32 %v2693, %v2770
      %v2779 = vmul.f32 %v2695, %v2771
      %v2780 = vmul.f32 %v2697, %v2772
      %v2781 = vmul.f32 %v2699, %v2773
      %v2782 = vmul.f32 %v2701, %v2774
      %v2783 = vmul.f32 %v2703, %v2775
      %v2784 = vsel %vm2647, %v2753, 0.0
      %2785 = vadd.xlane.f32.xlu0 %v2784
      %v2786 = vpop.xlane.xlu0 %2785
      %v2787 = vsel %vm2647, %v2755, 0.0
      %2788 = vadd.xlane.f32.xlu0 %v2787
      %v2789 = vpop.xlane.xlu0 %2788
      %v2790 = vsel %vm2647, %v2757, 0.0
      %2791 = vadd.xlane.f32.xlu0 %v2790
      %v2792 = vpop.xlane.xlu0 %2791
      %v2793 = vsel %vm2647, %v2759, 0.0
      %2794 = vadd.xlane.f32.xlu0 %v2793
      %v2795 = vpop.xlane.xlu0 %2794
      %v2796 = vsel %vm2647, %v2761, 0.0
      %2797 = vadd.xlane.f32.xlu0 %v2796
      %v2798 = vpop.xlane.xlu0 %2797
      %v2799 = vsel %vm2647, %v2763, 0.0
      %2800 = vadd.xlane.f32.xlu0 %v2799
      %v2801 = vpop.xlane.xlu0 %2800
      %v2802 = vsel %vm2647, %v2765, 0.0
      %2803 = vadd.xlane.f32.xlu0 %v2802
      %v2804 = vpop.xlane.xlu0 %2803
      %v2805 = vsel %vm2647, %v2767, 0.0
      %2806 = vadd.xlane.f32.xlu0 %v2805
      %v2807 = vpop.xlane.xlu0 %2806
      %v2808 = vadd.f32 %v2776, %v2786
      %v2809 = vadd.f32 %v2777, %v2789
      %v2810 = vadd.f32 %v2778, %v2792
      %v2811 = vadd.f32 %v2779, %v2795
      %v2812 = vadd.f32 %v2780, %v2798
      %v2813 = vadd.f32 %v2781, %v2801
      %v2814 = vadd.f32 %v2782, %v2804
      %v2815 = vadd.f32 %v2783, %v2807
      %vm2816 = vcmask 1024
      %2817 = vst.msk [vmem:[#allocation3] sm:$0x3] %vm2816, %v2808
      %2818 = vst.msk [vmem:[#allocation3 + $0x2] sm:$0x3] %vm2816, %v2809
      %2819 = vst.msk [vmem:[#allocation3 + $0x4] sm:$0x3] %vm2816, %v2810
      %2820 = vst.msk [vmem:[#allocation3 + $0x6] sm:$0x3] %vm2816, %v2811
      %2821 = vst.msk [vmem:[#allocation3 + $0x8] sm:$0x3] %vm2816, %v2812
      %2822 = vst.msk [vmem:[#allocation3 + $0xa] sm:$0x3] %vm2816, %v2813
      %2823 = vst.msk [vmem:[#allocation3 + $0xc] sm:$0x3] %vm2816, %v2814
      %2824 = vst.msk [vmem:[#allocation3 + $0xe] sm:$0x3] %vm2816, %v2815
      %2825 = vst.msk [vmem:[#allocation2] sm:$0x3] %vm2816, %v2672
      %2826 = vst.msk [vmem:[#allocation2 + $0x2] sm:$0x3] %vm2816, %v2673
      %2827 = vst.msk [vmem:[#allocation2 + $0x4] sm:$0x3] %vm2816, %v2674
      %2828 = vst.msk [vmem:[#allocation2 + $0x6] sm:$0x3] %vm2816, %v2675
      %2829 = vst.msk [vmem:[#allocation2 + $0x8] sm:$0x3] %vm2816, %v2676
      %2830 = vst.msk [vmem:[#allocation2 + $0xa] sm:$0x3] %vm2816, %v2677
      %2831 = vst.msk [vmem:[#allocation2 + $0xc] sm:$0x3] %vm2816, %v2678
      %2832 = vst.msk [vmem:[#allocation2 + $0xe] sm:$0x3] %vm2816, %v2679
      %v2833 = vpack.c.bf16 %v2753, %v2753
      %v2834 = vpack.c.bf16 %v2755, %v2755
      %v2835 = vpack.c.bf16 %v2757, %v2757
      %v2836 = vpack.c.bf16 %v2759, %v2759
      %v2837 = vpack.c.bf16 %v2761, %v2761
      %v2838 = vpack.c.bf16 %v2763, %v2763
      %v2839 = vpack.c.bf16 %v2765, %v2765
      %v2840 = vpack.c.bf16 %v2767, %v2767
      %v2841 = vld [vmem:[#allocation4] sm:$0xff]
      %2843 = vset.pattern.permute.xlu0 0
      %2844 = vperm.xlu0 %2843, %v2689
      %v2845 = vpop.permute.xlu0 %2844
      %2848 = vset.pattern.permute.xlu0 0
      %2849 = vperm.xlu0 %2848, %v2691
      %v2850 = vpop.permute.xlu0 %2849
      %2853 = vset.pattern.permute.xlu0 0
      %2854 = vperm.xlu0 %2853, %v2693
      %v2855 = vpop.permute.xlu0 %2854
      %2858 = vset.pattern.permute.xlu0 0
      %2859 = vperm.xlu0 %2858, %v2695
      %v2860 = vpop.permute.xlu0 %2859
      %2863 = vset.pattern.permute.xlu0 0
      %2864 = vperm.xlu0 %2863, %v2697
      %v2865 = vpop.permute.xlu0 %2864
      %2868 = vset.pattern.permute.xlu0 0
      %2869 = vperm.xlu0 %2868, %v2699
      %v2870 = vpop.permute.xlu0 %2869
      %2873 = vset.pattern.permute.xlu0 0
      %2874 = vperm.xlu0 %2873, %v2701
      %v2875 = vpop.permute.xlu0 %2874
      %2878 = vset.pattern.permute.xlu0 0
      %2879 = vperm.xlu0 %2878, %v2703
      %v2880 = vpop.permute.xlu0 %2879
      %v2883 = vrot.slane %v2841, 1
      %v2884 = vrot.slane %v2841, 2
      %v2885 = vrot.slane %v2841, 3
      %v2886 = vrot.slane %v2841, 4
      %v2887 = vrot.slane %v2841, 5
      %v2888 = vrot.slane %v2841, 6
      %v2889 = vrot.slane %v2841, 7
      %v2898 = vmul.f32 %v2845, %v2841
      %v2899 = vmul.f32 %v2850, %v2883
      %v2900 = vmul.f32 %v2855, %v2884
      %v2901 = vmul.f32 %v2860, %v2885
      %v2902 = vmul.f32 %v2865, %v2886
      %v2903 = vmul.f32 %v2870, %v2887
      %v2904 = vmul.f32 %v2875, %v2888
      %v2905 = vmul.f32 %v2880, %v2889
      %v2906 = vld [vmem:[%s844] sm:$0xf]
      %v2915 = vunpack.c.l.b16 %v2833
      %v2916 = vunpack.c.l.b16 %v2834
      %v2917 = vunpack.c.l.b16 %v2835
      %v2918 = vunpack.c.l.b16 %v2836
      %v2919 = vunpack.c.l.b16 %v2837
      %v2920 = vunpack.c.l.b16 %v2838
      %v2921 = vunpack.c.l.b16 %v2839
      %v2922 = vunpack.c.l.b16 %v2840
      %v2923 = vrot.slane %v2916, 7
      %vm2924 = vcmask 1041409
      %v2925 = vsel %vm2924, %v2923, %v2915
      %v2926 = vrot.slane %v2917, 6
      %vm2927 = vcmask 1042434
      %v2928 = vsel %vm2927, %v2926, %v2925
      %v2929 = vrot.slane %v2918, 5
      %vm2930 = vcmask 1043459
      %v2931 = vsel %vm2930, %v2929, %v2928
      %v2932 = vrot.slane %v2919, 4
      %vm2933 = vcmask 1044484
      %v2934 = vsel %vm2933, %v2932, %v2931
      %v2935 = vrot.slane %v2920, 3
      %vm2936 = vcmask 1045509
      %v2937 = vsel %vm2936, %v2935, %v2934
      %v2938 = vrot.slane %v2921, 2
      %vm2939 = vcmask 1046534
      %v2940 = vsel %vm2939, %v2938, %v2937
      %v2941 = vrot.slane %v2922, 1
      %vm2942 = vcmask 1047559
      %v2943 = vsel %vm2942, %v2941, %v2940
      %v2944 = vpack.c.b16 %v2943, %v2943
      %vm2945 = vcmask 64512
      %v2947 = vsel %vm2945, %v2944, 0
      %vm2949 = vcmask 1043456
      %v2951 = vsel %vm2949, %v2906, 0
      %2953 = vmatprep.subr.bf16.mxu0 0
      %2954 = vmatpush1.bf16.msra.mxu0 0
      %2955 = vmatprep.subr.bf16.mxu0 0
      %2956 = vmatpush1.bf16.msra.mxu0 0
      %2957 = vmatprep.subr.bf16.mxu0 0
      %2958 = vmatpush1.bf16.msra.mxu0 0
      %2959 = vmatprep.subr.bf16.mxu0 0
      %2960 = vmatpush1.bf16.msra.mxu0 0
      %2961 = vmatprep.subr.bf16.mxu0 0
      %2962 = vmatpush1.bf16.msra.mxu0 0
      %2963 = vmatprep.subr.bf16.mxu0 0
      %2964 = vmatpush1.bf16.msra.mxu0 0
      %2965 = vmatprep.subr.bf16.mxu0 0
      %2966 = vmatpush1.bf16.msra.mxu0 0
      %2967 = vmatprep.subr.bf16.mxu0 0
      %2968 = vmatpush1.bf16.msra.mxu0 %v2951
      %2969 = vmatprep.subr.bf16.mxu0 0
      %2970 = vmatpush2.bf16.msra.mxu0 0
      %2971 = vmatprep.subr.bf16.mxu0 0
      %2972 = vmatpush2.bf16.msra.mxu0 0
      %2973 = vmatprep.subr.bf16.mxu0 0
      %2974 = vmatpush2.bf16.msra.mxu0 0
      %2975 = vmatprep.subr.bf16.mxu0 0
      %2976 = vmatpush2.bf16.msra.mxu0 0
      %2977 = vmatprep.subr.bf16.mxu0 0
      %2978 = vmatpush2.bf16.msra.mxu0 0
      %2979 = vmatprep.subr.bf16.mxu0 0
      %2980 = vmatpush2.bf16.msra.mxu0 0
      %2981 = vmatprep.subr.bf16.mxu0 0
      %2982 = vmatpush2.bf16.msra.mxu0 0
      %2983 = vmatprep.subr.bf16.mxu0 0
      %2984 = vmatpush2.bf16.msra.mxu0 0
      %2985 = vmatprep.mubr.bf16.mxu0 0
      %2986 = vmatmul.mubr.bf16.gmra.mxu0 %v2947
      %v2987 = vpop.f32.mrf.mxu0
      %v2988 = vadd.f32 0.0, %v2987
      %v2989 = vpop.f32.mrf.mxu0
      %v2990 = vpop.f32.mrf.mxu0
      %v2991 = vpop.f32.mrf.mxu0
      %2992 = vdwg.mxu0
      %v2994 = vrot.slane %v2988, 1
      %v2995 = vrot.slane %v2988, 2
      %v2996 = vrot.slane %v2988, 3
      %v2997 = vrot.slane %v2988, 4
      %v2998 = vrot.slane %v2988, 5
      %v2999 = vrot.slane %v2988, 6
      %v3000 = vrot.slane %v2988, 7
      %v3009 = vadd.f32 %v2898, %v2988
      %v3010 = vadd.f32 %v2899, %v2994
      %v3011 = vadd.f32 %v2900, %v2995
      %v3012 = vadd.f32 %v2901, %v2996
      %v3013 = vadd.f32 %v2902, %v2997
      %v3014 = vadd.f32 %v2903, %v2998
      %v3015 = vadd.f32 %v2904, %v2999
      %v3016 = vadd.f32 %v2905, %v3000
      %v3025 = vrot.slane %v3010, 7
      %v3026 = vsel %vm2924, %v3025, %v3009
      %v3027 = vrot.slane %v3011, 6
      %v3028 = vsel %vm2927, %v3027, %v3026
      %v3029 = vrot.slane %v3012, 5
      %v3030 = vsel %vm2930, %v3029, %v3028
      %v3031 = vrot.slane %v3013, 4
      %v3032 = vsel %vm2933, %v3031, %v3030
      %v3033 = vrot.slane %v3014, 3
      %v3034 = vsel %vm2936, %v3033, %v3032
      %v3035 = vrot.slane %v3015, 2
      %v3036 = vsel %vm2939, %v3035, %v3034
      %v3037 = vrot.slane %v3016, 1
      %v3038 = vsel %vm2942, %v3037, %v3036
      %vm3040 = vcmask 130048
      %3041 = vst.msk [vmem:[#allocation4] sm:$0xff] %vm3040, %v3038
      %s3042 = scalar_lea.vmem [#allocation4], 8
      %v3043 = vld [vmem:[%s3042] sm:$0xff]
      %v3045 = vrot.slane %v3043, 7
      %v3046 = vrot.slane %v3043, 1
      %v3047 = vrot.slane %v3043, 2
      %v3048 = vrot.slane %v3043, 3
      %v3049 = vrot.slane %v3043, 4
      %v3050 = vrot.slane %v3043, 5
      %v3051 = vrot.slane %v3043, 6
      %v3060 = vmul.f32 %v2845, %v3045
      %v3061 = vmul.f32 %v2850, %v3043
      %v3062 = vmul.f32 %v2855, %v3046
      %v3063 = vmul.f32 %v2860, %v3047
      %v3064 = vmul.f32 %v2865, %v3048
      %v3065 = vmul.f32 %v2870, %v3049
      %v3066 = vmul.f32 %v2875, %v3050
      %v3067 = vmul.f32 %v2880, %v3051
      %s3068 = scalar_lea.vmem %s844, 4
      %v3069 = vld [vmem:[%s3068] sm:$0xf]
      %v3070 = vrot.slane %v2915, 1
      %v3071 = vsel %vm2924, %v2916, %v3070
      %v3072 = vrot.slane %v2917, 7
      %v3073 = vsel %vm2927, %v3072, %v3071
      %v3074 = vrot.slane %v2918, 6
      %v3075 = vsel %vm2930, %v3074, %v3073
      %v3076 = vrot.slane %v2919, 5
      %v3077 = vsel %vm2933, %v3076, %v3075
      %v3078 = vrot.slane %v2920, 4
      %v3079 = vsel %vm2936, %v3078, %v3077
      %v3080 = vrot.slane %v2921, 3
      %v3081 = vsel %vm2939, %v3080, %v3079
      %v3082 = vrot.slane %v2922, 2
      %v3083 = vsel %vm2942, %v3082, %v3081
      %v3084 = vpack.c.b16 %v3083, %v3083
      %v3086 = vsel %vm2945, %v3084, 0
      %v3089 = vsel %vm2949, %v3069, 0
      %3091 = vmatprep.subr.bf16.mxu0 0
      %3092 = vmatpush1.bf16.msra.mxu0 0
      %3093 = vmatprep.subr.bf16.mxu0 0
      %3094 = vmatpush1.bf16.msra.mxu0 0
      %3095 = vmatprep.subr.bf16.mxu0 0
      %3096 = vmatpush1.bf16.msra.mxu0 0
      %3097 = vmatprep.subr.bf16.mxu0 0
      %3098 = vmatpush1.bf16.msra.mxu0 0
      %3099 = vmatprep.subr.bf16.mxu0 0
      %3100 = vmatpush1.bf16.msra.mxu0 0
      %3101 = vmatprep.subr.bf16.mxu0 0
      %3102 = vmatpush1.bf16.msra.mxu0 0
      %3103 = vmatprep.subr.bf16.mxu0 0
      %3104 = vmatpush1.bf16.msra.mxu0 0
      %3105 = vmatprep.subr.bf16.mxu0 0
      %3106 = vmatpush1.bf16.msra.mxu0 %v3089
      %3107 = vmatprep.subr.bf16.mxu0 0
      %3108 = vmatpush2.bf16.msra.mxu0 0
      %3109 = vmatprep.subr.bf16.mxu0 0
      %3110 = vmatpush2.bf16.msra.mxu0 0
      %3111 = vmatprep.subr.bf16.mxu0 0
      %3112 = vmatpush2.bf16.msra.mxu0 0
      %3113 = vmatprep.subr.bf16.mxu0 0
      %3114 = vmatpush2.bf16.msra.mxu0 0
      %3115 = vmatprep.subr.bf16.mxu0 0
      %3116 = vmatpush2.bf16.msra.mxu0 0
      %3117 = vmatprep.subr.bf16.mxu0 0
      %3118 = vmatpush2.bf16.msra.mxu0 0
      %3119 = vmatprep.subr.bf16.mxu0 0
      %3120 = vmatpush2.bf16.msra.mxu0 0
      %3121 = vmatprep.subr.bf16.mxu0 0
      %3122 = vmatpush2.bf16.msra.mxu0 0
      %3123 = vmatprep.mubr.bf16.mxu0 0
      %3124 = vmatmul.mubr.bf16.gmra.mxu0 %v3086
      %v3125 = vpop.f32.mrf.mxu0
      %v3126 = vadd.f32 0.0, %v3125
      %v3127 = vpop.f32.mrf.mxu0
      %v3128 = vpop.f32.mrf.mxu0
      %v3129 = vpop.f32.mrf.mxu0
      %3130 = vdwg.mxu0
      %v3132 = vrot.slane %v3126, 7
      %v3133 = vrot.slane %v3126, 1
      %v3134 = vrot.slane %v3126, 2
      %v3135 = vrot.slane %v3126, 3
      %v3136 = vrot.slane %v3126, 4
      %v3137 = vrot.slane %v3126, 5
      %v3138 = vrot.slane %v3126, 6
      %v3147 = vadd.f32 %v3060, %v3132
      %v3148 = vadd.f32 %v3061, %v3126
      %v3149 = vadd.f32 %v3062, %v3133
      %v3150 = vadd.f32 %v3063, %v3134
      %v3151 = vadd.f32 %v3064, %v3135
      %v3152 = vadd.f32 %v3065, %v3136
      %v3153 = vadd.f32 %v3066, %v3137
      %v3154 = vadd.f32 %v3067, %v3138
      %v3163 = vrot.slane %v3148, 7
      %v3164 = vsel %vm2927, %v3163, %v3147
      %v3165 = vrot.slane %v3149, 6
      %v3166 = vsel %vm2930, %v3165, %v3164
      %v3167 = vrot.slane %v3150, 5
      %v3168 = vsel %vm2933, %v3167, %v3166
      %v3169 = vrot.slane %v3151, 4
      %v3170 = vsel %vm2936, %v3169, %v3168
      %v3171 = vrot.slane %v3152, 3
      %v3172 = vsel %vm2939, %v3171, %v3170
      %v3173 = vrot.slane %v3153, 2
      %v3174 = vsel %vm2942, %v3173, %v3172
      %v3175 = vrot.slane %v3154, 1
      %vm3178 = vcmask 130049
      %3179 = vst.msk [vmem:[%s3042 - $0x1] sm:$0xfe] %vm3178, %v3174
      %vm3180 = vcmask 122880
      %3181 = vst.msk [vmem:[%s3042 + $0x7] sm:$0x1] %vm3180, %v3175
      // Predicated region
      $region93: #{flat_forward.7} parent=87 // pred_check
        %p3182 = pneg %p891
      $region94: #{flat_forward.7} parent=87 // pred_check_branch
        %3184 = sbr.rel (%p3182) target = $region96
      $region95: #{flat_forward.7} parent=87 // pred_region
        %v3185 = vld [vmem:[%s801] sm:$0xff]
        %v3186 = vld [vmem:[#allocation3] sm:$0x3]
        %v3187 = vld [vmem:[#allocation3 + $0x2] sm:$0x3]
        %v3188 = vld [vmem:[#allocation3 + $0x4] sm:$0x3]
        %v3189 = vld [vmem:[#allocation3 + $0x6] sm:$0x3]
        %v3190 = vld [vmem:[#allocation3 + $0x8] sm:$0x3]
        %v3191 = vld [vmem:[#allocation3 + $0xa] sm:$0x3]
        %v3192 = vld [vmem:[#allocation3 + $0xc] sm:$0x3]
        %v3193 = vld [vmem:[#allocation3 + $0xe] sm:$0x3]
        %v3194 = vrcp.pop %v3186
        %v3195 = vrcp.pop %v3187
        %v3196 = vrcp.pop %v3188
        %v3197 = vrcp.pop %v3189
        %v3198 = vrcp.pop %v3190
        %v3199 = vrcp.pop %v3191
        %v3200 = vrcp.pop %v3192
        %v3201 = vrcp.pop %v3193
        %v3202 = vld [vmem:[%s14] sm:$0x1]
        %v3204 = vlaneseq
        %v3205 = vshrl.u32 %v3204, 7
        %v3206 = vsub.s32 0, %v3205
        %v3207 = vrot.slane %v3202, %v3206
        %v3209 = vadd.f32 %v3207, %v3185
        %v3210 = vld [vmem:[#allocation4] sm:$0xff]
        %3212 = vset.pattern.permute.xlu0 0
        %3213 = vperm.xlu0 %3212, %v3194
        %v3214 = vpop.permute.xlu0 %3213
        %3216 = vset.pattern.permute.xlu0 0
        %3217 = vperm.xlu0 %3216, %v3195
        %v3218 = vpop.permute.xlu0 %3217
        %3220 = vset.pattern.permute.xlu0 0
        %3221 = vperm.xlu0 %3220, %v3196
        %v3222 = vpop.permute.xlu0 %3221
        %3224 = vset.pattern.permute.xlu0 0
        %3225 = vperm.xlu0 %3224, %v3197
        %v3226 = vpop.permute.xlu0 %3225
        %3228 = vset.pattern.permute.xlu0 0
        %3229 = vperm.xlu0 %3228, %v3198
        %v3230 = vpop.permute.xlu0 %3229
        %3232 = vset.pattern.permute.xlu0 0
        %3233 = vperm.xlu0 %3232, %v3199
        %v3234 = vpop.permute.xlu0 %3233
        %3236 = vset.pattern.permute.xlu0 0
        %3237 = vperm.xlu0 %3236, %v3200
        %v3238 = vpop.permute.xlu0 %3237
        %3240 = vset.pattern.permute.xlu0 0
        %3241 = vperm.xlu0 %3240, %v3201
        %v3242 = vpop.permute.xlu0 %3241
        %v3243 = vrot.slane %v3218, 7
        %v3244 = vsel %vm2924, %v3243, %v3214
        %v3245 = vrot.slane %v3222, 6
        %v3246 = vsel %vm2927, %v3245, %v3244
        %v3247 = vrot.slane %v3226, 5
        %v3248 = vsel %vm2930, %v3247, %v3246
        %v3249 = vrot.slane %v3230, 4
        %v3250 = vsel %vm2933, %v3249, %v3248
        %v3251 = vrot.slane %v3234, 3
        %v3252 = vsel %vm2936, %v3251, %v3250
        %v3253 = vrot.slane %v3238, 2
        %v3254 = vsel %vm2939, %v3253, %v3252
        %v3255 = vrot.slane %v3242, 1
        %v3256 = vsel %vm2942, %v3255, %v3254
        %v3258 = vmul.f32 %v3210, %v3256
        %v3259 = vld [vmem:[%s13] sm:$0xff]
        %v3260 = vld [vmem:[%s13 + $0x8] sm:$0xff]
        %v3262 = vsel %vm3040, %v3258, 0
        %3264 = vmatprep.subr.mxu0 0.0
        %3265 = vmatpush1.msra.mxu0 0.0
        %3266 = vmatprep.subr.mxu0 0.0
        %3267 = vmatpush1.msra.mxu0 0.0
        %3268 = vmatprep.subr.mxu0 0.0
        %3269 = vmatpush1.msra.mxu0 0.0
        %3270 = vmatprep.subr.mxu0 0.0
        %3271 = vmatpush1.msra.mxu0 0.0
        %3272 = vmatprep.subr.mxu0 0.0
        %3273 = vmatpush1.msra.mxu0 0.0
        %3274 = vmatprep.subr.mxu0 0.0
        %3275 = vmatpush1.msra.mxu0 0.0
        %3276 = vmatprep.subr.mxu0 0.0
        %3277 = vmatpush1.msra.mxu0 0.0
        %3278 = vmatprep.subr.mxu0 0.0
        %3279 = vmatpush1.msra.mxu0 0.0
        %3280 = vmatprep.subr.mxu0 0.0
        %3281 = vmatpush1.msra.mxu0 0.0
        %3282 = vmatprep.subr.mxu0 0.0
        %3283 = vmatpush1.msra.mxu0 0.0
        %3284 = vmatprep.subr.mxu0 0.0
        %3285 = vmatpush1.msra.mxu0 0.0
        %3286 = vmatprep.subr.mxu0 0.0
        %3287 = vmatpush1.msra.mxu0 0.0
        %3288 = vmatprep.subr.mxu0 0.0
        %3289 = vmatpush1.msra.mxu0 0.0
        %3290 = vmatprep.subr.mxu0 0.0
        %3291 = vmatpush1.msra.mxu0 0.0
        %3292 = vmatprep.subr.mxu0 0.0
        %3293 = vmatpush1.msra.mxu0 %v3260
        %3294 = vmatprep.subr.mxu0 0.0
        %3295 = vmatpush1.msra.mxu0 %v3259
        %3296 = vmatprep.subr.mxu0 0.0
        %3297 = vmatpush2.msra.mxu0 0.0
        %3298 = vmatprep.subr.mxu0 0.0
        %3299 = vmatpush2.msra.mxu0 0.0
        %3300 = vmatprep.subr.mxu0 0.0
        %3301 = vmatpush2.msra.mxu0 0.0
        %3302 = vmatprep.subr.mxu0 0.0
        %3303 = vmatpush2.msra.mxu0 0.0
        %3304 = vmatprep.subr.mxu0 0.0
        %3305 = vmatpush2.msra.mxu0 0.0
        %3306 = vmatprep.subr.mxu0 0.0
        %3307 = vmatpush2.msra.mxu0 0.0
        %3308 = vmatprep.subr.mxu0 0.0
        %3309 = vmatpush2.msra.mxu0 0.0
        %3310 = vmatprep.subr.mxu0 0.0
        %3311 = vmatpush2.msra.mxu0 0.0
        %3312 = vmatprep.subr.mxu0 0.0
        %3313 = vmatpush2.msra.mxu0 0.0
        %3314 = vmatprep.subr.mxu0 0.0
        %3315 = vmatpush2.msra.mxu0 0.0
        %3316 = vmatprep.subr.mxu0 0.0
        %3317 = vmatpush2.msra.mxu0 0.0
        %3318 = vmatprep.subr.mxu0 0.0
        %3319 = vmatpush2.msra.mxu0 0.0
        %3320 = vmatprep.subr.mxu0 0.0
        %3321 = vmatpush2.msra.mxu0 0.0
        %3322 = vmatprep.subr.mxu0 0.0
        %3323 = vmatpush2.msra.mxu0 0.0
        %3324 = vmatprep.subr.mxu0 0.0
        %3325 = vmatpush2.msra.mxu0 0.0
        %3326 = vmatprep.subr.mxu0 0.0
        %3327 = vmatpush2.msra.mxu0 0.0
        %3328 = vmatprep.mubr.f32.mxu0 0.0
        %3329 = vmatmul.mubr.f32.gmra.mxu0 %v3262
        %v3330 = vpop.f32.mrf.mxu0
        %v3331 = vadd.f32 0.0, %v3330
        %v3332 = vpop.f32.mrf.mxu0
        %3333 = vdwg.mxu0
        %v3334 = vadd.f32 %v3209, %v3331
        %v3335 = vld [vmem:[%s3042] sm:$0xff]
        %v3336 = vrot.slane %v3214, 1
        %v3337 = vsel %vm2924, %v3218, %v3336
        %v3338 = vrot.slane %v3222, 7
        %v3339 = vsel %vm2927, %v3338, %v3337
        %v3340 = vrot.slane %v3226, 6
        %v3341 = vsel %vm2930, %v3340, %v3339
        %v3342 = vrot.slane %v3230, 5
        %v3343 = vsel %vm2933, %v3342, %v3341
        %v3344 = vrot.slane %v3234, 4
        %v3345 = vsel %vm2936, %v3344, %v3343
        %v3346 = vrot.slane %v3238, 3
        %v3347 = vsel %vm2939, %v3346, %v3345
        %v3348 = vrot.slane %v3242, 2
        %v3349 = vsel %vm2942, %v3348, %v3347
        %v3351 = vmul.f32 %v3335, %v3349
        %s3352 = scalar_lea.vmem %s13, 16
        %v3353 = vld [vmem:[%s3352] sm:$0xff]
        %v3354 = vld [vmem:[%s3352 + $0x8] sm:$0xff]
        %v3356 = vsel %vm3040, %v3351, 0
        %3358 = vmatprep.subr.mxu0 0.0
        %3359 = vmatpush1.msra.mxu0 0.0
        %3360 = vmatprep.subr.mxu0 0.0
        %3361 = vmatpush1.msra.mxu0 0.0
        %3362 = vmatprep.subr.mxu0 0.0
        %3363 = vmatpush1.msra.mxu0 0.0
        %3364 = vmatprep.subr.mxu0 0.0
        %3365 = vmatpush1.msra.mxu0 0.0
        %3366 = vmatprep.subr.mxu0 0.0
        %3367 = vmatpush1.msra.mxu0 0.0
        %3368 = vmatprep.subr.mxu0 0.0
        %3369 = vmatpush1.msra.mxu0 0.0
        %3370 = vmatprep.subr.mxu0 0.0
        %3371 = vmatpush1.msra.mxu0 0.0
        %3372 = vmatprep.subr.mxu0 0.0
        %3373 = vmatpush1.msra.mxu0 0.0
        %3374 = vmatprep.subr.mxu0 0.0
        %3375 = vmatpush1.msra.mxu0 0.0
        %3376 = vmatprep.subr.mxu0 0.0
        %3377 = vmatpush1.msra.mxu0 0.0
        %3378 = vmatprep.subr.mxu0 0.0
        %3379 = vmatpush1.msra.mxu0 0.0
        %3380 = vmatprep.subr.mxu0 0.0
        %3381 = vmatpush1.msra.mxu0 0.0
        %3382 = vmatprep.subr.mxu0 0.0
        %3383 = vmatpush1.msra.mxu0 0.0
        %3384 = vmatprep.subr.mxu0 0.0
        %3385 = vmatpush1.msra.mxu0 0.0
        %3386 = vmatprep.subr.mxu0 0.0
        %3387 = vmatpush1.msra.mxu0 %v3354
        %3388 = vmatprep.subr.mxu0 0.0
        %3389 = vmatpush1.msra.mxu0 %v3353
        %3390 = vmatprep.subr.mxu0 0.0
        %3391 = vmatpush2.msra.mxu0 0.0
        %3392 = vmatprep.subr.mxu0 0.0
        %3393 = vmatpush2.msra.mxu0 0.0
        %3394 = vmatprep.subr.mxu0 0.0
        %3395 = vmatpush2.msra.mxu0 0.0
        %3396 = vmatprep.subr.mxu0 0.0
        %3397 = vmatpush2.msra.mxu0 0.0
        %3398 = vmatprep.subr.mxu0 0.0
        %3399 = vmatpush2.msra.mxu0 0.0
        %3400 = vmatprep.subr.mxu0 0.0
        %3401 = vmatpush2.msra.mxu0 0.0
        %3402 = vmatprep.subr.mxu0 0.0
        %3403 = vmatpush2.msra.mxu0 0.0
        %3404 = vmatprep.subr.mxu0 0.0
        %3405 = vmatpush2.msra.mxu0 0.0
        %3406 = vmatprep.subr.mxu0 0.0
        %3407 = vmatpush2.msra.mxu0 0.0
        %3408 = vmatprep.subr.mxu0 0.0
        %3409 = vmatpush2.msra.mxu0 0.0
        %3410 = vmatprep.subr.mxu0 0.0
        %3411 = vmatpush2.msra.mxu0 0.0
        %3412 = vmatprep.subr.mxu0 0.0
        %3413 = vmatpush2.msra.mxu0 0.0
        %3414 = vmatprep.subr.mxu0 0.0
        %3415 = vmatpush2.msra.mxu0 0.0
        %3416 = vmatprep.subr.mxu0 0.0
        %3417 = vmatpush2.msra.mxu0 0.0
        %3418 = vmatprep.subr.mxu0 0.0
        %3419 = vmatpush2.msra.mxu0 0.0
        %3420 = vmatprep.subr.mxu0 0.0
        %3421 = vmatpush2.msra.mxu0 0.0
        %3422 = vmatprep.mubr.f32.mxu0 0.0
        %3423 = vmatmul.mubr.f32.gmra.mxu0 %v3356
        %v3424 = vpop.f32.mrf.mxu0
        %v3425 = vadd.f32 0.0, %v3424
        %v3426 = vpop.f32.mrf.mxu0
        %3427 = vdwg.mxu0
        %v3428 = vadd.f32 %v3334, %v3425
        %v3429 = vsel %vm1843, %v3428, 0.0
        %3430 = vadd.xlane.f32.xlu0 %v3429
        %v3431 = vpop.xlane.xlu0 %3430
        %v3432 = vrcp.pop 32.0
        %v3433 = vmul.f32 %v3431, %v3432
        %v3434 = vsub.f32 %v3428, %v3433
        %v3435 = vmul.f32 %v3434, %v3434
        %v3436 = vsel %vm1843, %v3435, 0.0
        %3437 = vadd.xlane.f32.xlu0 %v3436
        %v3438 = vpop.xlane.xlu0 %3437
        %v3439 = vmul.f32 %v3438, %v3432
        %v3440 = vadd.f32 %v3439, 1e-12
        %v3441 = vrsqrt.pop %v3440
        %v3442 = vmul.f32 %v3434, %v3441
        %v3443 = vld [vmem:[%s15] sm:$0x1]
        %v3445 = vlaneseq
        %v3446 = vshrl.u32 %v3445, 7
        %v3447 = vsub.s32 0, %v3446
        %v3448 = vrot.slane %v3443, %v3447
        %v3450 = vmul.f32 %v3442, %v3448
        %v3451 = vld [vmem:[%s16] sm:$0x1]
        %v3453 = vlaneseq
        %v3454 = vshrl.u32 %v3453, 7
        %v3455 = vsub.s32 0, %v3454
        %v3456 = vrot.slane %v3451, %v3455
        %v3458 = vadd.f32 %v3450, %v3456
        %3459 = vst.msk [vmem:[%s889] sm:$0xff] %vm1843, %v3458
      $region96: #{flat_forward.7} parent=87 // pred_fallthru
        _
      %p3460 = scmp.lt.s32.totalorder %s33, 1
      %s3461 = scalar_select %p3460, %s33, 1
      %p3462 = scmp.lt.s32.totalorder %s34, 0
      %s3463 = scalar_select %p3462, %s34, 0
      %s3464 = sadd.s32 %s3463, %s3461
      %s3465 = smul.addr %s3464, 8
      %s3466 = scalar_lea.vmem %s17, %s3465
      // Predicated region
      $region97: #{flat_forward.7} parent=87 // pred_check
        %p3467 = pneg %p501
      $region98: #{flat_forward.7} parent=87 // pred_check_branch
        %3469 = sbr.rel (%p3467) target = $region100
      $region99: #{flat_forward.7} parent=87 // pred_region
        _
      $region100: #{flat_forward.7} parent=87 // pred_fallthru
        _
    $region88: #{flat_forward.7} parent=5 // pred_fallthru
      _
    %p3470 = scmp.le.s32.totalorder 2, %s23
    // Predicated region
    $region101: #{flat_forward.7} parent=5 // pred_check
      %p3471 = pneg %p3470
    $region102: #{flat_forward.7} parent=5 // pred_check_branch
      %3473 = sbr.rel (%p3471) target = $region104
    $region103: #{flat_forward.7} parent=5 // pred_region
      %s3474 = ssub.s32 %s23, 2
      // Predicated region
      $region105: #{flat_forward.7} parent=103 // pred_check
        %p3475 = pneg %p507
      $region106: #{flat_forward.7} parent=103 // pred_check_branch
        %3477 = sbr.rel (%p3475) target = $region108
      $region107: #{flat_forward.7} parent=103 // pred_region
        %p3478 = scmp.lt.s32.totalorder %s36, 1
        %s3479 = scalar_select %p3478, %s36, 1
        %p3480 = scmp.lt.s32.totalorder %s37, 0
        %s3481 = scalar_select %p3480, %s37, 0
        %s3482 = sadd.s32 %s3481, %s3479
        %s3483 = smul.addr %s3482, 8
        %s3484 = scalar_lea.vmem %s17, %s3483
      $region108: #{flat_forward.7} parent=103 // pred_fallthru
        _
    $region104: #{flat_forward.7} parent=5 // pred_fallthru
      _
  $region6: #{flat_forward.7} parent=0 // loop_footer
    %s27 = sadd.s32 1, %s23
  $region7: #{flat_forward.7} parent=0 // loop_footer_branch
    %22 = sbr.rel target = $region3
  $region8: #{flat_forward.7} parent=0 // loop_exit
    _

</llo_original>
